<compile_context>
chip_gen: v7x
topology: tpu7x:2x2x1
jax: 0.10.0
libtpu: 0.0.40
codegen_flags: <defaults>
</compile_context>

<pallas_src>
import jax
import jax.numpy as jnp
from jax.experimental import pallas as pl
from jax.experimental.pallas import tpu as pltpu


_BN_EPS = 1e-5


# ---------------------------------------------------------------------------
# index maps (module level -> no late-binding closure issues)
# ---------------------------------------------------------------------------
def _row_map(p, i):      # batch-tiled operand: batch block i, feature block 0
    return (i, 0)


def _const_map(p, i):    # VMEM-resident operand: same block every grid step
    return (0, 0)


# ---------------------------------------------------------------------------
# Fused kernel: Linear->ReLU->Linear->ReLU->BatchNorm->Linear->ReLU->Linear
# grid = (3 phases, batch tiles); both axes sequential ("arbitrary").
# ---------------------------------------------------------------------------
def _make_kernel(inv_batch):
    def kernel(x_ref, w1_ref, b1_ref, w2_ref, b2_ref,
               gamma_ref, beta_ref, w3_ref, b3_ref, w4_ref, b4_ref,
               out_ref, sum_ref, ssd_ref):
        phase = pl.program_id(0)
        tile = pl.program_id(1)

        @pl.when(jnp.logical_and(phase == 0, tile == 0))
        def _init():
            sum_ref[...] = jnp.zeros_like(sum_ref)
            ssd_ref[...] = jnp.zeros_like(ssd_ref)

        # h1 / h2 recomputed every phase (cheap; avoids an HBM round trip and a
        # B-scaling VMEM cache). bf16 MXU operands, f32 accumulation.
        x = x_ref[...].astype(jnp.bfloat16)                                # (TB, L)
        h1 = jnp.dot(x, w1_ref[...], preferred_element_type=jnp.float32)
        h1 = jnp.maximum(h1 + b1_ref[...], 0.0)                            # (TB, H)  f32
        h2 = jnp.dot(h1.astype(jnp.bfloat16), w2_ref[...],
                     preferred_element_type=jnp.float32)
        h2 = jnp.maximum(h2 + b2_ref[...], 0.0)                            # (TB, Hh) f32

        @pl.when(phase == 0)                                               # pass 1: mean
        def _acc_sum():
            sum_ref[...] += jnp.sum(h2, axis=0, keepdims=True)

        @pl.when(phase == 1)                                               # pass 2: variance
        def _acc_ssd():
            d = h2 - sum_ref[...] * inv_batch
            ssd_ref[...] += jnp.sum(d * d, axis=0, keepdims=True)

        @pl.when(phase == 2)                                               # pass 3: BN + tail
        def _finish():
            mean = sum_ref[...] * inv_batch
            var = ssd_ref[...] * inv_batch
            inv = jax.lax.rsqrt(var + _BN_EPS)
            h2n = (h2 - mean) * (inv * gamma_ref[...]) + beta_ref[...]     # f32

            h3 = jnp.dot(h2n.astype(jnp.bfloat16), w3_ref[...],
                         preferred_element_type=jnp.float32)
            h3 = jnp.maximum(h3 + b3_ref[...], 0.0)                        # (TB, H)

            out = jnp.dot(h3.astype(jnp.bfloat16), w4_ref[...],
                          preferred_element_type=jnp.float32) + b4_ref[...]
            out_ref[...] = out.astype(out_ref.dtype)                       # (TB, L)

    return kernel


# ---------------------------------------------------------------------------
# VMEM estimate (incl. h1/h3 activations and bf16 transients) + tile policy
# ---------------------------------------------------------------------------
def _vmem_bytes_estimate(TB, L, H, Hh):
    weights = 2 * 2 * (L * H + H * Hh + Hh * H + H * L)        # bf16 weights, assume 2 bufs
    vectors = 2 * 4 * (2 * H + 3 * Hh + L)                     # biases + gamma/beta (f32)
    io_tiles = 2 * 2 * 4 * TB * L                              # x + out f32 tiles, 2 bufs each
    transients = 4 * TB * (2 * H + 2 * Hh) + 2 * TB * (L + 2 * H)  # h1,h2,h2n,h3 + bf16 casts
    scratch = 2 * 4 * Hh
    return weights + vectors + io_tiles + transients + scratch


def _pick_batch_tile(B, L, H, Hh, budget=12 << 20):
    # Whole batch as one tile whenever it fits: on single-TC v5e/v6e the grid is
    # just a serial loop, and a single big M amortizes the short K/N matmuls.
    candidates = [B] + [t for t in (2048, 1024, 512, 256, 128, 64, 32, 16, 8)
                        if t < B and B % t == 0]
    for tb in candidates:
        if _vmem_bytes_estimate(tb, L, H, Hh) <= budget:
            return tb
    return candidates[-1]


# ---------------------------------------------------------------------------
# Wrapper
# ---------------------------------------------------------------------------
def audio_aligner_forward(audio, params, *, batch_tile=None):
    """audio: (B, L) float32. params: dict with bf16 weights (in,out) and f32 biases."""
    B, L = audio.shape
    H = params["w1"].shape[1]
    Hh = params["w2"].shape[1]

    TB = _pick_batch_tile(B, L, H, Hh) if batch_tile is None else batch_tile
    assert B % TB == 0, "batch must be divisible by the batch tile"
    G = B // TB

    bf16, f32 = jnp.bfloat16, jnp.float32
    # Weights are expected to already be bf16 (stored once at init); .astype is
    # a no-op in that case and only converts if a caller passes f32 params.
    w1 = params["w1"].astype(bf16); w2 = params["w2"].astype(bf16)
    w3 = params["w3"].astype(bf16); w4 = params["w4"].astype(bf16)
    b1 = params["b1"].astype(f32); b2 = params["b2"].astype(f32)
    b3 = params["b3"].astype(f32); b4 = params["b4"].astype(f32)
    gamma = params["gamma"].astype(f32); beta = params["beta"].astype(f32)

    est = _vmem_bytes_estimate(TB, L, H, Hh)
    # Only override the default scoped limit when the estimate exceeds the
    # smallest default (16 MiB on v5e); cap at 48 MiB so v7x (64 MiB physical)
    # keeps headroom for Mosaic internal scratch.
    vmem_limit = None if est <= (16 << 20) else min(int(est * 1.25), 48 << 20)

    flops = 2 * B * (3 * (L * H + H * Hh) + Hh * H + H * L)
    bytes_accessed = (2 * B * L * 4
                      + 2 * (L * H + H * Hh + Hh * H + H * L)
                      + 4 * (2 * H + 3 * Hh + L))

    # TODO(synk): on v7x this fully-sequential grid keeps one of the two
    # TensorCores idle; to use both, split the batch over a "parallel" axis and
    # combine per-core BN partial sums via CMEM/VMEM_SHARED (or a second pass).
    # TODO(synk): single-buffer the resident weight blocks (pipeline_mode=
    # pl.Buffered(1)) once that path is reliable, to roughly double the feasible
    # fc_input_length before the weights themselves need K/N tiling.
    out = pl.pallas_call(
        _make_kernel(1.0 / B),
        grid=(3, G),
        in_specs=[
            pl.BlockSpec((TB, L), _row_map),      # x tile
            pl.BlockSpec((L, H), _const_map),     # w1 (resident)
            pl.BlockSpec((1, H), _const_map),     # b1
            pl.BlockSpec((H, Hh), _const_map),    # w2 (resident)
            pl.BlockSpec((1, Hh), _const_map),    # b2
            pl.BlockSpec((1, Hh), _const_map),    # gamma
            pl.BlockSpec((1, Hh), _const_map),    # beta
            pl.BlockSpec((Hh, H), _const_map),    # w3 (resident)
            pl.BlockSpec((1, H), _const_map),     # b3
            pl.BlockSpec((H, L), _const_map),     # w4 (resident)
            pl.BlockSpec((1, L), _const_map),     # b4
        ],
        out_specs=pl.BlockSpec((TB, L), _row_map),
        out_shape=jax.ShapeDtypeStruct((B, L), f32),
        scratch_shapes=[pltpu.VMEM((1, Hh), f32),     # running sum(h2)
                        pltpu.VMEM((1, Hh), f32)],    # running sum((h2-mean)^2)
        compiler_params=pltpu.CompilerParams(
            dimension_semantics=("arbitrary", "arbitrary"),
            vmem_limit_bytes=vmem_limit),
        cost_estimate=pl.CostEstimate(flops=flops, transcendentals=Hh,
                                      bytes_accessed=bytes_accessed),
    )(audio, w1, b1, w2, b2, gamma, beta, w3, b3, w4, b4)

    return {"output_audio": out}


# ---------------------------------------------------------------------------
# Parameter init: shapes match the PyTorch module; weights stored transposed
# (in_features, out_features) and converted to bf16 ONCE here so the forward
# never launches per-call convert ops. Biases / BN affine stay f32.
# ---------------------------------------------------------------------------
def init_params(key, fc_input_length, fc_hidden=None):
    H = fc_input_length // 4 if fc_hidden is None else fc_hidden
    Hh = H // 2
    L = fc_input_length
    ks = jax.random.split(key, 4)

    def lin(k, fan_in, fan_out):
        bound = 1.0 / jnp.sqrt(fan_in)
        kw, kb = jax.random.split(k)
        w = jax.random.uniform(kw, (fan_in, fan_out), jnp.float32, -bound, bound)
        b = jax.random.uniform(kb, (1, fan_out), jnp.float32, -bound, bound)
        return w.astype(jnp.bfloat16), b

    w1, b1 = lin(ks[0], L, H)
    w2, b2 = lin(ks[1], H, Hh)
    w3, b3 = lin(ks[2], Hh, H)
    w4, b4 = lin(ks[3], H, L)
    # TODO(synk): BatchNorm1d running_mean/running_var (eval-mode statistics and
    # their training-time updates) are not modeled; only training-mode
    # full-batch statistics are computed, matching the module in train() mode.
    return {
        "w1": w1, "b1": b1,
        "w2": w2, "b2": b2,
        "gamma": jnp.ones((1, Hh), jnp.float32),
        "beta": jnp.zeros((1, Hh), jnp.float32),
        "w3": w3, "b3": b3,
        "w4": w4, "b4": b4,
    }


def _reference_forward(audio, params):
    """Pure-JAX reference: same bf16-operand / f32-accumulate matmuls, exact
    two-pass BatchNorm variance (PyTorch training-mode numerics)."""
    bf16, f32 = jnp.bfloat16, jnp.float32

    def lin(x, w, b):
        return jnp.dot(x.astype(bf16), w.astype(bf16),
                       preferred_element_type=f32) + b.astype(f32)

    h1 = jnp.maximum(lin(audio, params["w1"], params["b1"]), 0.0)
    h2 = jnp.maximum(lin(h1, params["w2"], params["b2"]), 0.0)
    mean = jnp.mean(h2, axis=0, keepdims=True)
    var = jnp.mean((h2 - mean) ** 2, axis=0, keepdims=True)
    h2n = (h2 - mean) * jax.lax.rsqrt(var + _BN_EPS)
    h2n = h2n * params["gamma"] + params["beta"]
    h3 = jnp.maximum(lin(h2n, params["w3"], params["b3"]), 0.0)
    return lin(h3, params["w4"], params["b4"])


if __name__ == "__main__":
    # fc_input_length=512 -> H=128, Hh=64. Batch 512 rows: the whole problem
    # (~3 MiB) fits VMEM, so the tile policy picks TB=B and the fused kernel
    # runs as a single dispatch with grid=(3, 1) — x, weights and the output
    # are DMA'd exactly once and BN stats never leave VMEM.
    B, L = 512, 512
    key = jax.random.PRNGKey(0)
    k_param, k_audio = jax.random.split(key)

    params = init_params(k_param, fc_input_length=L)
    audio = jax.random.normal(k_audio, (B, L), jnp.float32)

    fwd = jax.jit(audio_aligner_forward)
    result = fwd(audio, params)
    out = jax.block_until_ready(result["output_audio"])

    assert out.shape == (B, L) and out.dtype == jnp.float32
    assert bool(jnp.all(jnp.isfinite(out)))

    ref = jax.block_until_ready(jax.jit(_reference_forward)(audio, params))
    assert bool(jnp.allclose(out, ref, rtol=2e-2, atol=2e-2)), "mismatch vs reference"

    print("KERNEL_OK")
</pallas_src>

<mosaic_0001>
module attributes {stable_mosaic.version = 11 : i64} {
  func.func @kernel(%arg0: i32, %arg1: i32, %arg2: memref<512x512xf32, #tpu.memory_space<vmem>>, %arg3: memref<512x128xbf16, #tpu.memory_space<vmem>>, %arg4: memref<1x128xf32, #tpu.memory_space<vmem>>, %arg5: memref<128x64xbf16, #tpu.memory_space<vmem>>, %arg6: memref<1x64xf32, #tpu.memory_space<vmem>>, %arg7: memref<1x64xf32, #tpu.memory_space<vmem>>, %arg8: memref<1x64xf32, #tpu.memory_space<vmem>>, %arg9: memref<64x128xbf16, #tpu.memory_space<vmem>>, %arg10: memref<1x128xf32, #tpu.memory_space<vmem>>, %arg11: memref<128x512xbf16, #tpu.memory_space<vmem>>, %arg12: memref<1x512xf32, #tpu.memory_space<vmem>>, %arg13: memref<512x512xf32, #tpu.memory_space<vmem>>, %arg14: memref<1x64xf32, #tpu.memory_space<vmem>>, %arg15: memref<1x64xf32, #tpu.memory_space<vmem>>) attributes {dimension_semantics = [#tpu.dimension_semantics<arbitrary>, #tpu.dimension_semantics<arbitrary>], iteration_bounds = array<i64: 3, 1>, scalar_prefetch = 0 : i64, scratch_operands = 2 : i64, tpu.core_type = #tpu.core_type<tc>, window_params = [{transform_indices = @transform_0, window_bounds = array<i64: 512, 512>}, {pipeline_mode = #tpu.pipeline_mode<synchronous>, transform_indices = @transform_1, window_bounds = array<i64: 512, 128>}, {pipeline_mode = #tpu.pipeline_mode<synchronous>, transform_indices = @transform_2, window_bounds = array<i64: 1, 128>}, {pipeline_mode = #tpu.pipeline_mode<synchronous>, transform_indices = @transform_3, window_bounds = array<i64: 128, 64>}, {pipeline_mode = #tpu.pipeline_mode<synchronous>, transform_indices = @transform_4, window_bounds = array<i64: 1, 64>}, {pipeline_mode = #tpu.pipeline_mode<synchronous>, transform_indices = @transform_5, window_bounds = array<i64: 1, 64>}, {pipeline_mode = #tpu.pipeline_mode<synchronous>, transform_indices = @transform_6, window_bounds = array<i64: 1, 64>}, {pipeline_mode = #tpu.pipeline_mode<synchronous>, transform_indices = @transform_7, window_bounds = array<i64: 64, 128>}, {pipeline_mode = #tpu.pipeline_mode<synchronous>, transform_indices = @transform_8, window_bounds = array<i64: 1, 128>}, {pipeline_mode = #tpu.pipeline_mode<synchronous>, transform_indices = @transform_9, window_bounds = array<i64: 128, 512>}, {pipeline_mode = #tpu.pipeline_mode<synchronous>, transform_indices = @transform_10, window_bounds = array<i64: 1, 512>}, {transform_indices = @transform_11, window_bounds = array<i64: 512, 512>}]} {
    %c0_i32 = arith.constant 0 : i32
    %0 = arith.cmpi eq, %arg0, %c0_i32 : i32
    %c0_i32_0 = arith.constant 0 : i32
    %1 = arith.cmpi eq, %arg1, %c0_i32_0 : i32
    %2 = arith.andi %0, %1 : i1
    %3 = arith.extui %2 : i1 to i32
    %c0_i32_1 = arith.constant 0 : i32
    %4 = arith.cmpi ne, %3, %c0_i32_1 : i32
    scf.if %4 {
      %cst_18 = arith.constant 0.000000e+00 : f32
      %31 = vector.broadcast %cst_18 : f32 to vector<1x64xf32>
      %c0_19 = arith.constant 0 : index
      %c0_20 = arith.constant 0 : index
      %32 = vector.load %arg14[%c0_19, %c0_20] : memref<1x64xf32, #tpu.memory_space<vmem>>, vector<1x64xf32>
      tpu.vector_store %arg14[%c0_19, %c0_20], %31 {strides = array<i32>} : memref<1x64xf32, #tpu.memory_space<vmem>>, vector<1x64xf32>,
      %cst_21 = arith.constant 0.000000e+00 : f32
      %33 = vector.broadcast %cst_21 : f32 to vector<1x64xf32>
      %c0_22 = arith.constant 0 : index
      %c0_23 = arith.constant 0 : index
      %34 = vector.load %arg15[%c0_22, %c0_23] : memref<1x64xf32, #tpu.memory_space<vmem>>, vector<1x64xf32>
      tpu.vector_store %arg15[%c0_22, %c0_23], %33 {strides = array<i32>} : memref<1x64xf32, #tpu.memory_space<vmem>>, vector<1x64xf32>,
    } else {
    }
    %c0 = arith.constant 0 : index
    %c0_2 = arith.constant 0 : index
    %5 = vector.load %arg2[%c0, %c0_2] : memref<512x512xf32, #tpu.memory_space<vmem>>, vector<512x512xf32>
    %6 = arith.truncf %5 : vector<512x512xf32> to vector<512x512xbf16>
    %c0_3 = arith.constant 0 : index
    %c0_4 = arith.constant 0 : index
    %7 = vector.load %arg3[%c0_3, %c0_4] : memref<512x128xbf16, #tpu.memory_space<vmem>>, vector<512x128xbf16>
    %cst = arith.constant dense<0.000000e+00> : vector<512x128xf32>
    %8 = tpu.matmul %6, %7, %cst {dimension_numbers = #tpu.dot_dimension_numbers<[1], [0], [0], [1], [0, 0, 1, 1], [], []>} : vector<512x512xbf16>, vector<512x128xbf16>, vector<512x128xf32> -> vector<512x128xf32>
    %c0_5 = arith.constant 0 : index
    %c0_6 = arith.constant 0 : index
    %9 = vector.load %arg4[%c0_5, %c0_6] : memref<1x128xf32, #tpu.memory_space<vmem>>, vector<1x128xf32>
    %10 = vector.broadcast %9 : vector<1x128xf32> to vector<512x128xf32>
    %11 = arith.addf %8, %10 : vector<512x128xf32>
    %cst_7 = arith.constant 0.000000e+00 : f32
    %12 = vector.broadcast %cst_7 : f32 to vector<512x128xf32>
    %13 = arith.maximumf %11, %12 : vector<512x128xf32>
    %14 = arith.truncf %13 : vector<512x128xf32> to vector<512x128xbf16>
    %c0_8 = arith.constant 0 : index
    %c0_9 = arith.constant 0 : index
    %15 = vector.load %arg5[%c0_8, %c0_9] : memref<128x64xbf16, #tpu.memory_space<vmem>>, vector<128x64xbf16>
    %cst_10 = arith.constant dense<0.000000e+00> : vector<512x64xf32>
    %16 = tpu.matmul %14, %15, %cst_10 {dimension_numbers = #tpu.dot_dimension_numbers<[1], [0], [0], [1], [0, 0, 1, 1], [], []>} : vector<512x128xbf16>, vector<128x64xbf16>, vector<512x64xf32> -> vector<512x64xf32>
    %c0_11 = arith.constant 0 : index
    %c0_12 = arith.constant 0 : index
    %17 = vector.load %arg6[%c0_11, %c0_12] : memref<1x64xf32, #tpu.memory_space<vmem>>, vector<1x64xf32>
    %18 = vector.broadcast %17 : vector<1x64xf32> to vector<512x64xf32>
    %19 = arith.addf %16, %18 : vector<512x64xf32>
    %cst_13 = arith.constant 0.000000e+00 : f32
    %20 = vector.broadcast %cst_13 : f32 to vector<512x64xf32>
    %21 = arith.maximumf %19, %20 : vector<512x64xf32>
    %c0_i32_14 = arith.constant 0 : i32
    %22 = arith.cmpi eq, %arg0, %c0_i32_14 : i32
    %23 = arith.extui %22 : i1 to i32
    %c0_i32_15 = arith.constant 0 : i32
    %24 = arith.cmpi ne, %23, %c0_i32_15 : i32
    scf.if %24 {
      %c0_18 = arith.constant 0 : index
      %c0_19 = arith.constant 0 : index
      %31 = vector.load %arg14[%c0_18, %c0_19] : memref<1x64xf32, #tpu.memory_space<vmem>>, vector<1x64xf32>
      %cst_20 = arith.constant dense<0.000000e+00> : vector<64xf32>
      %32 = vector.multi_reduction <add>, %21, %cst_20 [0] : vector<512x64xf32> to vector<64xf32>
      %33 = vector.shape_cast %32 : vector<64xf32> to vector<1x64xf32>
      %34 = arith.addf %31, %33 : vector<1x64xf32>
      %c0_21 = arith.constant 0 : index
      %c0_22 = arith.constant 0 : index
      %35 = vector.load %arg14[%c0_21, %c0_22] : memref<1x64xf32, #tpu.memory_space<vmem>>, vector<1x64xf32>
      tpu.vector_store %arg14[%c0_21, %c0_22], %34 {strides = array<i32>} : memref<1x64xf32, #tpu.memory_space<vmem>>, vector<1x64xf32>,
    } else {
    }
    %c1_i32 = arith.constant 1 : i32
    %25 = arith.cmpi eq, %arg0, %c1_i32 : i32
    %26 = arith.extui %25 : i1 to i32
    %c0_i32_16 = arith.constant 0 : i32
    %27 = arith.cmpi ne, %26, %c0_i32_16 : i32
    scf.if %27 {
      %c0_18 = arith.constant 0 : index
      %c0_19 = arith.constant 0 : index
      %31 = vector.load %arg14[%c0_18, %c0_19] : memref<1x64xf32, #tpu.memory_space<vmem>>, vector<1x64xf32>
      %cst_20 = arith.constant 0.001953125 : f32
      %32 = vector.broadcast %cst_20 : f32 to vector<1x64xf32>
      %33 = arith.mulf %31, %32 : vector<1x64xf32>
      %34 = vector.broadcast %33 : vector<1x64xf32> to vector<512x64xf32>
      %35 = arith.subf %21, %34 : vector<512x64xf32>
      %c0_21 = arith.constant 0 : index
      %c0_22 = arith.constant 0 : index
      %36 = vector.load %arg15[%c0_21, %c0_22] : memref<1x64xf32, #tpu.memory_space<vmem>>, vector<1x64xf32>
      %37 = arith.mulf %35, %35 : vector<512x64xf32>
      %cst_23 = arith.constant dense<0.000000e+00> : vector<64xf32>
      %38 = vector.multi_reduction <add>, %37, %cst_23 [0] : vector<512x64xf32> to vector<64xf32>
      %39 = vector.shape_cast %38 : vector<64xf32> to vector<1x64xf32>
      %40 = arith.addf %36, %39 : vector<1x64xf32>
      %c0_24 = arith.constant 0 : index
      %c0_25 = arith.constant 0 : index
      %41 = vector.load %arg15[%c0_24, %c0_25] : memref<1x64xf32, #tpu.memory_space<vmem>>, vector<1x64xf32>
      tpu.vector_store %arg15[%c0_24, %c0_25], %40 {strides = array<i32>} : memref<1x64xf32, #tpu.memory_space<vmem>>, vector<1x64xf32>,
    } else {
    }
    %c2_i32 = arith.constant 2 : i32
    %28 = arith.cmpi eq, %arg0, %c2_i32 : i32
    %29 = arith.extui %28 : i1 to i32
    %c0_i32_17 = arith.constant 0 : i32
    %30 = arith.cmpi ne, %29, %c0_i32_17 : i32
    scf.if %30 {
      %c0_18 = arith.constant 0 : index
      %c0_19 = arith.constant 0 : index
      %31 = vector.load %arg14[%c0_18, %c0_19] : memref<1x64xf32, #tpu.memory_space<vmem>>, vector<1x64xf32>
      %cst_20 = arith.constant 0.001953125 : f32
      %32 = vector.broadcast %cst_20 : f32 to vector<1x64xf32>
      %33 = arith.mulf %31, %32 : vector<1x64xf32>
      %c0_21 = arith.constant 0 : index
      %c0_22 = arith.constant 0 : index
      %34 = vector.load %arg15[%c0_21, %c0_22] : memref<1x64xf32, #tpu.memory_space<vmem>>, vector<1x64xf32>
      %cst_23 = arith.constant 0.001953125 : f32
      %35 = vector.broadcast %cst_23 : f32 to vector<1x64xf32>
      %36 = arith.mulf %34, %35 : vector<1x64xf32>
      %cst_24 = arith.constant 9.99999974E-6 : f32
      %37 = vector.broadcast %cst_24 : f32 to vector<1x64xf32>
      %38 = arith.addf %36, %37 : vector<1x64xf32>
      %39 = math.rsqrt %38 : vector<1x64xf32>
      %40 = vector.broadcast %33 : vector<1x64xf32> to vector<512x64xf32>
      %41 = arith.subf %21, %40 : vector<512x64xf32>
      %c0_25 = arith.constant 0 : index
      %c0_26 = arith.constant 0 : index
      %42 = vector.load %arg7[%c0_25, %c0_26] : memref<1x64xf32, #tpu.memory_space<vmem>>, vector<1x64xf32>
      %43 = arith.mulf %39, %42 : vector<1x64xf32>
      %44 = vector.broadcast %43 : vector<1x64xf32> to vector<512x64xf32>
      %45 = arith.mulf %41, %44 : vector<512x64xf32>
      %c0_27 = arith.constant 0 : index
      %c0_28 = arith.constant 0 : index
      %46 = vector.load %arg8[%c0_27, %c0_28] : memref<1x64xf32, #tpu.memory_space<vmem>>, vector<1x64xf32>
      %47 = vector.broadcast %46 : vector<1x64xf32> to vector<512x64xf32>
      %48 = arith.addf %45, %47 : vector<512x64xf32>
      %49 = arith.truncf %48 : vector<512x64xf32> to vector<512x64xbf16>
      %c0_29 = arith.constant 0 : index
      %c0_30 = arith.constant 0 : index
      %50 = vector.load %arg9[%c0_29, %c0_30] : memref<64x128xbf16, #tpu.memory_space<vmem>>, vector<64x128xbf16>
      %cst_31 = arith.constant dense<0.000000e+00> : vector<512x128xf32>
      %51 = tpu.matmul %49, %50, %cst_31 {dimension_numbers = #tpu.dot_dimension_numbers<[1], [0], [0], [1], [0, 0, 1, 1], [], []>} : vector<512x64xbf16>, vector<64x128xbf16>, vector<512x128xf32> -> vector<512x128xf32>
      %c0_32 = arith.constant 0 : index
      %c0_33 = arith.constant 0 : index
      %52 = vector.load %arg10[%c0_32, %c0_33] : memref<1x128xf32, #tpu.memory_space<vmem>>, vector<1x128xf32>
      %53 = vector.broadcast %52 : vector<1x128xf32> to vector<512x128xf32>
      %54 = arith.addf %51, %53 : vector<512x128xf32>
      %cst_34 = arith.constant 0.000000e+00 : f32
      %55 = vector.broadcast %cst_34 : f32 to vector<512x128xf32>
      %56 = arith.maximumf %54, %55 : vector<512x128xf32>
      %57 = arith.truncf %56 : vector<512x128xf32> to vector<512x128xbf16>
      %c0_35 = arith.constant 0 : index
      %c0_36 = arith.constant 0 : index
      %58 = vector.load %arg11[%c0_35, %c0_36] : memref<128x512xbf16, #tpu.memory_space<vmem>>, vector<128x512xbf16>
      %cst_37 = arith.constant dense<0.000000e+00> : vector<512x512xf32>
      %59 = tpu.matmul %57, %58, %cst_37 {dimension_numbers = #tpu.dot_dimension_numbers<[1], [0], [0], [1], [0, 0, 1, 1], [], []>} : vector<512x128xbf16>, vector<128x512xbf16>, vector<512x512xf32> -> vector<512x512xf32>
      %c0_38 = arith.constant 0 : index
      %c0_39 = arith.constant 0 : index
      %60 = vector.load %arg12[%c0_38, %c0_39] : memref<1x512xf32, #tpu.memory_space<vmem>>, vector<1x512xf32>
      %61 = vector.broadcast %60 : vector<1x512xf32> to vector<512x512xf32>
      %62 = arith.addf %59, %61 : vector<512x512xf32>
      %c0_40 = arith.constant 0 : index
      %c0_41 = arith.constant 0 : index
      %63 = vector.load %arg13[%c0_40, %c0_41] : memref<512x512xf32, #tpu.memory_space<vmem>>, vector<512x512xf32>
      tpu.vector_store %arg13[%c0_40, %c0_41], %62 {strides = array<i32>} : memref<512x512xf32, #tpu.memory_space<vmem>>, vector<512x512xf32>,
    } else {
    }
    return
  }
  func.func @transform_0(%arg0: i32, %arg1: i32) -> (i32, i32) {
    %c0_i32 = arith.constant 0 : i32
    %c0_i32_0 = arith.constant 0 : i32
    return %arg1, %c0_i32 : i32, i32
  }
  func.func @transform_1(%arg0: i32, %arg1: i32) -> (i32, i32) {
    %c0_i32 = arith.constant 0 : i32
    %c0_i32_0 = arith.constant 0 : i32
    %c0_i32_1 = arith.constant 0 : i32
    return %c0_i32, %c0_i32_0 : i32, i32
  }
  func.func @transform_2(%arg0: i32, %arg1: i32) -> (i32, i32) {
    %c0_i32 = arith.constant 0 : i32
    %c0_i32_0 = arith.constant 0 : i32
    %c0_i32_1 = arith.constant 0 : i32
    return %c0_i32, %c0_i32_0 : i32, i32
  }
  func.func @transform_3(%arg0: i32, %arg1: i32) -> (i32, i32) {
    %c0_i32 = arith.constant 0 : i32
    %c0_i32_0 = arith.constant 0 : i32
    %c0_i32_1 = arith.constant 0 : i32
    return %c0_i32, %c0_i32_0 : i32, i32
  }
  func.func @transform_4(%arg0: i32, %arg1: i32) -> (i32, i32) {
    %c0_i32 = arith.constant 0 : i32
    %c0_i32_0 = arith.constant 0 : i32
    %c0_i32_1 = arith.constant 0 : i32
    return %c0_i32, %c0_i32_0 : i32, i32
  }
  func.func @transform_5(%arg0: i32, %arg1: i32) -> (i32, i32) {
    %c0_i32 = arith.constant 0 : i32
    %c0_i32_0 = arith.constant 0 : i32
    %c0_i32_1 = arith.constant 0 : i32
    return %c0_i32, %c0_i32_0 : i32, i32
  }
  func.func @transform_6(%arg0: i32, %arg1: i32) -> (i32, i32) {
    %c0_i32 = arith.constant 0 : i32
    %c0_i32_0 = arith.constant 0 : i32
    %c0_i32_1 = arith.constant 0 : i32
    return %c0_i32, %c0_i32_0 : i32, i32
  }
  func.func @transform_7(%arg0: i32, %arg1: i32) -> (i32, i32) {
    %c0_i32 = arith.constant 0 : i32
    %c0_i32_0 = arith.constant 0 : i32
    %c0_i32_1 = arith.constant 0 : i32
    return %c0_i32, %c0_i32_0 : i32, i32
  }
  func.func @transform_8(%arg0: i32, %arg1: i32) -> (i32, i32) {
    %c0_i32 = arith.constant 0 : i32
    %c0_i32_0 = arith.constant 0 : i32
    %c0_i32_1 = arith.constant 0 : i32
    return %c0_i32, %c0_i32_0 : i32, i32
  }
  func.func @transform_9(%arg0: i32, %arg1: i32) -> (i32, i32) {
    %c0_i32 = arith.constant 0 : i32
    %c0_i32_0 = arith.constant 0 : i32
    %c0_i32_1 = arith.constant 0 : i32
    return %c0_i32, %c0_i32_0 : i32, i32
  }
  func.func @transform_10(%arg0: i32, %arg1: i32) -> (i32, i32) {
    %c0_i32 = arith.constant 0 : i32
    %c0_i32_0 = arith.constant 0 : i32
    %c0_i32_1 = arith.constant 0 : i32
    return %c0_i32, %c0_i32_0 : i32, i32
  }
  func.func @transform_11(%arg0: i32, %arg1: i32) -> (i32, i32) {
    %c0_i32 = arith.constant 0 : i32
    %c0_i32_0 = arith.constant 0 : i32
    return %arg1, %c0_i32 : i32, i32
  }
}

</mosaic_0001>

<llo_original>
// kernel: audio_aligner_forward.1
$region0: #{audio_aligner_forward.1}
  #allocation0 [shape = 'u32[]', space=smem, size = 0x4, offset = 0x4, fixed_abs, tag = 'smem constant byte address 0x4 - core index']
  #allocation1 [shape = 'u32[144,128]{1,0:T(1,128)}', space=vmem, size = 0x12000, scoped, tag = 'internal scratch']
  #allocation2 [shape = 'f32[1,64]{1,0:T(1,128)}', space=vmem, size = 0x200, scoped, tag = 'scratch operand']
  #allocation3 [shape = 'f32[1,64]{1,0:T(1,128)}', space=vmem, size = 0x200, scoped, tag = 'scratch operand']
  %s0 = inlined_call_operand.hbm [shape: f32[512,512], index: 0, kind: input, shape index: {}]
  %s1 = inlined_call_operand.hbm [shape: bf16[512,128], index: 1, kind: input, shape index: {}]
  %s2 = inlined_call_operand.vmem [shape: f32[1,128], index: 2, kind: input, shape index: {}]
  %s3 = inlined_call_operand.vmem [shape: bf16[128,64], index: 3, kind: input, shape index: {}]
  %s4 = inlined_call_operand.vmem [shape: f32[1,64], index: 4, kind: input, shape index: {}]
  %s5 = inlined_call_operand.vmem [shape: f32[1,64], index: 5, kind: input, shape index: {}]
  %s6 = inlined_call_operand.vmem [shape: f32[1,64], index: 6, kind: input, shape index: {}]
  %s7 = inlined_call_operand.vmem [shape: bf16[64,128], index: 7, kind: input, shape index: {}]
  %s8 = inlined_call_operand.vmem [shape: f32[1,128], index: 8, kind: input, shape index: {}]
  %s9 = inlined_call_operand.hbm [shape: bf16[128,512], index: 9, kind: input, shape index: {}]
  %s10 = inlined_call_operand.vmem [shape: f32[1,512], index: 10, kind: input, shape index: {}]
  %s11 = inlined_call_operand.hbm [shape: f32[512,512], index: 11, kind: output, shape index: {}]
  %s12 = sld [smem:[#allocation0]]
  $region105: #{audio_aligner_forward.1} parent=0
    _
  %s14 = ssub.s32 1, %s12
  %s15 = scalar_select 0, %s14, %s12
  $region1: #{audio_aligner_forward.1} parent=0
    #allocation4 [shape = 'u8[1048576]{0}', space=vmem, size = 0x100000, scoped, tag = 'input window, operand 0, single buffered']
    #allocation5 [shape = 's32[2]{0}', space=sflag, size = 0x8, scoped, tag = 'scoped memory for audio_aligner_forward.1']
    #allocation6 [shape = 's32[2]{0}', space=sflag, size = 0x8, scoped, tag = 'scoped memory for audio_aligner_forward.1']
    #allocation7 [shape = 'u8[131072]{0}', space=vmem, size = 0x20000, scoped, tag = 'input window, operand 1, single buffered']
    #allocation8 [shape = 's32[1]{0}', space=sflag, size = 0x4, scoped, tag = 'scoped memory for audio_aligner_forward.1']
    #allocation9 [shape = 'u8[131072]{0}', space=vmem, size = 0x20000, scoped, tag = 'input window, operand 9, single buffered']
    #allocation10 [shape = 'u8[1048576]{0}', space=vmem, size = 0x100000, scoped, tag = 'output window, operand 0, single buffered']
    %16 = vsyncpa [#allocation5], 0
    %17 = vsyncpa [#allocation8], 0
    %18 = vsyncpa [#allocation6], 0
    loop: start=0, step=1, limit=5
    $region2: #{audio_aligner_forward.1} parent=1 // loop_pre_header
      _
    $region3: #{audio_aligner_forward.1} parent=1 // loop_header
      %s20 = sphi 0, %s24
      %p21 = scmp.ge.s32.totalorder %s20, 5
      %s27 = sphi 0, %s39
      %s28 = sphi 0, %s35
      %s29 = sphi 0, %s27
      %s30 = sphi 0, %s28
      %s31 = sphi 0, %s29
      %s32 = sphi 0, %s30
      %s42 = sphi 0, %s44
      %s45 = sphi 0, %s42
      %s46 = sphi 0, %s45
      %s62 = sphi 0, %s46
      %s66 = sphi 0, %s66
      %s68 = sphi 0, %s66
      %s69 = sphi 0, %s68
      %s83 = sphi 0, %s69
      %s87 = sphi 0, %s87
      %s89 = sphi 0, %s87
      %s90 = sphi 0, %s89
      %s104 = sphi 0, %s90
      %s108 = sphi 0, %s108
      %s110 = sphi 0, %s108
      %s111 = sphi 0, %s110
      %s125 = sphi 0, %s111
      %s129 = sphi 0, %s129
      %s131 = sphi 0, %s129
      %s132 = sphi 0, %s131
      %s146 = sphi 0, %s132
      %s150 = sphi 0, %s150
      %s152 = sphi 0, %s150
      %s153 = sphi 0, %s152
      %s167 = sphi 0, %s153
      %s171 = sphi 0, %s171
      %s173 = sphi 0, %s171
      %s174 = sphi 0, %s173
      %s188 = sphi 0, %s174
      %s192 = sphi 0, %s192
      %s194 = sphi 0, %s192
      %s195 = sphi 0, %s194
      %s209 = sphi 0, %s195
      %s213 = sphi 0, %s213
      %s215 = sphi 0, %s213
      %s216 = sphi 0, %s215
      %s230 = sphi 0, %s216
      %s234 = sphi 0, %s234
      %s236 = sphi 0, %s234
      %s237 = sphi 0, %s236
      %s251 = sphi 0, %s237
      %s255 = sphi 0, %s255
      %s257 = sphi 0, %s255
      %s258 = sphi 0, %s257
      %s272 = sphi 0, %s258
      %s278 = sphi 0, %s280
      %s281 = sphi 0, %s278
      %s282 = sphi 0, %s281
      %s298 = sphi 0, %s282
    $region4: #{audio_aligner_forward.1} parent=1 // loop_header_branch
      %23 = sbr.rel (%p21) target = $region8
    $region5: #{audio_aligner_forward.1} parent=1 // loop_body
      %s25 = ssub.s32 %s20, 1
      %s26 = ssub.s32 %s20, 2
      %s33 = sadd.s32 1, %s28
      %p34 = scmp.ge.s32.totalorder %s33, 1
      %s35 = scalar_select %p34, 0, %s33
      %s36 = sadd.s32 1, %s27
      %s37 = scalar_select %p34, %s36, %s27
      %p38 = scmp.ge.s32.totalorder %s37, 3
      %s39 = scalar_select %p38, 0, %s37
      %s40 = ssub.s32 %s28, %s35
      %p41 = scmp.eq.s32.totalorder %s40, 0
      %s43 = sadd.s32 %s42, 1
      %s44 = scalar_select %p41, %s42, %s43
      %p47 = pneg %p41
      %p48 = scmp.eq.s32.totalorder %s20, 2
      %p49 = por %p47, %p48
      %p50 = scmp.ne.s32.totalorder %s42, %s45
      %p51 = scmp.eq.s32.totalorder %s20, 0
      %p52 = por %p50, %p51
      %p53 = scmp.ne.s32.totalorder %s42, %s45
      %p54 = scmp.eq.s32.totalorder %s25, 2
      %p55 = por %p53, %p54
      %p56 = scmp.ne.s32.totalorder %s45, %s46
      %p57 = scmp.eq.s32.totalorder %s25, 0
      %p58 = por %p56, %p57
      %p59 = scmp.ne.s32.totalorder %s45, %s46
      %p60 = scmp.eq.s32.totalorder %s26, 2
      %p61 = por %p59, %p60
      %p63 = scmp.ne.s32.totalorder %s46, %s62
      %p64 = scmp.eq.s32.totalorder %s26, 0
      %p65 = por %p63, %p64
      %s67 = sadd.s32 %s66, 1
      %p70 = scmp.eq.s32.totalorder %s20, 2
      %p71 = scmp.ne.s32.totalorder %s66, %s68
      %p72 = scmp.eq.s32.totalorder %s20, 0
      %p73 = por %p71, %p72
      %p74 = scmp.ne.s32.totalorder %s66, %s68
      %p75 = scmp.eq.s32.totalorder %s25, 2
      %p76 = por %p74, %p75
      %p77 = scmp.ne.s32.totalorder %s68, %s69
      %p78 = scmp.eq.s32.totalorder %s25, 0
      %p79 = por %p77, %p78
      %p80 = scmp.ne.s32.totalorder %s68, %s69
      %p81 = scmp.eq.s32.totalorder %s26, 2
      %p82 = por %p80, %p81
      %p84 = scmp.ne.s32.totalorder %s69, %s83
      %p85 = scmp.eq.s32.totalorder %s26, 0
      %p86 = por %p84, %p85
      %s88 = sadd.s32 %s87, 1
      %p91 = scmp.eq.s32.totalorder %s20, 2
      %p92 = scmp.ne.s32.totalorder %s87, %s89
      %p93 = scmp.eq.s32.totalorder %s20, 0
      %p94 = por %p92, %p93
      %p95 = scmp.ne.s32.totalorder %s87, %s89
      %p96 = scmp.eq.s32.totalorder %s25, 2
      %p97 = por %p95, %p96
      %p98 = scmp.ne.s32.totalorder %s89, %s90
      %p99 = scmp.eq.s32.totalorder %s25, 0
      %p100 = por %p98, %p99
      %p101 = scmp.ne.s32.totalorder %s89, %s90
      %p102 = scmp.eq.s32.totalorder %s26, 2
      %p103 = por %p101, %p102
      %p105 = scmp.ne.s32.totalorder %s90, %s104
      %p106 = scmp.eq.s32.totalorder %s26, 0
      %p107 = por %p105, %p106
      %s109 = sadd.s32 %s108, 1
      %p112 = scmp.eq.s32.totalorder %s20, 2
      %p113 = scmp.ne.s32.totalorder %s108, %s110
      %p114 = scmp.eq.s32.totalorder %s20, 0
      %p115 = por %p113, %p114
      %p116 = scmp.ne.s32.totalorder %s108, %s110
      %p117 = scmp.eq.s32.totalorder %s25, 2
      %p118 = por %p116, %p117
      %p119 = scmp.ne.s32.totalorder %s110, %s111
      %p120 = scmp.eq.s32.totalorder %s25, 0
      %p121 = por %p119, %p120
      %p122 = scmp.ne.s32.totalorder %s110, %s111
      %p123 = scmp.eq.s32.totalorder %s26, 2
      %p124 = por %p122, %p123
      %p126 = scmp.ne.s32.totalorder %s111, %s125
      %p127 = scmp.eq.s32.totalorder %s26, 0
      %p128 = por %p126, %p127
      %s130 = sadd.s32 %s129, 1
      %p133 = scmp.eq.s32.totalorder %s20, 2
      %p134 = scmp.ne.s32.totalorder %s129, %s131
      %p135 = scmp.eq.s32.totalorder %s20, 0
      %p136 = por %p134, %p135
      %p137 = scmp.ne.s32.totalorder %s129, %s131
      %p138 = scmp.eq.s32.totalorder %s25, 2
      %p139 = por %p137, %p138
      %p140 = scmp.ne.s32.totalorder %s131, %s132
      %p141 = scmp.eq.s32.totalorder %s25, 0
      %p142 = por %p140, %p141
      %p143 = scmp.ne.s32.totalorder %s131, %s132
      %p144 = scmp.eq.s32.totalorder %s26, 2
      %p145 = por %p143, %p144
      %p147 = scmp.ne.s32.totalorder %s132, %s146
      %p148 = scmp.eq.s32.totalorder %s26, 0
      %p149 = por %p147, %p148
      %s151 = sadd.s32 %s150, 1
      %p154 = scmp.eq.s32.totalorder %s20, 2
      %p155 = scmp.ne.s32.totalorder %s150, %s152
      %p156 = scmp.eq.s32.totalorder %s20, 0
      %p157 = por %p155, %p156
      %p158 = scmp.ne.s32.totalorder %s150, %s152
      %p159 = scmp.eq.s32.totalorder %s25, 2
      %p160 = por %p158, %p159
      %p161 = scmp.ne.s32.totalorder %s152, %s153
      %p162 = scmp.eq.s32.totalorder %s25, 0
      %p163 = por %p161, %p162
      %p164 = scmp.ne.s32.totalorder %s152, %s153
      %p165 = scmp.eq.s32.totalorder %s26, 2
      %p166 = por %p164, %p165
      %p168 = scmp.ne.s32.totalorder %s153, %s167
      %p169 = scmp.eq.s32.totalorder %s26, 0
      %p170 = por %p168, %p169
      %s172 = sadd.s32 %s171, 1
      %p175 = scmp.eq.s32.totalorder %s20, 2
      %p176 = scmp.ne.s32.totalorder %s171, %s173
      %p177 = scmp.eq.s32.totalorder %s20, 0
      %p178 = por %p176, %p177
      %p179 = scmp.ne.s32.totalorder %s171, %s173
      %p180 = scmp.eq.s32.totalorder %s25, 2
      %p181 = por %p179, %p180
      %p182 = scmp.ne.s32.totalorder %s173, %s174
      %p183 = scmp.eq.s32.totalorder %s25, 0
      %p184 = por %p182, %p183
      %p185 = scmp.ne.s32.totalorder %s173, %s174
      %p186 = scmp.eq.s32.totalorder %s26, 2
      %p187 = por %p185, %p186
      %p189 = scmp.ne.s32.totalorder %s174, %s188
      %p190 = scmp.eq.s32.totalorder %s26, 0
      %p191 = por %p189, %p190
      %s193 = sadd.s32 %s192, 1
      %p196 = scmp.eq.s32.totalorder %s20, 2
      %p197 = scmp.ne.s32.totalorder %s192, %s194
      %p198 = scmp.eq.s32.totalorder %s20, 0
      %p199 = por %p197, %p198
      %p200 = scmp.ne.s32.totalorder %s192, %s194
      %p201 = scmp.eq.s32.totalorder %s25, 2
      %p202 = por %p200, %p201
      %p203 = scmp.ne.s32.totalorder %s194, %s195
      %p204 = scmp.eq.s32.totalorder %s25, 0
      %p205 = por %p203, %p204
      %p206 = scmp.ne.s32.totalorder %s194, %s195
      %p207 = scmp.eq.s32.totalorder %s26, 2
      %p208 = por %p206, %p207
      %p210 = scmp.ne.s32.totalorder %s195, %s209
      %p211 = scmp.eq.s32.totalorder %s26, 0
      %p212 = por %p210, %p211
      %s214 = sadd.s32 %s213, 1
      %p217 = scmp.eq.s32.totalorder %s20, 2
      %p218 = scmp.ne.s32.totalorder %s213, %s215
      %p219 = scmp.eq.s32.totalorder %s20, 0
      %p220 = por %p218, %p219
      %p221 = scmp.ne.s32.totalorder %s213, %s215
      %p222 = scmp.eq.s32.totalorder %s25, 2
      %p223 = por %p221, %p222
      %p224 = scmp.ne.s32.totalorder %s215, %s216
      %p225 = scmp.eq.s32.totalorder %s25, 0
      %p226 = por %p224, %p225
      %p227 = scmp.ne.s32.totalorder %s215, %s216
      %p228 = scmp.eq.s32.totalorder %s26, 2
      %p229 = por %p227, %p228
      %p231 = scmp.ne.s32.totalorder %s216, %s230
      %p232 = scmp.eq.s32.totalorder %s26, 0
      %p233 = por %p231, %p232
      %s235 = sadd.s32 %s234, 1
      %p238 = scmp.eq.s32.totalorder %s20, 2
      %p239 = scmp.ne.s32.totalorder %s234, %s236
      %p240 = scmp.eq.s32.totalorder %s20, 0
      %p241 = por %p239, %p240
      %p242 = scmp.ne.s32.totalorder %s234, %s236
      %p243 = scmp.eq.s32.totalorder %s25, 2
      %p244 = por %p242, %p243
      %p245 = scmp.ne.s32.totalorder %s236, %s237
      %p246 = scmp.eq.s32.totalorder %s25, 0
      %p247 = por %p245, %p246
      %p248 = scmp.ne.s32.totalorder %s236, %s237
      %p249 = scmp.eq.s32.totalorder %s26, 2
      %p250 = por %p248, %p249
      %p252 = scmp.ne.s32.totalorder %s237, %s251
      %p253 = scmp.eq.s32.totalorder %s26, 0
      %p254 = por %p252, %p253
      %s256 = sadd.s32 %s255, 1
      %p259 = scmp.eq.s32.totalorder %s20, 2
      %p260 = scmp.ne.s32.totalorder %s255, %s257
      %p261 = scmp.eq.s32.totalorder %s20, 0
      %p262 = por %p260, %p261
      %p263 = scmp.ne.s32.totalorder %s255, %s257
      %p264 = scmp.eq.s32.totalorder %s25, 2
      %p265 = por %p263, %p264
      %p266 = scmp.ne.s32.totalorder %s257, %s258
      %p267 = scmp.eq.s32.totalorder %s25, 0
      %p268 = por %p266, %p267
      %p269 = scmp.ne.s32.totalorder %s257, %s258
      %p270 = scmp.eq.s32.totalorder %s26, 2
      %p271 = por %p269, %p270
      %p273 = scmp.ne.s32.totalorder %s258, %s272
      %p274 = scmp.eq.s32.totalorder %s26, 0
      %p275 = por %p273, %p274
      %s276 = ssub.s32 %s28, %s35
      %p277 = scmp.eq.s32.totalorder %s276, 0
      %s279 = sadd.s32 %s278, 1
      %s280 = scalar_select %p277, %s278, %s279
      %p283 = pneg %p277
      %p284 = scmp.eq.s32.totalorder %s20, 2
      %p285 = por %p283, %p284
      %p286 = scmp.ne.s32.totalorder %s278, %s281
      %p287 = scmp.eq.s32.totalorder %s20, 0
      %p288 = por %p286, %p287
      %p289 = scmp.ne.s32.totalorder %s278, %s281
      %p290 = scmp.eq.s32.totalorder %s25, 2
      %p291 = por %p289, %p290
      %p292 = scmp.ne.s32.totalorder %s281, %s282
      %p293 = scmp.eq.s32.totalorder %s25, 0
      %p294 = por %p292, %p293
      %p295 = scmp.ne.s32.totalorder %s281, %s282
      %p296 = scmp.eq.s32.totalorder %s26, 2
      %p297 = por %p295, %p296
      %p299 = scmp.ne.s32.totalorder %s282, %s298
      %p300 = scmp.eq.s32.totalorder %s26, 0
      %p301 = por %p299, %p300
      %p302 = scmp.le.s32.totalorder 1, %s20
      %p303 = scmp.lt.s32.totalorder %s20, 4
      %p304 = pnand %p302, %p303
      %p305 = pneg %p304
      // Predicated region
      $region9: #{audio_aligner_forward.1} parent=5 // pred_check
        _
      $region10: #{audio_aligner_forward.1} parent=5 // pred_check_branch
        %307 = sbr.rel (%p304) target = $region12
      $region11: #{audio_aligner_forward.1} parent=5 // pred_region
        %s308 = ssub.s32 %s20, 1
        // Predicated region
        $region13: #{audio_aligner_forward.1} parent=11 // pred_check
          %p309 = pneg %p58
        $region14: #{audio_aligner_forward.1} parent=11 // pred_check_branch
          %311 = sbr.rel (%p309) target = $region16
        $region15: #{audio_aligner_forward.1} parent=11 // pred_region
          %s312 = smul.u32 64, %s30
          %s314 = ssub.s32 32768, 32768
          %315 = vsyncadd [#allocation5], %s314
          %s316 = smul.addr %s312, 4
          %s317 = smul.addr %s316, 128
          %s318 = scalar_lea.hbm %s0, %s317
          %s319 = sshll.u32 [#allocation4], 4
          %s320 = int_to_ptr.vmem [resolvable:$true] %s319
          %325 = dma.hbm_to_vmem [thread:$0]  %s318, 32768, %s320, [#allocation5], 512, 512, 32
        $region16: #{audio_aligner_forward.1} parent=11 // pred_fallthru
          _
        // Predicated region
        $region17: #{audio_aligner_forward.1} parent=11 // pred_check
          %p326 = pneg %p79
        $region18: #{audio_aligner_forward.1} parent=11 // pred_check_branch
          %328 = sbr.rel (%p326) target = $region20
        $region19: #{audio_aligner_forward.1} parent=11 // pred_region
          %s330 = ssub.s32 4096, 4096
          %331 = vsyncadd [#allocation8], %s330
          %s332 = sshll.u32 [#allocation7], 4
          %s333 = int_to_ptr.vmem [resolvable:$true] %s332
          %338 = dma.hbm_to_vmem [thread:$0]  %s1, 4096, %s333, [#allocation8], 64, 64, 4
        $region20: #{audio_aligner_forward.1} parent=11 // pred_fallthru
          _
        // Predicated region
        $region21: #{audio_aligner_forward.1} parent=11 // pred_check
          %p339 = pneg %p100
        $region22: #{audio_aligner_forward.1} parent=11 // pred_check_branch
          %341 = sbr.rel (%p339) target = $region24
        $region23: #{audio_aligner_forward.1} parent=11 // pred_region
          _
        $region24: #{audio_aligner_forward.1} parent=11 // pred_fallthru
          _
        // Predicated region
        $region25: #{audio_aligner_forward.1} parent=11 // pred_check
          %p342 = pneg %p121
        $region26: #{audio_aligner_forward.1} parent=11 // pred_check_branch
          %344 = sbr.rel (%p342) target = $region28
        $region27: #{audio_aligner_forward.1} parent=11 // pred_region
          _
        $region28: #{audio_aligner_forward.1} parent=11 // pred_fallthru
          _
        // Predicated region
        $region29: #{audio_aligner_forward.1} parent=11 // pred_check
          %p345 = pneg %p142
        $region30: #{audio_aligner_forward.1} parent=11 // pred_check_branch
          %347 = sbr.rel (%p345) target = $region32
        $region31: #{audio_aligner_forward.1} parent=11 // pred_region
          _
        $region32: #{audio_aligner_forward.1} parent=11 // pred_fallthru
          _
        // Predicated region
        $region33: #{audio_aligner_forward.1} parent=11 // pred_check
          %p348 = pneg %p163
        $region34: #{audio_aligner_forward.1} parent=11 // pred_check_branch
          %350 = sbr.rel (%p348) target = $region36
        $region35: #{audio_aligner_forward.1} parent=11 // pred_region
          _
        $region36: #{audio_aligner_forward.1} parent=11 // pred_fallthru
          _
        // Predicated region
        $region37: #{audio_aligner_forward.1} parent=11 // pred_check
          %p351 = pneg %p184
        $region38: #{audio_aligner_forward.1} parent=11 // pred_check_branch
          %353 = sbr.rel (%p351) target = $region40
        $region39: #{audio_aligner_forward.1} parent=11 // pred_region
          _
        $region40: #{audio_aligner_forward.1} parent=11 // pred_fallthru
          _
        // Predicated region
        $region41: #{audio_aligner_forward.1} parent=11 // pred_check
          %p354 = pneg %p205
        $region42: #{audio_aligner_forward.1} parent=11 // pred_check_branch
          %356 = sbr.rel (%p354) target = $region44
        $region43: #{audio_aligner_forward.1} parent=11 // pred_region
          _
        $region44: #{audio_aligner_forward.1} parent=11 // pred_fallthru
          _
        // Predicated region
        $region45: #{audio_aligner_forward.1} parent=11 // pred_check
          %p357 = pneg %p226
        $region46: #{audio_aligner_forward.1} parent=11 // pred_check_branch
          %359 = sbr.rel (%p357) target = $region48
        $region47: #{audio_aligner_forward.1} parent=11 // pred_region
          _
        $region48: #{audio_aligner_forward.1} parent=11 // pred_fallthru
          _
        // Predicated region
        $region49: #{audio_aligner_forward.1} parent=11 // pred_check
          %p360 = pneg %p247
        $region50: #{audio_aligner_forward.1} parent=11 // pred_check_branch
          %362 = sbr.rel (%p360) target = $region52
        $region51: #{audio_aligner_forward.1} parent=11 // pred_region
          %s364 = ssub.s32 4096, 4096
          %365 = vsyncadd [#allocation8], %s364
          %s366 = sshll.u32 [#allocation9], 4
          %s367 = int_to_ptr.vmem [resolvable:$true] %s366
          %372 = dma.hbm_to_vmem [thread:$0]  %s9, 4096, %s367, [#allocation8], 256, 256, 16
        $region52: #{audio_aligner_forward.1} parent=11 // pred_fallthru
          _
        // Predicated region
        $region53: #{audio_aligner_forward.1} parent=11 // pred_check
          %p373 = pneg %p268
        $region54: #{audio_aligner_forward.1} parent=11 // pred_check_branch
          %375 = sbr.rel (%p373) target = $region56
        $region55: #{audio_aligner_forward.1} parent=11 // pred_region
          _
        $region56: #{audio_aligner_forward.1} parent=11 // pred_fallthru
          _
      $region12: #{audio_aligner_forward.1} parent=5 // pred_fallthru
        _
      %p376 = scmp.lt.s32.totalorder %s20, 3
      // Predicated region
      $region57: #{audio_aligner_forward.1} parent=5 // pred_check
        %p377 = pneg %p376
      $region58: #{audio_aligner_forward.1} parent=5 // pred_check_branch
        %379 = sbr.rel (%p377) target = $region60
      $region59: #{audio_aligner_forward.1} parent=5 // pred_region
        _
      $region60: #{audio_aligner_forward.1} parent=5 // pred_fallthru
        _
      %p380 = scmp.le.s32.totalorder 1, %s20
      %p381 = scmp.lt.s32.totalorder %s20, 4
      %p382 = pnand %p380, %p381
      %p383 = pneg %p382
      // Predicated region
      $region61: #{audio_aligner_forward.1} parent=5 // pred_check
        _
      $region62: #{audio_aligner_forward.1} parent=5 // pred_check_branch
        %385 = sbr.rel (%p382) target = $region64
      $region63: #{audio_aligner_forward.1} parent=5 // pred_region
        %s386 = ssub.s32 %s20, 1
        // Predicated region
        $region65: #{audio_aligner_forward.1} parent=63 // pred_check
          %p387 = pneg %p58
        $region66: #{audio_aligner_forward.1} parent=63 // pred_check_branch
          %389 = sbr.rel (%p387) target = $region68
        $region67: #{audio_aligner_forward.1} parent=63 // pred_region
          %390 = dma.done [#allocation5], 32768
        $region68: #{audio_aligner_forward.1} parent=63 // pred_fallthru
          _
        // Predicated region
        $region69: #{audio_aligner_forward.1} parent=63 // pred_check
          %p391 = pneg %p79
        $region70: #{audio_aligner_forward.1} parent=63 // pred_check_branch
          %393 = sbr.rel (%p391) target = $region72
        $region71: #{audio_aligner_forward.1} parent=63 // pred_region
          %394 = dma.done [#allocation8], 4096
        $region72: #{audio_aligner_forward.1} parent=63 // pred_fallthru
          _
        // Predicated region
        $region73: #{audio_aligner_forward.1} parent=63 // pred_check
          %p395 = pneg %p247
        $region74: #{audio_aligner_forward.1} parent=63 // pred_check_branch
          %397 = sbr.rel (%p395) target = $region76
        $region75: #{audio_aligner_forward.1} parent=63 // pred_region
          %398 = dma.done [#allocation8], 4096
        $region76: #{audio_aligner_forward.1} parent=63 // pred_fallthru
          _
        %p399 = pneg %p58
        %p400 = pneg %p55
        %p401 = pneg %p79
        %p402 = pneg %p76
        %p403 = pneg %p100
        %p404 = pneg %p97
        %p405 = pneg %p121
        %p406 = pneg %p118
        %p407 = pneg %p142
        %p408 = pneg %p139
        %p409 = pneg %p163
        %p410 = pneg %p160
        %p411 = pneg %p184
        %p412 = pneg %p181
        %p413 = pneg %p205
        %p414 = pneg %p202
        %p415 = pneg %p226
        %p416 = pneg %p223
        %p417 = pneg %p247
        %p418 = pneg %p244
        %p419 = pneg %p268
        %p420 = pneg %p265
        %p421 = pneg %p294
        %p422 = pneg %p291
        %s423 = smul.u32 64, %s30
        %s424 = smul.u32 64, %s30
        %p426 = scmp.eq.s32.totalorder %s29, 0
        %p427 = scmp.eq.s32.totalorder %s30, 0
        %p428 = pnand %p426, %p427
        %p429 = pneg %p428
        // Predicated region
        $region77: #{audio_aligner_forward.1} parent=63 // pred_check
          _
        $region78: #{audio_aligner_forward.1} parent=63 // pred_check_branch
          %431 = sbr.rel (%p428) target = $region80
        $region79: #{audio_aligner_forward.1} parent=63 // pred_region
          %vm432 = vcmask 516096
          %433 = vst.msk [vmem:[#allocation2] sm:$0x1] %vm432, 0.0
          %434 = vst.msk [vmem:[#allocation3] sm:$0x1] %vm432, 0.0
        $region80: #{audio_aligner_forward.1} parent=63 // pred_fallthru
          _
        %v435 = vld [vmem:[#allocation4] sm:$0xff]
        %v436 = vld [vmem:[#allocation4 + $0x8] sm:$0xff]
        %v437 = vld [vmem:[#allocation4 + $0x10] sm:$0xff]
        %v438 = vld [vmem:[#allocation4 + $0x18] sm:$0xff]
        %v439 = vld [vmem:[#allocation4 + $0x20] sm:$0xff]
        %v440 = vld [vmem:[#allocation4 + $0x28] sm:$0xff]
        %v441 = vld [vmem:[#allocation4 + $0x30] sm:$0xff]
        %v442 = vld [vmem:[#allocation4 + $0x38] sm:$0xff]
        %v443 = vld [vmem:[#allocation4 + $0x40] sm:$0xff]
        %v444 = vld [vmem:[#allocation4 + $0x48] sm:$0xff]
        %v445 = vld [vmem:[#allocation4 + $0x50] sm:$0xff]
        %v446 = vld [vmem:[#allocation4 + $0x58] sm:$0xff]
        %v447 = vld [vmem:[#allocation4 + $0x60] sm:$0xff]
        %v448 = vld [vmem:[#allocation4 + $0x68] sm:$0xff]
        %v449 = vld [vmem:[#allocation4 + $0x70] sm:$0xff]
        %v450 = vld [vmem:[#allocation4 + $0x78] sm:$0xff]
        %v451 = vld [vmem:[#allocation4 + $0x80] sm:$0xff]
        %v452 = vld [vmem:[#allocation4 + $0x88] sm:$0xff]
        %v453 = vld [vmem:[#allocation4 + $0x90] sm:$0xff]
        %v454 = vld [vmem:[#allocation4 + $0x98] sm:$0xff]
        %v455 = vld [vmem:[#allocation4 + $0xa0] sm:$0xff]
        %v456 = vld [vmem:[#allocation4 + $0xa8] sm:$0xff]
        %v457 = vld [vmem:[#allocation4 + $0xb0] sm:$0xff]
        %v458 = vld [vmem:[#allocation4 + $0xb8] sm:$0xff]
        %v459 = vld [vmem:[#allocation4 + $0xc0] sm:$0xff]
        %v460 = vld [vmem:[#allocation4 + $0xc8] sm:$0xff]
        %v461 = vld [vmem:[#allocation4 + $0xd0] sm:$0xff]
        %v462 = vld [vmem:[#allocation4 + $0xd8] sm:$0xff]
        %v463 = vld [vmem:[#allocation4 + $0xe0] sm:$0xff]
        %v464 = vld [vmem:[#allocation4 + $0xe8] sm:$0xff]
        %v465 = vld [vmem:[#allocation4 + $0xf0] sm:$0xff]
        %v466 = vld [vmem:[#allocation4 + $0xf8] sm:$0xff]
        %v467 = vld [vmem:[#allocation4 + $0x100] sm:$0xff]
        %v468 = vld [vmem:[#allocation4 + $0x108] sm:$0xff]
        %v469 = vld [vmem:[#allocation4 + $0x110] sm:$0xff]
        %v470 = vld [vmem:[#allocation4 + $0x118] sm:$0xff]
        %v471 = vld [vmem:[#allocation4 + $0x120] sm:$0xff]
        %v472 = vld [vmem:[#allocation4 + $0x128] sm:$0xff]
        %v473 = vld [vmem:[#allocation4 + $0x130] sm:$0xff]
        %v474 = vld [vmem:[#allocation4 + $0x138] sm:$0xff]
        %v475 = vld [vmem:[#allocation4 + $0x140] sm:$0xff]
        %v476 = vld [vmem:[#allocation4 + $0x148] sm:$0xff]
        %v477 = vld [vmem:[#allocation4 + $0x150] sm:$0xff]
        %v478 = vld [vmem:[#allocation4 + $0x158] sm:$0xff]
        %v479 = vld [vmem:[#allocation4 + $0x160] sm:$0xff]
        %v480 = vld [vmem:[#allocation4 + $0x168] sm:$0xff]
        %v481 = vld [vmem:[#allocation4 + $0x170] sm:$0xff]
        %v482 = vld [vmem:[#allocation4 + $0x178] sm:$0xff]
        %v483 = vld [vmem:[#allocation4 + $0x180] sm:$0xff]
        %v484 = vld [vmem:[#allocation4 + $0x188] sm:$0xff]
        %v485 = vld [vmem:[#allocation4 + $0x190] sm:$0xff]
        %v486 = vld [vmem:[#allocation4 + $0x198] sm:$0xff]
        %v487 = vld [vmem:[#allocation4 + $0x1a0] sm:$0xff]
        %v488 = vld [vmem:[#allocation4 + $0x1a8] sm:$0xff]
        %v489 = vld [vmem:[#allocation4 + $0x1b0] sm:$0xff]
        %v490 = vld [vmem:[#allocation4 + $0x1b8] sm:$0xff]
        %v491 = vld [vmem:[#allocation4 + $0x1c0] sm:$0xff]
        %v492 = vld [vmem:[#allocation4 + $0x1c8] sm:$0xff]
        %v493 = vld [vmem:[#allocation4 + $0x1d0] sm:$0xff]
        %v494 = vld [vmem:[#allocation4 + $0x1d8] sm:$0xff]
        %v495 = vld [vmem:[#allocation4 + $0x1e0] sm:$0xff]
        %v496 = vld [vmem:[#allocation4 + $0x1e8] sm:$0xff]
        %v497 = vld [vmem:[#allocation4 + $0x1f0] sm:$0xff]
        %v498 = vld [vmem:[#allocation4 + $0x1f8] sm:$0xff]
        %v499 = vld [vmem:[#allocation4 + $0x200] sm:$0xff]
        %v500 = vld [vmem:[#allocation4 + $0x208] sm:$0xff]
        %v501 = vld [vmem:[#allocation4 + $0x210] sm:$0xff]
        %v502 = vld [vmem:[#allocation4 + $0x218] sm:$0xff]
        %v503 = vld [vmem:[#allocation4 + $0x220] sm:$0xff]
        %v504 = vld [vmem:[#allocation4 + $0x228] sm:$0xff]
        %v505 = vld [vmem:[#allocation4 + $0x230] sm:$0xff]
        %v506 = vld [vmem:[#allocation4 + $0x238] sm:$0xff]
        %v507 = vld [vmem:[#allocation4 + $0x240] sm:$0xff]
        %v508 = vld [vmem:[#allocation4 + $0x248] sm:$0xff]
        %v509 = vld [vmem:[#allocation4 + $0x250] sm:$0xff]
        %v510 = vld [vmem:[#allocation4 + $0x258] sm:$0xff]
        %v511 = vld [vmem:[#allocation4 + $0x260] sm:$0xff]
        %v512 = vld [vmem:[#allocation4 + $0x268] sm:$0xff]
        %v513 = vld [vmem:[#allocation4 + $0x270] sm:$0xff]
        %v514 = vld [vmem:[#allocation4 + $0x278] sm:$0xff]
        %v515 = vld [vmem:[#allocation4 + $0x280] sm:$0xff]
        %v516 = vld [vmem:[#allocation4 + $0x288] sm:$0xff]
        %v517 = vld [vmem:[#allocation4 + $0x290] sm:$0xff]
        %v518 = vld [vmem:[#allocation4 + $0x298] sm:$0xff]
        %v519 = vld [vmem:[#allocation4 + $0x2a0] sm:$0xff]
        %v520 = vld [vmem:[#allocation4 + $0x2a8] sm:$0xff]
        %v521 = vld [vmem:[#allocation4 + $0x2b0] sm:$0xff]
        %v522 = vld [vmem:[#allocation4 + $0x2b8] sm:$0xff]
        %v523 = vld [vmem:[#allocation4 + $0x2c0] sm:$0xff]
        %v524 = vld [vmem:[#allocation4 + $0x2c8] sm:$0xff]
        %v525 = vld [vmem:[#allocation4 + $0x2d0] sm:$0xff]
        %v526 = vld [vmem:[#allocation4 + $0x2d8] sm:$0xff]
        %v527 = vld [vmem:[#allocation4 + $0x2e0] sm:$0xff]
        %v528 = vld [vmem:[#allocation4 + $0x2e8] sm:$0xff]
        %v529 = vld [vmem:[#allocation4 + $0x2f0] sm:$0xff]
        %v530 = vld [vmem:[#allocation4 + $0x2f8] sm:$0xff]
        %v531 = vld [vmem:[#allocation4 + $0x300] sm:$0xff]
        %v532 = vld [vmem:[#allocation4 + $0x308] sm:$0xff]
        %v533 = vld [vmem:[#allocation4 + $0x310] sm:$0xff]
        %v534 = vld [vmem:[#allocation4 + $0x318] sm:$0xff]
        %v535 = vld [vmem:[#allocation4 + $0x320] sm:$0xff]
        %v536 = vld [vmem:[#allocation4 + $0x328] sm:$0xff]
        %v537 = vld [vmem:[#allocation4 + $0x330] sm:$0xff]
        %v538 = vld [vmem:[#allocation4 + $0x338] sm:$0xff]
        %v539 = vld [vmem:[#allocation4 + $0x340] sm:$0xff]
        %v540 = vld [vmem:[#allocation4 + $0x348] sm:$0xff]
        %v541 = vld [vmem:[#allocation4 + $0x350] sm:$0xff]
        %v542 = vld [vmem:[#allocation4 + $0x358] sm:$0xff]
        %v543 = vld [vmem:[#allocation4 + $0x360] sm:$0xff]
        %v544 = vld [vmem:[#allocation4 + $0x368] sm:$0xff]
        %v545 = vld [vmem:[#allocation4 + $0x370] sm:$0xff]
        %v546 = vld [vmem:[#allocation4 + $0x378] sm:$0xff]
        %v547 = vld [vmem:[#allocation4 + $0x380] sm:$0xff]
        %v548 = vld [vmem:[#allocation4 + $0x388] sm:$0xff]
        %v549 = vld [vmem:[#allocation4 + $0x390] sm:$0xff]
        %v550 = vld [vmem:[#allocation4 + $0x398] sm:$0xff]
        %v551 = vld [vmem:[#allocation4 + $0x3a0] sm:$0xff]
        %v552 = vld [vmem:[#allocation4 + $0x3a8] sm:$0xff]
        %v553 = vld [vmem:[#allocation4 + $0x3b0] sm:$0xff]
        %v554 = vld [vmem:[#allocation4 + $0x3b8] sm:$0xff]
        %v555 = vld [vmem:[#allocation4 + $0x3c0] sm:$0xff]
        %v556 = vld [vmem:[#allocation4 + $0x3c8] sm:$0xff]
        %v557 = vld [vmem:[#allocation4 + $0x3d0] sm:$0xff]
        %v558 = vld [vmem:[#allocation4 + $0x3d8] sm:$0xff]
        %v559 = vld [vmem:[#allocation4 + $0x3e0] sm:$0xff]
        %v560 = vld [vmem:[#allocation4 + $0x3e8] sm:$0xff]
        %v561 = vld [vmem:[#allocation4 + $0x3f0] sm:$0xff]
        %v562 = vld [vmem:[#allocation4 + $0x3f8] sm:$0xff]
        %v563 = vld [vmem:[#allocation4 + $0x400] sm:$0xff]
        %v564 = vld [vmem:[#allocation4 + $0x408] sm:$0xff]
        %v565 = vld [vmem:[#allocation4 + $0x410] sm:$0xff]
        %v566 = vld [vmem:[#allocation4 + $0x418] sm:$0xff]
        %v567 = vld [vmem:[#allocation4 + $0x420] sm:$0xff]
        %v568 = vld [vmem:[#allocation4 + $0x428] sm:$0xff]
        %v569 = vld [vmem:[#allocation4 + $0x430] sm:$0xff]
        %v570 = vld [vmem:[#allocation4 + $0x438] sm:$0xff]
        %v571 = vld [vmem:[#allocation4 + $0x440] sm:$0xff]
        %v572 = vld [vmem:[#allocation4 + $0x448] sm:$0xff]
        %v573 = vld [vmem:[#allocation4 + $0x450] sm:$0xff]
        %v574 = vld [vmem:[#allocation4 + $0x458] sm:$0xff]
        %v575 = vld [vmem:[#allocation4 + $0x460] sm:$0xff]
        %v576 = vld [vmem:[#allocation4 + $0x468] sm:$0xff]
        %v577 = vld [vmem:[#allocation4 + $0x470] sm:$0xff]
        %v578 = vld [vmem:[#allocation4 + $0x478] sm:$0xff]
        %v579 = vld [vmem:[#allocation4 + $0x480] sm:$0xff]
        %v580 = vld [vmem:[#allocation4 + $0x488] sm:$0xff]
        %v581 = vld [vmem:[#allocation4 + $0x490] sm:$0xff]
        %v582 = vld [vmem:[#allocation4 + $0x498] sm:$0xff]
        %v583 = vld [vmem:[#allocation4 + $0x4a0] sm:$0xff]
        %v584 = vld [vmem:[#allocation4 + $0x4a8] sm:$0xff]
        %v585 = vld [vmem:[#allocation4 + $0x4b0] sm:$0xff]
        %v586 = vld [vmem:[#allocation4 + $0x4b8] sm:$0xff]
        %v587 = vld [vmem:[#allocation4 + $0x4c0] sm:$0xff]
        %v588 = vld [vmem:[#allocation4 + $0x4c8] sm:$0xff]
        %v589 = vld [vmem:[#allocation4 + $0x4d0] sm:$0xff]
        %v590 = vld [vmem:[#allocation4 + $0x4d8] sm:$0xff]
        %v591 = vld [vmem:[#allocation4 + $0x4e0] sm:$0xff]
        %v592 = vld [vmem:[#allocation4 + $0x4e8] sm:$0xff]
        %v593 = vld [vmem:[#allocation4 + $0x4f0] sm:$0xff]
        %v594 = vld [vmem:[#allocation4 + $0x4f8] sm:$0xff]
        %v595 = vld [vmem:[#allocation4 + $0x500] sm:$0xff]
        %v596 = vld [vmem:[#allocation4 + $0x508] sm:$0xff]
        %v597 = vld [vmem:[#allocation4 + $0x510] sm:$0xff]
        %v598 = vld [vmem:[#allocation4 + $0x518] sm:$0xff]
        %v599 = vld [vmem:[#allocation4 + $0x520] sm:$0xff]
        %v600 = vld [vmem:[#allocation4 + $0x528] sm:$0xff]
        %v601 = vld [vmem:[#allocation4 + $0x530] sm:$0xff]
        %v602 = vld [vmem:[#allocation4 + $0x538] sm:$0xff]
        %v603 = vld [vmem:[#allocation4 + $0x540] sm:$0xff]
        %v604 = vld [vmem:[#allocation4 + $0x548] sm:$0xff]
        %v605 = vld [vmem:[#allocation4 + $0x550] sm:$0xff]
        %v606 = vld [vmem:[#allocation4 + $0x558] sm:$0xff]
        %v607 = vld [vmem:[#allocation4 + $0x560] sm:$0xff]
        %v608 = vld [vmem:[#allocation4 + $0x568] sm:$0xff]
        %v609 = vld [vmem:[#allocation4 + $0x570] sm:$0xff]
        %v610 = vld [vmem:[#allocation4 + $0x578] sm:$0xff]
        %v611 = vld [vmem:[#allocation4 + $0x580] sm:$0xff]
        %v612 = vld [vmem:[#allocation4 + $0x588] sm:$0xff]
        %v613 = vld [vmem:[#allocation4 + $0x590] sm:$0xff]
        %v614 = vld [vmem:[#allocation4 + $0x598] sm:$0xff]
        %v615 = vld [vmem:[#allocation4 + $0x5a0] sm:$0xff]
        %v616 = vld [vmem:[#allocation4 + $0x5a8] sm:$0xff]
        %v617 = vld [vmem:[#allocation4 + $0x5b0] sm:$0xff]
        %v618 = vld [vmem:[#allocation4 + $0x5b8] sm:$0xff]
        %v619 = vld [vmem:[#allocation4 + $0x5c0] sm:$0xff]
        %v620 = vld [vmem:[#allocation4 + $0x5c8] sm:$0xff]
        %v621 = vld [vmem:[#allocation4 + $0x5d0] sm:$0xff]
        %v622 = vld [vmem:[#allocation4 + $0x5d8] sm:$0xff]
        %v623 = vld [vmem:[#allocation4 + $0x5e0] sm:$0xff]
        %v624 = vld [vmem:[#allocation4 + $0x5e8] sm:$0xff]
        %v625 = vld [vmem:[#allocation4 + $0x5f0] sm:$0xff]
        %v626 = vld [vmem:[#allocation4 + $0x5f8] sm:$0xff]
        %v627 = vld [vmem:[#allocation4 + $0x600] sm:$0xff]
        %v628 = vld [vmem:[#allocation4 + $0x608] sm:$0xff]
        %v629 = vld [vmem:[#allocation4 + $0x610] sm:$0xff]
        %v630 = vld [vmem:[#allocation4 + $0x618] sm:$0xff]
        %v631 = vld [vmem:[#allocation4 + $0x620] sm:$0xff]
        %v632 = vld [vmem:[#allocation4 + $0x628] sm:$0xff]
        %v633 = vld [vmem:[#allocation4 + $0x630] sm:$0xff]
        %v634 = vld [vmem:[#allocation4 + $0x638] sm:$0xff]
        %v635 = vld [vmem:[#allocation4 + $0x640] sm:$0xff]
        %v636 = vld [vmem:[#allocation4 + $0x648] sm:$0xff]
        %v637 = vld [vmem:[#allocation4 + $0x650] sm:$0xff]
        %v638 = vld [vmem:[#allocation4 + $0x658] sm:$0xff]
        %v639 = vld [vmem:[#allocation4 + $0x660] sm:$0xff]
        %v640 = vld [vmem:[#allocation4 + $0x668] sm:$0xff]
        %v641 = vld [vmem:[#allocation4 + $0x670] sm:$0xff]
        %v642 = vld [vmem:[#allocation4 + $0x678] sm:$0xff]
        %v643 = vld [vmem:[#allocation4 + $0x680] sm:$0xff]
        %v644 = vld [vmem:[#allocation4 + $0x688] sm:$0xff]
        %v645 = vld [vmem:[#allocation4 + $0x690] sm:$0xff]
        %v646 = vld [vmem:[#allocation4 + $0x698] sm:$0xff]
        %v647 = vld [vmem:[#allocation4 + $0x6a0] sm:$0xff]
        %v648 = vld [vmem:[#allocation4 + $0x6a8] sm:$0xff]
        %v649 = vld [vmem:[#allocation4 + $0x6b0] sm:$0xff]
        %v650 = vld [vmem:[#allocation4 + $0x6b8] sm:$0xff]
        %v651 = vld [vmem:[#allocation4 + $0x6c0] sm:$0xff]
        %v652 = vld [vmem:[#allocation4 + $0x6c8] sm:$0xff]
        %v653 = vld [vmem:[#allocation4 + $0x6d0] sm:$0xff]
        %v654 = vld [vmem:[#allocation4 + $0x6d8] sm:$0xff]
        %v655 = vld [vmem:[#allocation4 + $0x6e0] sm:$0xff]
        %v656 = vld [vmem:[#allocation4 + $0x6e8] sm:$0xff]
        %v657 = vld [vmem:[#allocation4 + $0x6f0] sm:$0xff]
        %v658 = vld [vmem:[#allocation4 + $0x6f8] sm:$0xff]
        %v659 = vld [vmem:[#allocation4 + $0x700] sm:$0xff]
        %v660 = vld [vmem:[#allocation4 + $0x708] sm:$0xff]
        %v661 = vld [vmem:[#allocation4 + $0x710] sm:$0xff]
        %v662 = vld [vmem:[#allocation4 + $0x718] sm:$0xff]
        %v663 = vld [vmem:[#allocation4 + $0x720] sm:$0xff]
        %v664 = vld [vmem:[#allocation4 + $0x728] sm:$0xff]
        %v665 = vld [vmem:[#allocation4 + $0x730] sm:$0xff]
        %v666 = vld [vmem:[#allocation4 + $0x738] sm:$0xff]
        %v667 = vld [vmem:[#allocation4 + $0x740] sm:$0xff]
        %v668 = vld [vmem:[#allocation4 + $0x748] sm:$0xff]
        %v669 = vld [vmem:[#allocation4 + $0x750] sm:$0xff]
        %v670 = vld [vmem:[#allocation4 + $0x758] sm:$0xff]
        %v671 = vld [vmem:[#allocation4 + $0x760] sm:$0xff]
        %v672 = vld [vmem:[#allocation4 + $0x768] sm:$0xff]
        %v673 = vld [vmem:[#allocation4 + $0x770] sm:$0xff]
        %v674 = vld [vmem:[#allocation4 + $0x778] sm:$0xff]
        %v675 = vld [vmem:[#allocation4 + $0x780] sm:$0xff]
        %v676 = vld [vmem:[#allocation4 + $0x788] sm:$0xff]
        %v677 = vld [vmem:[#allocation4 + $0x790] sm:$0xff]
        %v678 = vld [vmem:[#allocation4 + $0x798] sm:$0xff]
        %v679 = vld [vmem:[#allocation4 + $0x7a0] sm:$0xff]
        %v680 = vld [vmem:[#allocation4 + $0x7a8] sm:$0xff]
        %v681 = vld [vmem:[#allocation4 + $0x7b0] sm:$0xff]
        %v682 = vld [vmem:[#allocation4 + $0x7b8] sm:$0xff]
        %v683 = vld [vmem:[#allocation4 + $0x7c0] sm:$0xff]
        %v684 = vld [vmem:[#allocation4 + $0x7c8] sm:$0xff]
        %v685 = vld [vmem:[#allocation4 + $0x7d0] sm:$0xff]
        %v686 = vld [vmem:[#allocation4 + $0x7d8] sm:$0xff]
        %v687 = vld [vmem:[#allocation4 + $0x7e0] sm:$0xff]
        %v688 = vld [vmem:[#allocation4 + $0x7e8] sm:$0xff]
        %v689 = vld [vmem:[#allocation4 + $0x7f0] sm:$0xff]
        %v690 = vld [vmem:[#allocation4 + $0x7f8] sm:$0xff]
        %v691 = vpack.c.bf16 %v439, %v435
        %v692 = vpack.c.bf16 %v440, %v436
        %v693 = vpack.c.bf16 %v441, %v437
        %v694 = vpack.c.bf16 %v442, %v438
        %v695 = vpack.c.bf16 %v447, %v443
        %v696 = vpack.c.bf16 %v448, %v444
        %v697 = vpack.c.bf16 %v449, %v445
        %v698 = vpack.c.bf16 %v450, %v446
        %v699 = vpack.c.bf16 %v455, %v451
        %v700 = vpack.c.bf16 %v456, %v452
        %v701 = vpack.c.bf16 %v457, %v453
        %v702 = vpack.c.bf16 %v458, %v454
        %v703 = vpack.c.bf16 %v463, %v459
        %v704 = vpack.c.bf16 %v464, %v460
        %v705 = vpack.c.bf16 %v465, %v461
        %v706 = vpack.c.bf16 %v466, %v462
        %v707 = vpack.c.bf16 %v471, %v467
        %v708 = vpack.c.bf16 %v472, %v468
        %v709 = vpack.c.bf16 %v473, %v469
        %v710 = vpack.c.bf16 %v474, %v470
        %v711 = vpack.c.bf16 %v479, %v475
        %v712 = vpack.c.bf16 %v480, %v476
        %v713 = vpack.c.bf16 %v481, %v477
        %v714 = vpack.c.bf16 %v482, %v478
        %v715 = vpack.c.bf16 %v487, %v483
        %v716 = vpack.c.bf16 %v488, %v484
        %v717 = vpack.c.bf16 %v489, %v485
        %v718 = vpack.c.bf16 %v490, %v486
        %v719 = vpack.c.bf16 %v495, %v491
        %v720 = vpack.c.bf16 %v496, %v492
        %v721 = vpack.c.bf16 %v497, %v493
        %v722 = vpack.c.bf16 %v498, %v494
        %v723 = vpack.c.bf16 %v503, %v499
        %v724 = vpack.c.bf16 %v504, %v500
        %v725 = vpack.c.bf16 %v505, %v501
        %v726 = vpack.c.bf16 %v506, %v502
        %v727 = vpack.c.bf16 %v511, %v507
        %v728 = vpack.c.bf16 %v512, %v508
        %v729 = vpack.c.bf16 %v513, %v509
        %v730 = vpack.c.bf16 %v514, %v510
        %v731 = vpack.c.bf16 %v519, %v515
        %v732 = vpack.c.bf16 %v520, %v516
        %v733 = vpack.c.bf16 %v521, %v517
        %v734 = vpack.c.bf16 %v522, %v518
        %v735 = vpack.c.bf16 %v527, %v523
        %v736 = vpack.c.bf16 %v528, %v524
        %v737 = vpack.c.bf16 %v529, %v525
        %v738 = vpack.c.bf16 %v530, %v526
        %v739 = vpack.c.bf16 %v535, %v531
        %v740 = vpack.c.bf16 %v536, %v532
        %v741 = vpack.c.bf16 %v537, %v533
        %v742 = vpack.c.bf16 %v538, %v534
        %v743 = vpack.c.bf16 %v543, %v539
        %v744 = vpack.c.bf16 %v544, %v540
        %v745 = vpack.c.bf16 %v545, %v541
        %v746 = vpack.c.bf16 %v546, %v542
        %v747 = vpack.c.bf16 %v551, %v547
        %v748 = vpack.c.bf16 %v552, %v548
        %v749 = vpack.c.bf16 %v553, %v549
        %v750 = vpack.c.bf16 %v554, %v550
        %v751 = vpack.c.bf16 %v559, %v555
        %v752 = vpack.c.bf16 %v560, %v556
        %v753 = vpack.c.bf16 %v561, %v557
        %v754 = vpack.c.bf16 %v562, %v558
        %v755 = vpack.c.bf16 %v567, %v563
        %v756 = vpack.c.bf16 %v568, %v564
        %v757 = vpack.c.bf16 %v569, %v565
        %v758 = vpack.c.bf16 %v570, %v566
        %v759 = vpack.c.bf16 %v575, %v571
        %v760 = vpack.c.bf16 %v576, %v572
        %v761 = vpack.c.bf16 %v577, %v573
        %v762 = vpack.c.bf16 %v578, %v574
        %v763 = vpack.c.bf16 %v583, %v579
        %v764 = vpack.c.bf16 %v584, %v580
        %v765 = vpack.c.bf16 %v585, %v581
        %v766 = vpack.c.bf16 %v586, %v582
        %v767 = vpack.c.bf16 %v591, %v587
        %v768 = vpack.c.bf16 %v592, %v588
        %v769 = vpack.c.bf16 %v593, %v589
        %v770 = vpack.c.bf16 %v594, %v590
        %v771 = vpack.c.bf16 %v599, %v595
        %v772 = vpack.c.bf16 %v600, %v596
        %v773 = vpack.c.bf16 %v601, %v597
        %v774 = vpack.c.bf16 %v602, %v598
        %v775 = vpack.c.bf16 %v607, %v603
        %v776 = vpack.c.bf16 %v608, %v604
        %v777 = vpack.c.bf16 %v609, %v605
        %v778 = vpack.c.bf16 %v610, %v606
        %v779 = vpack.c.bf16 %v615, %v611
        %v780 = vpack.c.bf16 %v616, %v612
        %v781 = vpack.c.bf16 %v617, %v613
        %v782 = vpack.c.bf16 %v618, %v614
        %v783 = vpack.c.bf16 %v623, %v619
        %v784 = vpack.c.bf16 %v624, %v620
        %v785 = vpack.c.bf16 %v625, %v621
        %v786 = vpack.c.bf16 %v626, %v622
        %v787 = vpack.c.bf16 %v631, %v627
        %v788 = vpack.c.bf16 %v632, %v628
        %v789 = vpack.c.bf16 %v633, %v629
        %v790 = vpack.c.bf16 %v634, %v630
        %v791 = vpack.c.bf16 %v639, %v635
        %v792 = vpack.c.bf16 %v640, %v636
        %v793 = vpack.c.bf16 %v641, %v637
        %v794 = vpack.c.bf16 %v642, %v638
        %v795 = vpack.c.bf16 %v647, %v643
        %v796 = vpack.c.bf16 %v648, %v644
        %v797 = vpack.c.bf16 %v649, %v645
        %v798 = vpack.c.bf16 %v650, %v646
        %v799 = vpack.c.bf16 %v655, %v651
        %v800 = vpack.c.bf16 %v656, %v652
        %v801 = vpack.c.bf16 %v657, %v653
        %v802 = vpack.c.bf16 %v658, %v654
        %v803 = vpack.c.bf16 %v663, %v659
        %v804 = vpack.c.bf16 %v664, %v660
        %v805 = vpack.c.bf16 %v665, %v661
        %v806 = vpack.c.bf16 %v666, %v662
        %v807 = vpack.c.bf16 %v671, %v667
        %v808 = vpack.c.bf16 %v672, %v668
        %v809 = vpack.c.bf16 %v673, %v669
        %v810 = vpack.c.bf16 %v674, %v670
        %v811 = vpack.c.bf16 %v679, %v675
        %v812 = vpack.c.bf16 %v680, %v676
        %v813 = vpack.c.bf16 %v681, %v677
        %v814 = vpack.c.bf16 %v682, %v678
        %v815 = vpack.c.bf16 %v687, %v683
        %v816 = vpack.c.bf16 %v688, %v684
        %v817 = vpack.c.bf16 %v689, %v685
        %v818 = vpack.c.bf16 %v690, %v686
        %v819 = vld [vmem:[#allocation7] sm:$0xf]
        %v820 = vld [vmem:[#allocation7 + $0x4] sm:$0xf]
        %v821 = vld [vmem:[#allocation7 + $0x8] sm:$0xf]
        %v822 = vld [vmem:[#allocation7 + $0xc] sm:$0xf]
        %v823 = vld [vmem:[#allocation7 + $0x10] sm:$0xf]
        %v824 = vld [vmem:[#allocation7 + $0x14] sm:$0xf]
        %v825 = vld [vmem:[#allocation7 + $0x18] sm:$0xf]
        %v826 = vld [vmem:[#allocation7 + $0x1c] sm:$0xf]
        %v827 = vld [vmem:[#allocation7 + $0x20] sm:$0xf]
        %v828 = vld [vmem:[#allocation7 + $0x24] sm:$0xf]
        %v829 = vld [vmem:[#allocation7 + $0x28] sm:$0xf]
        %v830 = vld [vmem:[#allocation7 + $0x2c] sm:$0xf]
        %v831 = vld [vmem:[#allocation7 + $0x30] sm:$0xf]
        %v832 = vld [vmem:[#allocation7 + $0x34] sm:$0xf]
        %v833 = vld [vmem:[#allocation7 + $0x38] sm:$0xf]
        %v834 = vld [vmem:[#allocation7 + $0x3c] sm:$0xf]
        %v835 = vld [vmem:[#allocation7 + $0x40] sm:$0xf]
        %v836 = vld [vmem:[#allocation7 + $0x44] sm:$0xf]
        %v837 = vld [vmem:[#allocation7 + $0x48] sm:$0xf]
        %v838 = vld [vmem:[#allocation7 + $0x4c] sm:$0xf]
        %v839 = vld [vmem:[#allocation7 + $0x50] sm:$0xf]
        %v840 = vld [vmem:[#allocation7 + $0x54] sm:$0xf]
        %v841 = vld [vmem:[#allocation7 + $0x58] sm:$0xf]
        %v842 = vld [vmem:[#allocation7 + $0x5c] sm:$0xf]
        %v843 = vld [vmem:[#allocation7 + $0x60] sm:$0xf]
        %v844 = vld [vmem:[#allocation7 + $0x64] sm:$0xf]
        %v845 = vld [vmem:[#allocation7 + $0x68] sm:$0xf]
        %v846 = vld [vmem:[#allocation7 + $0x6c] sm:$0xf]
        %v847 = vld [vmem:[#allocation7 + $0x70] sm:$0xf]
        %v848 = vld [vmem:[#allocation7 + $0x74] sm:$0xf]
        %v849 = vld [vmem:[#allocation7 + $0x78] sm:$0xf]
        %v850 = vld [vmem:[#allocation7 + $0x7c] sm:$0xf]
        %v851 = vld [vmem:[#allocation7 + $0x80] sm:$0xf]
        %v852 = vld [vmem:[#allocation7 + $0x84] sm:$0xf]
        %v853 = vld [vmem:[#allocation7 + $0x88] sm:$0xf]
        %v854 = vld [vmem:[#allocation7 + $0x8c] sm:$0xf]
        %v855 = vld [vmem:[#allocation7 + $0x90] sm:$0xf]
        %v856 = vld [vmem:[#allocation7 + $0x94] sm:$0xf]
        %v857 = vld [vmem:[#allocation7 + $0x98] sm:$0xf]
        %v858 = vld [vmem:[#allocation7 + $0x9c] sm:$0xf]
        %v859 = vld [vmem:[#allocation7 + $0xa0] sm:$0xf]
        %v860 = vld [vmem:[#allocation7 + $0xa4] sm:$0xf]
        %v861 = vld [vmem:[#allocation7 + $0xa8] sm:$0xf]
        %v862 = vld [vmem:[#allocation7 + $0xac] sm:$0xf]
        %v863 = vld [vmem:[#allocation7 + $0xb0] sm:$0xf]
        %v864 = vld [vmem:[#allocation7 + $0xb4] sm:$0xf]
        %v865 = vld [vmem:[#allocation7 + $0xb8] sm:$0xf]
        %v866 = vld [vmem:[#allocation7 + $0xbc] sm:$0xf]
        %v867 = vld [vmem:[#allocation7 + $0xc0] sm:$0xf]
        %v868 = vld [vmem:[#allocation7 + $0xc4] sm:$0xf]
        %v869 = vld [vmem:[#allocation7 + $0xc8] sm:$0xf]
        %v870 = vld [vmem:[#allocation7 + $0xcc] sm:$0xf]
        %v871 = vld [vmem:[#allocation7 + $0xd0] sm:$0xf]
        %v872 = vld [vmem:[#allocation7 + $0xd4] sm:$0xf]
        %v873 = vld [vmem:[#allocation7 + $0xd8] sm:$0xf]
        %v874 = vld [vmem:[#allocation7 + $0xdc] sm:$0xf]
        %v875 = vld [vmem:[#allocation7 + $0xe0] sm:$0xf]
        %v876 = vld [vmem:[#allocation7 + $0xe4] sm:$0xf]
        %v877 = vld [vmem:[#allocation7 + $0xe8] sm:$0xf]
        %v878 = vld [vmem:[#allocation7 + $0xec] sm:$0xf]
        %v879 = vld [vmem:[#allocation7 + $0xf0] sm:$0xf]
        %v880 = vld [vmem:[#allocation7 + $0xf4] sm:$0xf]
        %v881 = vld [vmem:[#allocation7 + $0xf8] sm:$0xf]
        %v882 = vld [vmem:[#allocation7 + $0xfc] sm:$0xf]
        %v883 = vld [vmem:[%s2] sm:$0x1]
        %v885 = vlaneseq
        %v886 = vshrl.u32 %v885, 7
        %v887 = vsub.s32 0, %v886
        %v888 = vrot.slane %v883, %v887
        %v954 = vunpack.c.l.b16 %v819
        %v955 = vunpack.c.l.b16 %v820
        %v956 = vunpack.c.l.b16 %v821
        %v957 = vunpack.c.l.b16 %v822
        %v958 = vunpack.c.l.b16 %v823
        %v959 = vunpack.c.l.b16 %v824
        %v960 = vunpack.c.l.b16 %v825
        %v961 = vunpack.c.l.b16 %v826
        %v962 = vunpack.c.l.b16 %v827
        %v963 = vunpack.c.l.b16 %v828
        %v964 = vunpack.c.l.b16 %v829
        %v965 = vunpack.c.l.b16 %v830
        %v966 = vunpack.c.l.b16 %v831
        %v967 = vunpack.c.l.b16 %v832
        %v968 = vunpack.c.l.b16 %v833
        %v969 = vunpack.c.l.b16 %v834
        %v970 = vunpack.c.l.b16 %v835
        %v971 = vunpack.c.l.b16 %v836
        %v972 = vunpack.c.l.b16 %v837
        %v973 = vunpack.c.l.b16 %v838
        %v974 = vunpack.c.l.b16 %v839
        %v975 = vunpack.c.l.b16 %v840
        %v976 = vunpack.c.l.b16 %v841
        %v977 = vunpack.c.l.b16 %v842
        %v978 = vunpack.c.l.b16 %v843
        %v979 = vunpack.c.l.b16 %v844
        %v980 = vunpack.c.l.b16 %v845
        %v981 = vunpack.c.l.b16 %v846
        %v982 = vunpack.c.l.b16 %v847
        %v983 = vunpack.c.l.b16 %v848
        %v984 = vunpack.c.l.b16 %v849
        %v985 = vunpack.c.l.b16 %v850
        %v986 = vunpack.c.l.b16 %v851
        %v987 = vunpack.c.l.b16 %v852
        %v988 = vunpack.c.l.b16 %v853
        %v989 = vunpack.c.l.b16 %v854
        %v990 = vunpack.c.l.b16 %v855
        %v991 = vunpack.c.l.b16 %v856
        %v992 = vunpack.c.l.b16 %v857
        %v993 = vunpack.c.l.b16 %v858
        %v994 = vunpack.c.l.b16 %v859
        %v995 = vunpack.c.l.b16 %v860
        %v996 = vunpack.c.l.b16 %v861
        %v997 = vunpack.c.l.b16 %v862
        %v998 = vunpack.c.l.b16 %v863
        %v999 = vunpack.c.l.b16 %v864
        %v1000 = vunpack.c.l.b16 %v865
        %v1001 = vunpack.c.l.b16 %v866
        %v1002 = vunpack.c.l.b16 %v867
        %v1003 = vunpack.c.l.b16 %v868
        %v1004 = vunpack.c.l.b16 %v869
        %v1005 = vunpack.c.l.b16 %v870
        %v1006 = vunpack.c.l.b16 %v871
        %v1007 = vunpack.c.l.b16 %v872
        %v1008 = vunpack.c.l.b16 %v873
        %v1009 = vunpack.c.l.b16 %v874
        %v1010 = vunpack.c.l.b16 %v875
        %v1011 = vunpack.c.l.b16 %v876
        %v1012 = vunpack.c.l.b16 %v877
        %v1013 = vunpack.c.l.b16 %v878
        %v1014 = vunpack.c.l.b16 %v879
        %v1015 = vunpack.c.l.b16 %v880
        %v1016 = vunpack.c.l.b16 %v881
        %v1017 = vunpack.c.l.b16 %v882
        %v1018 = vpack.c.b16 %v955, %v954
        %v1019 = vpack.c.b16 %v957, %v956
        %v1020 = vpack.c.b16 %v959, %v958
        %v1021 = vpack.c.b16 %v961, %v960
        %v1022 = vpack.c.b16 %v963, %v962
        %v1023 = vpack.c.b16 %v965, %v964
        %v1024 = vpack.c.b16 %v967, %v966
        %v1025 = vpack.c.b16 %v969, %v968
        %v1026 = vpack.c.b16 %v971, %v970
        %v1027 = vpack.c.b16 %v973, %v972
        %v1028 = vpack.c.b16 %v975, %v974
        %v1029 = vpack.c.b16 %v977, %v976
        %v1030 = vpack.c.b16 %v979, %v978
        %v1031 = vpack.c.b16 %v981, %v980
        %v1032 = vpack.c.b16 %v983, %v982
        %v1033 = vpack.c.b16 %v985, %v984
        %v1034 = vpack.c.b16 %v987, %v986
        %v1035 = vpack.c.b16 %v989, %v988
        %v1036 = vpack.c.b16 %v991, %v990
        %v1037 = vpack.c.b16 %v993, %v992
        %v1038 = vpack.c.b16 %v995, %v994
        %v1039 = vpack.c.b16 %v997, %v996
        %v1040 = vpack.c.b16 %v999, %v998
        %v1041 = vpack.c.b16 %v1001, %v1000
        %v1042 = vpack.c.b16 %v1003, %v1002
        %v1043 = vpack.c.b16 %v1005, %v1004
        %v1044 = vpack.c.b16 %v1007, %v1006
        %v1045 = vpack.c.b16 %v1009, %v1008
        %v1046 = vpack.c.b16 %v1011, %v1010
        %v1047 = vpack.c.b16 %v1013, %v1012
        %v1048 = vpack.c.b16 %v1015, %v1014
        %v1049 = vpack.c.b16 %v1017, %v1016
        %1082 = vmatprep.subr.bf16.mxu0 0
        %1083 = vmatpush1.bf16.msra.mxu0 %v1018
        %1084 = vmatprep.subr.bf16.mxu0 0
        %1085 = vmatpush1.bf16.msra.mxu0 %v1019
        %1086 = vmatprep.subr.bf16.mxu0 0
        %1087 = vmatpush1.bf16.msra.mxu0 %v1020
        %1088 = vmatprep.subr.bf16.mxu0 0
        %1089 = vmatpush1.bf16.msra.mxu0 %v1021
        %1090 = vmatprep.subr.bf16.mxu0 0
        %1091 = vmatpush1.bf16.msra.mxu0 %v1022
        %1092 = vmatprep.subr.bf16.mxu0 0
        %1093 = vmatpush1.bf16.msra.mxu0 %v1023
        %1094 = vmatprep.subr.bf16.mxu0 0
        %1095 = vmatpush1.bf16.msra.mxu0 %v1024
        %1096 = vmatprep.subr.bf16.mxu0 0
        %1097 = vmatpush1.bf16.msra.mxu0 %v1025
        %1098 = vmatprep.subr.bf16.mxu0 0
        %1099 = vmatpush1.bf16.msra.mxu0 %v1026
        %1100 = vmatprep.subr.bf16.mxu0 0
        %1101 = vmatpush1.bf16.msra.mxu0 %v1027
        %1102 = vmatprep.subr.bf16.mxu0 0
        %1103 = vmatpush1.bf16.msra.mxu0 %v1028
        %1104 = vmatprep.subr.bf16.mxu0 0
        %1105 = vmatpush1.bf16.msra.mxu0 %v1029
        %1106 = vmatprep.subr.bf16.mxu0 0
        %1107 = vmatpush1.bf16.msra.mxu0 %v1030
        %1108 = vmatprep.subr.bf16.mxu0 0
        %1109 = vmatpush1.bf16.msra.mxu0 %v1031
        %1110 = vmatprep.subr.bf16.mxu0 0
        %1111 = vmatpush1.bf16.msra.mxu0 %v1032
        %1112 = vmatprep.subr.bf16.mxu0 0
        %1113 = vmatpush1.bf16.msra.mxu0 %v1033
        %1114 = vmatprep.mubr.bf16.mxu0 %v692
        %1115 = vmatmul.mubr.bf16.gmra.mrb[0].mxu0 %v691
        %v1116 = vpop.f32.mrb[0].mxu0
        %v1117 = vadd.f32 %v888, %v1116
        %v1118 = vpop.f32.mrb[0].mxu0
        %v1119 = vpop.f32.mrb[0].mxu0
        %v1120 = vadd.f32 %v888, %v1119
        %v1121 = vpop.f32.mrb[0].mxu0
        %1122 = vmatprep.mubr.bf16.mxu0 %v696
        %1123 = vmatmul.mubr.bf16.gmra.mrb[0].mxu0 %v695
        %v1124 = vpop.f32.mrb[0].mxu0
        %v1125 = vadd.f32 %v888, %v1124
        %v1126 = vpop.f32.mrb[0].mxu0
        %v1127 = vpop.f32.mrb[0].mxu0
        %v1128 = vadd.f32 %v888, %v1127
        %v1129 = vpop.f32.mrb[0].mxu0
        %1130 = vmatprep.mubr.bf16.mxu0 %v700
        %1131 = vmatmul.mubr.bf16.gmra.mrb[0].mxu0 %v699
        %v1132 = vpop.f32.mrb[0].mxu0
        %v1133 = vadd.f32 %v888, %v1132
        %v1134 = vpop.f32.mrb[0].mxu0
        %v1135 = vpop.f32.mrb[0].mxu0
        %v1136 = vadd.f32 %v888, %v1135
        %v1137 = vpop.f32.mrb[0].mxu0
        %1138 = vmatprep.mubr.bf16.mxu0 %v704
        %1139 = vmatmul.mubr.bf16.gmra.mrb[0].mxu0 %v703
        %v1140 = vpop.f32.mrb[0].mxu0
        %v1141 = vadd.f32 %v888, %v1140
        %v1142 = vpop.f32.mrb[0].mxu0
        %v1143 = vpop.f32.mrb[0].mxu0
        %v1144 = vadd.f32 %v888, %v1143
        %v1145 = vpop.f32.mrb[0].mxu0
        %1146 = vmatprep.mubr.bf16.mxu0 %v708
        %1147 = vmatmul.mubr.bf16.gmra.mrb[0].mxu0 %v707
        %v1148 = vpop.f32.mrb[0].mxu0
        %v1149 = vadd.f32 %v888, %v1148
        %v1150 = vpop.f32.mrb[0].mxu0
        %v1151 = vpop.f32.mrb[0].mxu0
        %v1152 = vadd.f32 %v888, %v1151
        %v1153 = vpop.f32.mrb[0].mxu0
        %1154 = vmatprep.mubr.bf16.mxu0 %v712
        %1155 = vmatmul.mubr.bf16.gmra.mrb[0].mxu0 %v711
        %v1156 = vpop.f32.mrb[0].mxu0
        %v1157 = vadd.f32 %v888, %v1156
        %v1158 = vpop.f32.mrb[0].mxu0
        %v1159 = vpop.f32.mrb[0].mxu0
        %v1160 = vadd.f32 %v888, %v1159
        %v1161 = vpop.f32.mrb[0].mxu0
        %1162 = vmatprep.mubr.bf16.mxu0 %v716
        %1163 = vmatmul.mubr.bf16.gmra.mrb[0].mxu0 %v715
        %v1164 = vpop.f32.mrb[0].mxu0
        %v1165 = vadd.f32 %v888, %v1164
        %v1166 = vpop.f32.mrb[0].mxu0
        %v1167 = vpop.f32.mrb[0].mxu0
        %v1168 = vadd.f32 %v888, %v1167
        %v1169 = vpop.f32.mrb[0].mxu0
        %1170 = vmatprep.mubr.bf16.mxu0 %v720
        %1171 = vmatmul.mubr.bf16.gmra.mrb[0].mxu0 %v719
        %v1172 = vpop.f32.mrb[0].mxu0
        %v1173 = vadd.f32 %v888, %v1172
        %v1174 = vpop.f32.mrb[0].mxu0
        %v1175 = vpop.f32.mrb[0].mxu0
        %v1176 = vadd.f32 %v888, %v1175
        %v1177 = vpop.f32.mrb[0].mxu0
        %1178 = vmatprep.mubr.bf16.mxu0 %v724
        %1179 = vmatmul.mubr.bf16.gmra.mrb[0].mxu0 %v723
        %v1180 = vpop.f32.mrb[0].mxu0
        %v1181 = vadd.f32 %v888, %v1180
        %v1182 = vpop.f32.mrb[0].mxu0
        %v1183 = vpop.f32.mrb[0].mxu0
        %v1184 = vadd.f32 %v888, %v1183
        %v1185 = vpop.f32.mrb[0].mxu0
        %1186 = vmatprep.mubr.bf16.mxu0 %v728
        %1187 = vmatmul.mubr.bf16.gmra.mrb[0].mxu0 %v727
        %v1188 = vpop.f32.mrb[0].mxu0
        %v1189 = vadd.f32 %v888, %v1188
        %v1190 = vpop.f32.mrb[0].mxu0
        %v1191 = vpop.f32.mrb[0].mxu0
        %v1192 = vadd.f32 %v888, %v1191
        %v1193 = vpop.f32.mrb[0].mxu0
        %1194 = vmatprep.mubr.bf16.mxu0 %v732
        %1195 = vmatmul.mubr.bf16.gmra.mrb[0].mxu0 %v731
        %v1196 = vpop.f32.mrb[0].mxu0
        %v1197 = vadd.f32 %v888, %v1196
        %v1198 = vpop.f32.mrb[0].mxu0
        %v1199 = vpop.f32.mrb[0].mxu0
        %v1200 = vadd.f32 %v888, %v1199
        %v1201 = vpop.f32.mrb[0].mxu0
        %1202 = vmatprep.mubr.bf16.mxu0 %v736
        %1203 = vmatmul.mubr.bf16.gmra.mrb[0].mxu0 %v735
        %v1204 = vpop.f32.mrb[0].mxu0
        %v1205 = vadd.f32 %v888, %v1204
        %v1206 = vpop.f32.mrb[0].mxu0
        %v1207 = vpop.f32.mrb[0].mxu0
        %v1208 = vadd.f32 %v888, %v1207
        %v1209 = vpop.f32.mrb[0].mxu0
        %1210 = vmatprep.mubr.bf16.mxu0 %v740
        %1211 = vmatmul.mubr.bf16.gmra.mrb[0].mxu0 %v739
        %v1212 = vpop.f32.mrb[0].mxu0
        %v1213 = vadd.f32 %v888, %v1212
        %v1214 = vpop.f32.mrb[0].mxu0
        %v1215 = vpop.f32.mrb[0].mxu0
        %v1216 = vadd.f32 %v888, %v1215
        %v1217 = vpop.f32.mrb[0].mxu0
        %1218 = vmatprep.mubr.bf16.mxu0 %v744
        %1219 = vmatmul.mubr.bf16.gmra.mrb[0].mxu0 %v743
        %v1220 = vpop.f32.mrb[0].mxu0
        %v1221 = vadd.f32 %v888, %v1220
        %v1222 = vpop.f32.mrb[0].mxu0
        %v1223 = vpop.f32.mrb[0].mxu0
        %v1224 = vadd.f32 %v888, %v1223
        %v1225 = vpop.f32.mrb[0].mxu0
        %1226 = vmatprep.mubr.bf16.mxu0 %v748
        %1227 = vmatmul.mubr.bf16.gmra.mrb[0].mxu0 %v747
        %v1228 = vpop.f32.mrb[0].mxu0
        %v1229 = vadd.f32 %v888, %v1228
        %v1230 = vpop.f32.mrb[0].mxu0
        %v1231 = vpop.f32.mrb[0].mxu0
        %v1232 = vadd.f32 %v888, %v1231
        %v1233 = vpop.f32.mrb[0].mxu0
        %1234 = vmatprep.mubr.bf16.mxu0 %v752
        %1235 = vmatmul.mubr.bf16.gmra.mrb[0].mxu0 %v751
        %v1236 = vpop.f32.mrb[0].mxu0
        %v1237 = vadd.f32 %v888, %v1236
        %v1238 = vpop.f32.mrb[0].mxu0
        %v1239 = vpop.f32.mrb[0].mxu0
        %v1240 = vadd.f32 %v888, %v1239
        %v1241 = vpop.f32.mrb[0].mxu0
        %1242 = vmatprep.mubr.bf16.mxu0 %v756
        %1243 = vmatmul.mubr.bf16.gmra.mrb[0].mxu0 %v755
        %v1244 = vpop.f32.mrb[0].mxu0
        %v1245 = vadd.f32 %v888, %v1244
        %v1246 = vpop.f32.mrb[0].mxu0
        %v1247 = vpop.f32.mrb[0].mxu0
        %v1248 = vadd.f32 %v888, %v1247
        %v1249 = vpop.f32.mrb[0].mxu0
        %1250 = vmatprep.mubr.bf16.mxu0 %v760
        %1251 = vmatmul.mubr.bf16.gmra.mrb[0].mxu0 %v759
        %v1252 = vpop.f32.mrb[0].mxu0
        %v1253 = vadd.f32 %v888, %v1252
        %v1254 = vpop.f32.mrb[0].mxu0
        %v1255 = vpop.f32.mrb[0].mxu0
        %v1256 = vadd.f32 %v888, %v1255
        %v1257 = vpop.f32.mrb[0].mxu0
        %1258 = vmatprep.mubr.bf16.mxu0 %v764
        %1259 = vmatmul.mubr.bf16.gmra.mrb[0].mxu0 %v763
        %v1260 = vpop.f32.mrb[0].mxu0
        %v1261 = vadd.f32 %v888, %v1260
        %v1262 = vpop.f32.mrb[0].mxu0
        %v1263 = vpop.f32.mrb[0].mxu0
        %v1264 = vadd.f32 %v888, %v1263
        %v1265 = vpop.f32.mrb[0].mxu0
        %1266 = vmatprep.mubr.bf16.mxu0 %v768
        %1267 = vmatmul.mubr.bf16.gmra.mrb[0].mxu0 %v767
        %v1268 = vpop.f32.mrb[0].mxu0
        %v1269 = vadd.f32 %v888, %v1268
        %v1270 = vpop.f32.mrb[0].mxu0
        %v1271 = vpop.f32.mrb[0].mxu0
        %v1272 = vadd.f32 %v888, %v1271
        %v1273 = vpop.f32.mrb[0].mxu0
        %1274 = vmatprep.mubr.bf16.mxu0 %v772
        %1275 = vmatmul.mubr.bf16.gmra.mrb[0].mxu0 %v771
        %v1276 = vpop.f32.mrb[0].mxu0
        %v1277 = vadd.f32 %v888, %v1276
        %v1278 = vpop.f32.mrb[0].mxu0
        %v1279 = vpop.f32.mrb[0].mxu0
        %v1280 = vadd.f32 %v888, %v1279
        %v1281 = vpop.f32.mrb[0].mxu0
        %1282 = vmatprep.mubr.bf16.mxu0 %v776
        %1283 = vmatmul.mubr.bf16.gmra.mrb[0].mxu0 %v775
        %v1284 = vpop.f32.mrb[0].mxu0
        %v1285 = vadd.f32 %v888, %v1284
        %v1286 = vpop.f32.mrb[0].mxu0
        %v1287 = vpop.f32.mrb[0].mxu0
        %v1288 = vadd.f32 %v888, %v1287
        %v1289 = vpop.f32.mrb[0].mxu0
        %1290 = vmatprep.mubr.bf16.mxu0 %v780
        %1291 = vmatmul.mubr.bf16.gmra.mrb[0].mxu0 %v779
        %v1292 = vpop.f32.mrb[0].mxu0
        %v1293 = vadd.f32 %v888, %v1292
        %v1294 = vpop.f32.mrb[0].mxu0
        %v1295 = vpop.f32.mrb[0].mxu0
        %v1296 = vadd.f32 %v888, %v1295
        %v1297 = vpop.f32.mrb[0].mxu0
        %1298 = vmatprep.mubr.bf16.mxu0 %v784
        %1299 = vmatmul.mubr.bf16.gmra.mrb[0].mxu0 %v783
        %v1300 = vpop.f32.mrb[0].mxu0
        %v1301 = vadd.f32 %v888, %v1300
        %v1302 = vpop.f32.mrb[0].mxu0
        %v1303 = vpop.f32.mrb[0].mxu0
        %v1304 = vadd.f32 %v888, %v1303
        %v1305 = vpop.f32.mrb[0].mxu0
        %1306 = vmatprep.mubr.bf16.mxu0 %v788
        %1307 = vmatmul.mubr.bf16.gmra.mrb[0].mxu0 %v787
        %v1308 = vpop.f32.mrb[0].mxu0
        %v1309 = vadd.f32 %v888, %v1308
        %v1310 = vpop.f32.mrb[0].mxu0
        %v1311 = vpop.f32.mrb[0].mxu0
        %v1312 = vadd.f32 %v888, %v1311
        %v1313 = vpop.f32.mrb[0].mxu0
        %1314 = vmatprep.mubr.bf16.mxu0 %v792
        %1315 = vmatmul.mubr.bf16.gmra.mrb[0].mxu0 %v791
        %v1316 = vpop.f32.mrb[0].mxu0
        %v1317 = vadd.f32 %v888, %v1316
        %v1318 = vpop.f32.mrb[0].mxu0
        %v1319 = vpop.f32.mrb[0].mxu0
        %v1320 = vadd.f32 %v888, %v1319
        %v1321 = vpop.f32.mrb[0].mxu0
        %1322 = vmatprep.mubr.bf16.mxu0 %v796
        %1323 = vmatmul.mubr.bf16.gmra.mrb[0].mxu0 %v795
        %v1324 = vpop.f32.mrb[0].mxu0
        %v1325 = vadd.f32 %v888, %v1324
        %v1326 = vpop.f32.mrb[0].mxu0
        %v1327 = vpop.f32.mrb[0].mxu0
        %v1328 = vadd.f32 %v888, %v1327
        %v1329 = vpop.f32.mrb[0].mxu0
        %1330 = vmatprep.mubr.bf16.mxu0 %v800
        %1331 = vmatmul.mubr.bf16.gmra.mrb[0].mxu0 %v799
        %v1332 = vpop.f32.mrb[0].mxu0
        %v1333 = vadd.f32 %v888, %v1332
        %v1334 = vpop.f32.mrb[0].mxu0
        %v1335 = vpop.f32.mrb[0].mxu0
        %v1336 = vadd.f32 %v888, %v1335
        %v1337 = vpop.f32.mrb[0].mxu0
        %1338 = vmatprep.mubr.bf16.mxu0 %v804
        %1339 = vmatmul.mubr.bf16.gmra.mrb[0].mxu0 %v803
        %v1340 = vpop.f32.mrb[0].mxu0
        %v1341 = vadd.f32 %v888, %v1340
        %v1342 = vpop.f32.mrb[0].mxu0
        %v1343 = vpop.f32.mrb[0].mxu0
        %v1344 = vadd.f32 %v888, %v1343
        %v1345 = vpop.f32.mrb[0].mxu0
        %1346 = vmatprep.mubr.bf16.mxu0 %v808
        %1347 = vmatmul.mubr.bf16.gmra.mrb[0].mxu0 %v807
        %v1348 = vpop.f32.mrb[0].mxu0
        %v1349 = vadd.f32 %v888, %v1348
        %v1350 = vpop.f32.mrb[0].mxu0
        %v1351 = vpop.f32.mrb[0].mxu0
        %v1352 = vadd.f32 %v888, %v1351
        %v1353 = vpop.f32.mrb[0].mxu0
        %1354 = vmatprep.mubr.bf16.mxu0 %v812
        %1355 = vmatmul.mubr.bf16.gmra.mrb[0].mxu0 %v811
        %v1356 = vpop.f32.mrb[0].mxu0
        %v1357 = vadd.f32 %v888, %v1356
        %v1358 = vpop.f32.mrb[0].mxu0
        %v1359 = vpop.f32.mrb[0].mxu0
        %v1360 = vadd.f32 %v888, %v1359
        %v1361 = vpop.f32.mrb[0].mxu0
        %1362 = vmatprep.mubr.bf16.mxu0 %v816
        %1363 = vmatmul.mubr.bf16.gmra.mrb[0].mxu0 %v815
        %v1364 = vpop.f32.mrb[0].mxu0
        %v1365 = vadd.f32 %v888, %v1364
        %v1366 = vpop.f32.mrb[0].mxu0
        %v1367 = vpop.f32.mrb[0].mxu0
        %v1368 = vadd.f32 %v888, %v1367
        %v1369 = vpop.f32.mrb[0].mxu0
        %1370 = vdwg.mxu0
        %1371 = vmatprep.subr.bf16.mxu0 0
        %1372 = vmatpush1.bf16.msra.mxu0 %v1034
        %1373 = vmatprep.subr.bf16.mxu0 0
        %1374 = vmatpush1.bf16.msra.mxu0 %v1035
        %1375 = vmatprep.subr.bf16.mxu0 0
        %1376 = vmatpush1.bf16.msra.mxu0 %v1036
        %1377 = vmatprep.subr.bf16.mxu0 0
        %1378 = vmatpush1.bf16.msra.mxu0 %v1037
        %1379 = vmatprep.subr.bf16.mxu0 0
        %1380 = vmatpush1.bf16.msra.mxu0 %v1038
        %1381 = vmatprep.subr.bf16.mxu0 0
        %1382 = vmatpush1.bf16.msra.mxu0 %v1039
        %1383 = vmatprep.subr.bf16.mxu0 0
        %1384 = vmatpush1.bf16.msra.mxu0 %v1040
        %1385 = vmatprep.subr.bf16.mxu0 0
        %1386 = vmatpush1.bf16.msra.mxu0 %v1041
        %1387 = vmatprep.subr.bf16.mxu0 0
        %1388 = vmatpush1.bf16.msra.mxu0 %v1042
        %1389 = vmatprep.subr.bf16.mxu0 0
        %1390 = vmatpush1.bf16.msra.mxu0 %v1043
        %1391 = vmatprep.subr.bf16.mxu0 0
        %1392 = vmatpush1.bf16.msra.mxu0 %v1044
        %1393 = vmatprep.subr.bf16.mxu0 0
        %1394 = vmatpush1.bf16.msra.mxu0 %v1045
        %1395 = vmatprep.subr.bf16.mxu0 0
        %1396 = vmatpush1.bf16.msra.mxu0 %v1046
        %1397 = vmatprep.subr.bf16.mxu0 0
        %1398 = vmatpush1.bf16.msra.mxu0 %v1047
        %1399 = vmatprep.subr.bf16.mxu0 0
        %1400 = vmatpush1.bf16.msra.mxu0 %v1048
        %1401 = vmatprep.subr.bf16.mxu0 0
        %1402 = vmatpush1.bf16.msra.mxu0 %v1049
        %1403 = vmatprep.mubr.bf16.mxu0 %v694
        %1404 = vmatmul.mubr.bf16.gmra.mrb[0].mxu0 %v693
        %v1405 = vpop.f32.mrb[0].mxu0
        %v1406 = vadd.f32 %v1117, %v1405
        %v1407 = vpop.f32.mrb[0].mxu0
        %v1408 = vpop.f32.mrb[0].mxu0
        %v1409 = vadd.f32 %v1120, %v1408
        %v1410 = vpop.f32.mrb[0].mxu0
        %1411 = vmatprep.mubr.bf16.mxu0 %v698
        %1412 = vmatmul.mubr.bf16.gmra.mrb[0].mxu0 %v697
        %v1413 = vpop.f32.mrb[0].mxu0
        %v1414 = vadd.f32 %v1125, %v1413
        %v1415 = vpop.f32.mrb[0].mxu0
        %v1416 = vpop.f32.mrb[0].mxu0
        %v1417 = vadd.f32 %v1128, %v1416
        %v1418 = vpop.f32.mrb[0].mxu0
        %1419 = vmatprep.mubr.bf16.mxu0 %v702
        %1420 = vmatmul.mubr.bf16.gmra.mrb[0].mxu0 %v701
        %v1421 = vpop.f32.mrb[0].mxu0
        %v1422 = vadd.f32 %v1133, %v1421
        %v1423 = vpop.f32.mrb[0].mxu0
        %v1424 = vpop.f32.mrb[0].mxu0
        %v1425 = vadd.f32 %v1136, %v1424
        %v1426 = vpop.f32.mrb[0].mxu0
        %1427 = vmatprep.mubr.bf16.mxu0 %v706
        %1428 = vmatmul.mubr.bf16.gmra.mrb[0].mxu0 %v705
        %v1429 = vpop.f32.mrb[0].mxu0
        %v1430 = vadd.f32 %v1141, %v1429
        %v1431 = vpop.f32.mrb[0].mxu0
        %v1432 = vpop.f32.mrb[0].mxu0
        %v1433 = vadd.f32 %v1144, %v1432
        %v1434 = vpop.f32.mrb[0].mxu0
        %1435 = vmatprep.mubr.bf16.mxu0 %v710
        %1436 = vmatmul.mubr.bf16.gmra.mrb[0].mxu0 %v709
        %v1437 = vpop.f32.mrb[0].mxu0
        %v1438 = vadd.f32 %v1149, %v1437
        %v1439 = vpop.f32.mrb[0].mxu0
        %v1440 = vpop.f32.mrb[0].mxu0
        %v1441 = vadd.f32 %v1152, %v1440
        %v1442 = vpop.f32.mrb[0].mxu0
        %1443 = vmatprep.mubr.bf16.mxu0 %v714
        %1444 = vmatmul.mubr.bf16.gmra.mrb[0].mxu0 %v713
        %v1445 = vpop.f32.mrb[0].mxu0
        %v1446 = vadd.f32 %v1157, %v1445
        %v1447 = vpop.f32.mrb[0].mxu0
        %v1448 = vpop.f32.mrb[0].mxu0
        %v1449 = vadd.f32 %v1160, %v1448
        %v1450 = vpop.f32.mrb[0].mxu0
        %1451 = vmatprep.mubr.bf16.mxu0 %v718
        %1452 = vmatmul.mubr.bf16.gmra.mrb[0].mxu0 %v717
        %v1453 = vpop.f32.mrb[0].mxu0
        %v1454 = vadd.f32 %v1165, %v1453
        %v1455 = vpop.f32.mrb[0].mxu0
        %v1456 = vpop.f32.mrb[0].mxu0
        %v1457 = vadd.f32 %v1168, %v1456
        %v1458 = vpop.f32.mrb[0].mxu0
        %1459 = vmatprep.mubr.bf16.mxu0 %v722
        %1460 = vmatmul.mubr.bf16.gmra.mrb[0].mxu0 %v721
        %v1461 = vpop.f32.mrb[0].mxu0
        %v1462 = vadd.f32 %v1173, %v1461
        %v1463 = vpop.f32.mrb[0].mxu0
        %v1464 = vpop.f32.mrb[0].mxu0
        %v1465 = vadd.f32 %v1176, %v1464
        %v1466 = vpop.f32.mrb[0].mxu0
        %1467 = vmatprep.mubr.bf16.mxu0 %v726
        %1468 = vmatmul.mubr.bf16.gmra.mrb[0].mxu0 %v725
        %v1469 = vpop.f32.mrb[0].mxu0
        %v1470 = vadd.f32 %v1181, %v1469
        %v1471 = vpop.f32.mrb[0].mxu0
        %v1472 = vpop.f32.mrb[0].mxu0
        %v1473 = vadd.f32 %v1184, %v1472
        %v1474 = vpop.f32.mrb[0].mxu0
        %1475 = vmatprep.mubr.bf16.mxu0 %v730
        %1476 = vmatmul.mubr.bf16.gmra.mrb[0].mxu0 %v729
        %v1477 = vpop.f32.mrb[0].mxu0
        %v1478 = vadd.f32 %v1189, %v1477
        %v1479 = vpop.f32.mrb[0].mxu0
        %v1480 = vpop.f32.mrb[0].mxu0
        %v1481 = vadd.f32 %v1192, %v1480
        %v1482 = vpop.f32.mrb[0].mxu0
        %1483 = vmatprep.mubr.bf16.mxu0 %v734
        %1484 = vmatmul.mubr.bf16.gmra.mrb[0].mxu0 %v733
        %v1485 = vpop.f32.mrb[0].mxu0
        %v1486 = vadd.f32 %v1197, %v1485
        %v1487 = vpop.f32.mrb[0].mxu0
        %v1488 = vpop.f32.mrb[0].mxu0
        %v1489 = vadd.f32 %v1200, %v1488
        %v1490 = vpop.f32.mrb[0].mxu0
        %1491 = vmatprep.mubr.bf16.mxu0 %v738
        %1492 = vmatmul.mubr.bf16.gmra.mrb[0].mxu0 %v737
        %v1493 = vpop.f32.mrb[0].mxu0
        %v1494 = vadd.f32 %v1205, %v1493
        %v1495 = vpop.f32.mrb[0].mxu0
        %v1496 = vpop.f32.mrb[0].mxu0
        %v1497 = vadd.f32 %v1208, %v1496
        %v1498 = vpop.f32.mrb[0].mxu0
        %1499 = vmatprep.mubr.bf16.mxu0 %v742
        %1500 = vmatmul.mubr.bf16.gmra.mrb[0].mxu0 %v741
        %v1501 = vpop.f32.mrb[0].mxu0
        %v1502 = vadd.f32 %v1213, %v1501
        %v1503 = vpop.f32.mrb[0].mxu0
        %v1504 = vpop.f32.mrb[0].mxu0
        %v1505 = vadd.f32 %v1216, %v1504
        %v1506 = vpop.f32.mrb[0].mxu0
        %1507 = vmatprep.mubr.bf16.mxu0 %v746
        %1508 = vmatmul.mubr.bf16.gmra.mrb[0].mxu0 %v745
        %v1509 = vpop.f32.mrb[0].mxu0
        %v1510 = vadd.f32 %v1221, %v1509
        %v1511 = vpop.f32.mrb[0].mxu0
        %v1512 = vpop.f32.mrb[0].mxu0
        %v1513 = vadd.f32 %v1224, %v1512
        %v1514 = vpop.f32.mrb[0].mxu0
        %1515 = vmatprep.mubr.bf16.mxu0 %v750
        %1516 = vmatmul.mubr.bf16.gmra.mrb[0].mxu0 %v749
        %v1517 = vpop.f32.mrb[0].mxu0
        %v1518 = vadd.f32 %v1229, %v1517
        %v1519 = vpop.f32.mrb[0].mxu0
        %v1520 = vpop.f32.mrb[0].mxu0
        %v1521 = vadd.f32 %v1232, %v1520
        %v1522 = vpop.f32.mrb[0].mxu0
        %1523 = vmatprep.mubr.bf16.mxu0 %v754
        %1524 = vmatmul.mubr.bf16.gmra.mrb[0].mxu0 %v753
        %v1525 = vpop.f32.mrb[0].mxu0
        %v1526 = vadd.f32 %v1237, %v1525
        %v1527 = vpop.f32.mrb[0].mxu0
        %v1528 = vpop.f32.mrb[0].mxu0
        %v1529 = vadd.f32 %v1240, %v1528
        %v1530 = vpop.f32.mrb[0].mxu0
        %1531 = vmatprep.mubr.bf16.mxu0 %v758
        %1532 = vmatmul.mubr.bf16.gmra.mrb[0].mxu0 %v757
        %v1533 = vpop.f32.mrb[0].mxu0
        %v1534 = vadd.f32 %v1245, %v1533
        %v1535 = vpop.f32.mrb[0].mxu0
        %v1536 = vpop.f32.mrb[0].mxu0
        %v1537 = vadd.f32 %v1248, %v1536
        %v1538 = vpop.f32.mrb[0].mxu0
        %1539 = vmatprep.mubr.bf16.mxu0 %v762
        %1540 = vmatmul.mubr.bf16.gmra.mrb[0].mxu0 %v761
        %v1541 = vpop.f32.mrb[0].mxu0
        %v1542 = vadd.f32 %v1253, %v1541
        %v1543 = vpop.f32.mrb[0].mxu0
        %v1544 = vpop.f32.mrb[0].mxu0
        %v1545 = vadd.f32 %v1256, %v1544
        %v1546 = vpop.f32.mrb[0].mxu0
        %1547 = vmatprep.mubr.bf16.mxu0 %v766
        %1548 = vmatmul.mubr.bf16.gmra.mrb[0].mxu0 %v765
        %v1549 = vpop.f32.mrb[0].mxu0
        %v1550 = vadd.f32 %v1261, %v1549
        %v1551 = vpop.f32.mrb[0].mxu0
        %v1552 = vpop.f32.mrb[0].mxu0
        %v1553 = vadd.f32 %v1264, %v1552
        %v1554 = vpop.f32.mrb[0].mxu0
        %1555 = vmatprep.mubr.bf16.mxu0 %v770
        %1556 = vmatmul.mubr.bf16.gmra.mrb[0].mxu0 %v769
        %v1557 = vpop.f32.mrb[0].mxu0
        %v1558 = vadd.f32 %v1269, %v1557
        %v1559 = vpop.f32.mrb[0].mxu0
        %v1560 = vpop.f32.mrb[0].mxu0
        %v1561 = vadd.f32 %v1272, %v1560
        %v1562 = vpop.f32.mrb[0].mxu0
        %1563 = vmatprep.mubr.bf16.mxu0 %v774
        %1564 = vmatmul.mubr.bf16.gmra.mrb[0].mxu0 %v773
        %v1565 = vpop.f32.mrb[0].mxu0
        %v1566 = vadd.f32 %v1277, %v1565
        %v1567 = vpop.f32.mrb[0].mxu0
        %v1568 = vpop.f32.mrb[0].mxu0
        %v1569 = vadd.f32 %v1280, %v1568
        %v1570 = vpop.f32.mrb[0].mxu0
        %1571 = vmatprep.mubr.bf16.mxu0 %v778
        %1572 = vmatmul.mubr.bf16.gmra.mrb[0].mxu0 %v777
        %v1573 = vpop.f32.mrb[0].mxu0
        %v1574 = vadd.f32 %v1285, %v1573
        %v1575 = vpop.f32.mrb[0].mxu0
        %v1576 = vpop.f32.mrb[0].mxu0
        %v1577 = vadd.f32 %v1288, %v1576
        %v1578 = vpop.f32.mrb[0].mxu0
        %1579 = vmatprep.mubr.bf16.mxu0 %v782
        %1580 = vmatmul.mubr.bf16.gmra.mrb[0].mxu0 %v781
        %v1581 = vpop.f32.mrb[0].mxu0
        %v1582 = vadd.f32 %v1293, %v1581
        %v1583 = vpop.f32.mrb[0].mxu0
        %v1584 = vpop.f32.mrb[0].mxu0
        %v1585 = vadd.f32 %v1296, %v1584
        %v1586 = vpop.f32.mrb[0].mxu0
        %1587 = vmatprep.mubr.bf16.mxu0 %v786
        %1588 = vmatmul.mubr.bf16.gmra.mrb[0].mxu0 %v785
        %v1589 = vpop.f32.mrb[0].mxu0
        %v1590 = vadd.f32 %v1301, %v1589
        %v1591 = vpop.f32.mrb[0].mxu0
        %v1592 = vpop.f32.mrb[0].mxu0
        %v1593 = vadd.f32 %v1304, %v1592
        %v1594 = vpop.f32.mrb[0].mxu0
        %1595 = vmatprep.mubr.bf16.mxu0 %v790
        %1596 = vmatmul.mubr.bf16.gmra.mrb[0].mxu0 %v789
        %v1597 = vpop.f32.mrb[0].mxu0
        %v1598 = vadd.f32 %v1309, %v1597
        %v1599 = vpop.f32.mrb[0].mxu0
        %v1600 = vpop.f32.mrb[0].mxu0
        %v1601 = vadd.f32 %v1312, %v1600
        %v1602 = vpop.f32.mrb[0].mxu0
        %1603 = vmatprep.mubr.bf16.mxu0 %v794
        %1604 = vmatmul.mubr.bf16.gmra.mrb[0].mxu0 %v793
        %v1605 = vpop.f32.mrb[0].mxu0
        %v1606 = vadd.f32 %v1317, %v1605
        %v1607 = vpop.f32.mrb[0].mxu0
        %v1608 = vpop.f32.mrb[0].mxu0
        %v1609 = vadd.f32 %v1320, %v1608
        %v1610 = vpop.f32.mrb[0].mxu0
        %1611 = vmatprep.mubr.bf16.mxu0 %v798
        %1612 = vmatmul.mubr.bf16.gmra.mrb[0].mxu0 %v797
        %v1613 = vpop.f32.mrb[0].mxu0
        %v1614 = vadd.f32 %v1325, %v1613
        %v1615 = vpop.f32.mrb[0].mxu0
        %v1616 = vpop.f32.mrb[0].mxu0
        %v1617 = vadd.f32 %v1328, %v1616
        %v1618 = vpop.f32.mrb[0].mxu0
        %1619 = vmatprep.mubr.bf16.mxu0 %v802
        %1620 = vmatmul.mubr.bf16.gmra.mrb[0].mxu0 %v801
        %v1621 = vpop.f32.mrb[0].mxu0
        %v1622 = vadd.f32 %v1333, %v1621
        %v1623 = vpop.f32.mrb[0].mxu0
        %v1624 = vpop.f32.mrb[0].mxu0
        %v1625 = vadd.f32 %v1336, %v1624
        %v1626 = vpop.f32.mrb[0].mxu0
        %1627 = vmatprep.mubr.bf16.mxu0 %v806
        %1628 = vmatmul.mubr.bf16.gmra.mrb[0].mxu0 %v805
        %v1629 = vpop.f32.mrb[0].mxu0
        %v1630 = vadd.f32 %v1341, %v1629
        %v1631 = vpop.f32.mrb[0].mxu0
        %v1632 = vpop.f32.mrb[0].mxu0
        %v1633 = vadd.f32 %v1344, %v1632
        %v1634 = vpop.f32.mrb[0].mxu0
        %1635 = vmatprep.mubr.bf16.mxu0 %v810
        %1636 = vmatmul.mubr.bf16.gmra.mrb[0].mxu0 %v809
        %v1637 = vpop.f32.mrb[0].mxu0
        %v1638 = vadd.f32 %v1349, %v1637
        %v1639 = vpop.f32.mrb[0].mxu0
        %v1640 = vpop.f32.mrb[0].mxu0
        %v1641 = vadd.f32 %v1352, %v1640
        %v1642 = vpop.f32.mrb[0].mxu0
        %1643 = vmatprep.mubr.bf16.mxu0 %v814
        %1644 = vmatmul.mubr.bf16.gmra.mrb[0].mxu0 %v813
        %v1645 = vpop.f32.mrb[0].mxu0
        %v1646 = vadd.f32 %v1357, %v1645
        %v1647 = vpop.f32.mrb[0].mxu0
        %v1648 = vpop.f32.mrb[0].mxu0
        %v1649 = vadd.f32 %v1360, %v1648
        %v1650 = vpop.f32.mrb[0].mxu0
        %1651 = vmatprep.mubr.bf16.mxu0 %v818
        %1652 = vmatmul.mubr.bf16.gmra.mrb[0].mxu0 %v817
        %v1653 = vpop.f32.mrb[0].mxu0
        %v1654 = vadd.f32 %v1365, %v1653
        %v1655 = vpop.f32.mrb[0].mxu0
        %v1656 = vpop.f32.mrb[0].mxu0
        %v1657 = vadd.f32 %v1368, %v1656
        %v1658 = vpop.f32.mrb[0].mxu0
        %1659 = vdwg.mxu0
        %v1660 = vmax.f32 %v1406, 0.0
        %v1661 = vmax.f32 %v1409, 0.0
        %v1662 = vmax.f32 %v1414, 0.0
        %v1663 = vmax.f32 %v1417, 0.0
        %v1664 = vmax.f32 %v1422, 0.0
        %v1665 = vmax.f32 %v1425, 0.0
        %v1666 = vmax.f32 %v1430, 0.0
        %v1667 = vmax.f32 %v1433, 0.0
        %v1668 = vmax.f32 %v1438, 0.0
        %v1669 = vmax.f32 %v1441, 0.0
        %v1670 = vmax.f32 %v1446, 0.0
        %v1671 = vmax.f32 %v1449, 0.0
        %v1672 = vmax.f32 %v1454, 0.0
        %v1673 = vmax.f32 %v1457, 0.0
        %v1674 = vmax.f32 %v1462, 0.0
        %v1675 = vmax.f32 %v1465, 0.0
        %v1676 = vmax.f32 %v1470, 0.0
        %v1677 = vmax.f32 %v1473, 0.0
        %v1678 = vmax.f32 %v1478, 0.0
        %v1679 = vmax.f32 %v1481, 0.0
        %v1680 = vmax.f32 %v1486, 0.0
        %v1681 = vmax.f32 %v1489, 0.0
        %v1682 = vmax.f32 %v1494, 0.0
        %v1683 = vmax.f32 %v1497, 0.0
        %v1684 = vmax.f32 %v1502, 0.0
        %v1685 = vmax.f32 %v1505, 0.0
        %v1686 = vmax.f32 %v1510, 0.0
        %v1687 = vmax.f32 %v1513, 0.0
        %v1688 = vmax.f32 %v1518, 0.0
        %v1689 = vmax.f32 %v1521, 0.0
        %v1690 = vmax.f32 %v1526, 0.0
        %v1691 = vmax.f32 %v1529, 0.0
        %v1692 = vmax.f32 %v1534, 0.0
        %v1693 = vmax.f32 %v1537, 0.0
        %v1694 = vmax.f32 %v1542, 0.0
        %v1695 = vmax.f32 %v1545, 0.0
        %v1696 = vmax.f32 %v1550, 0.0
        %v1697 = vmax.f32 %v1553, 0.0
        %v1698 = vmax.f32 %v1558, 0.0
        %v1699 = vmax.f32 %v1561, 0.0
        %v1700 = vmax.f32 %v1566, 0.0
        %v1701 = vmax.f32 %v1569, 0.0
        %v1702 = vmax.f32 %v1574, 0.0
        %v1703 = vmax.f32 %v1577, 0.0
        %v1704 = vmax.f32 %v1582, 0.0
        %v1705 = vmax.f32 %v1585, 0.0
        %v1706 = vmax.f32 %v1590, 0.0
        %v1707 = vmax.f32 %v1593, 0.0
        %v1708 = vmax.f32 %v1598, 0.0
        %v1709 = vmax.f32 %v1601, 0.0
        %v1710 = vmax.f32 %v1606, 0.0
        %v1711 = vmax.f32 %v1609, 0.0
        %v1712 = vmax.f32 %v1614, 0.0
        %v1713 = vmax.f32 %v1617, 0.0
        %v1714 = vmax.f32 %v1622, 0.0
        %v1715 = vmax.f32 %v1625, 0.0
        %v1716 = vmax.f32 %v1630, 0.0
        %v1717 = vmax.f32 %v1633, 0.0
        %v1718 = vmax.f32 %v1638, 0.0
        %v1719 = vmax.f32 %v1641, 0.0
        %v1720 = vmax.f32 %v1646, 0.0
        %v1721 = vmax.f32 %v1649, 0.0
        %v1722 = vmax.f32 %v1654, 0.0
        %v1723 = vmax.f32 %v1657, 0.0
        %v1724 = vpack.c.bf16 %v1661, %v1660
        %v1725 = vpack.c.bf16 %v1663, %v1662
        %v1726 = vpack.c.bf16 %v1665, %v1664
        %v1727 = vpack.c.bf16 %v1667, %v1666
        %v1728 = vpack.c.bf16 %v1669, %v1668
        %v1729 = vpack.c.bf16 %v1671, %v1670
        %v1730 = vpack.c.bf16 %v1673, %v1672
        %v1731 = vpack.c.bf16 %v1675, %v1674
        %v1732 = vpack.c.bf16 %v1677, %v1676
        %v1733 = vpack.c.bf16 %v1679, %v1678
        %v1734 = vpack.c.bf16 %v1681, %v1680
        %v1735 = vpack.c.bf16 %v1683, %v1682
        %v1736 = vpack.c.bf16 %v1685, %v1684
        %v1737 = vpack.c.bf16 %v1687, %v1686
        %v1738 = vpack.c.bf16 %v1689, %v1688
        %v1739 = vpack.c.bf16 %v1691, %v1690
        %v1740 = vpack.c.bf16 %v1693, %v1692
        %v1741 = vpack.c.bf16 %v1695, %v1694
        %v1742 = vpack.c.bf16 %v1697, %v1696
        %v1743 = vpack.c.bf16 %v1699, %v1698
        %v1744 = vpack.c.bf16 %v1701, %v1700
        %v1745 = vpack.c.bf16 %v1703, %v1702
        %v1746 = vpack.c.bf16 %v1705, %v1704
        %v1747 = vpack.c.bf16 %v1707, %v1706
        %v1748 = vpack.c.bf16 %v1709, %v1708
        %v1749 = vpack.c.bf16 %v1711, %v1710
        %v1750 = vpack.c.bf16 %v1713, %v1712
        %v1751 = vpack.c.bf16 %v1715, %v1714
        %v1752 = vpack.c.bf16 %v1717, %v1716
        %v1753 = vpack.c.bf16 %v1719, %v1718
        %v1754 = vpack.c.bf16 %v1721, %v1720
        %v1755 = vpack.c.bf16 %v1723, %v1722
        %v1756 = vld [vmem:[%s3] sm:$0xf]
        %v1757 = vld [vmem:[%s3 + $0x4] sm:$0xf]
        %v1758 = vld [vmem:[%s3 + $0x8] sm:$0xf]
        %v1759 = vld [vmem:[%s3 + $0xc] sm:$0xf]
        %v1760 = vld [vmem:[%s3 + $0x10] sm:$0xf]
        %v1761 = vld [vmem:[%s3 + $0x14] sm:$0xf]
        %v1762 = vld [vmem:[%s3 + $0x18] sm:$0xf]
        %v1763 = vld [vmem:[%s3 + $0x1c] sm:$0xf]
        %v1764 = vld [vmem:[%s3 + $0x20] sm:$0xf]
        %v1765 = vld [vmem:[%s3 + $0x24] sm:$0xf]
        %v1766 = vld [vmem:[%s3 + $0x28] sm:$0xf]
        %v1767 = vld [vmem:[%s3 + $0x2c] sm:$0xf]
        %v1768 = vld [vmem:[%s3 + $0x30] sm:$0xf]
        %v1769 = vld [vmem:[%s3 + $0x34] sm:$0xf]
        %v1770 = vld [vmem:[%s3 + $0x38] sm:$0xf]
        %v1771 = vld [vmem:[%s3 + $0x3c] sm:$0xf]
        %v1772 = vld [vmem:[%s4] sm:$0x1]
        %v1774 = vlaneseq
        %v1775 = vshrl.u32 %v1774, 7
        %v1776 = vsub.s32 0, %v1775
        %v1777 = vrot.slane %v1772, %v1776
        %v1795 = vunpack.c.l.b16 %v1756
        %v1796 = vunpack.c.l.b16 %v1757
        %v1797 = vunpack.c.l.b16 %v1758
        %v1798 = vunpack.c.l.b16 %v1759
        %v1799 = vunpack.c.l.b16 %v1760
        %v1800 = vunpack.c.l.b16 %v1761
        %v1801 = vunpack.c.l.b16 %v1762
        %v1802 = vunpack.c.l.b16 %v1763
        %v1803 = vunpack.c.l.b16 %v1764
        %v1804 = vunpack.c.l.b16 %v1765
        %v1805 = vunpack.c.l.b16 %v1766
        %v1806 = vunpack.c.l.b16 %v1767
        %v1807 = vunpack.c.l.b16 %v1768
        %v1808 = vunpack.c.l.b16 %v1769
        %v1809 = vunpack.c.l.b16 %v1770
        %v1810 = vunpack.c.l.b16 %v1771
        %v1811 = vpack.c.b16 %v1796, %v1795
        %v1812 = vpack.c.b16 %v1798, %v1797
        %v1813 = vpack.c.b16 %v1800, %v1799
        %v1814 = vpack.c.b16 %v1802, %v1801
        %v1815 = vpack.c.b16 %v1804, %v1803
        %v1816 = vpack.c.b16 %v1806, %v1805
        %v1817 = vpack.c.b16 %v1808, %v1807
        %v1818 = vpack.c.b16 %v1810, %v1809
        %1827 = vmatprep.subr.bf16.mxu0 0
        %1828 = vmatpush1.bf16.msra.mxu0 %v1811
        %1829 = vmatprep.subr.bf16.mxu0 0
        %1830 = vmatpush1.bf16.msra.mxu0 %v1812
        %1831 = vmatprep.subr.bf16.mxu0 0
        %1832 = vmatpush1.bf16.msra.mxu0 %v1813
        %1833 = vmatprep.subr.bf16.mxu0 0
        %1834 = vmatpush1.bf16.msra.mxu0 %v1814
        %1835 = vmatprep.subr.bf16.mxu0 0
        %1836 = vmatpush1.bf16.msra.mxu0 %v1815
        %1837 = vmatprep.subr.bf16.mxu0 0
        %1838 = vmatpush1.bf16.msra.mxu0 %v1816
        %1839 = vmatprep.subr.bf16.mxu0 0
        %1840 = vmatpush1.bf16.msra.mxu0 %v1817
        %1841 = vmatprep.subr.bf16.mxu0 0
        %1842 = vmatpush1.bf16.msra.mxu0 %v1818
        %1843 = vmatprep.subr.bf16.mxu0 0
        %1844 = vmatpush1.bf16.msra.mxu0 0
        %1845 = vmatprep.subr.bf16.mxu0 0
        %1846 = vmatpush1.bf16.msra.mxu0 0
        %1847 = vmatprep.subr.bf16.mxu0 0
        %1848 = vmatpush1.bf16.msra.mxu0 0
        %1849 = vmatprep.subr.bf16.mxu0 0
        %1850 = vmatpush1.bf16.msra.mxu0 0
        %1851 = vmatprep.subr.bf16.mxu0 0
        %1852 = vmatpush1.bf16.msra.mxu0 0
        %1853 = vmatprep.subr.bf16.mxu0 0
        %1854 = vmatpush1.bf16.msra.mxu0 0
        %1855 = vmatprep.subr.bf16.mxu0 0
        %1856 = vmatpush1.bf16.msra.mxu0 0
        %1857 = vmatprep.subr.bf16.mxu0 0
        %1858 = vmatpush1.bf16.msra.mxu0 0
        %1859 = vmatprep.mubr.bf16.mxu0 0
        %1860 = vmatmul.mubr.bf16.gmra.mrb[0].mxu0 %v1724
        %v1861 = vpop.f32.mrb[0].mxu0
        %v1862 = vadd.f32 %v1777, %v1861
        %v1863 = vpop.f32.mrb[0].mxu0
        %v1864 = vpop.f32.mrb[0].mxu0
        %v1865 = vadd.f32 %v1777, %v1864
        %v1866 = vpop.f32.mrb[0].mxu0
        %1867 = vmatprep.mubr.bf16.mxu0 0
        %1868 = vmatmul.mubr.bf16.gmra.mrb[0].mxu0 %v1725
        %v1869 = vpop.f32.mrb[0].mxu0
        %v1870 = vadd.f32 %v1777, %v1869
        %v1871 = vpop.f32.mrb[0].mxu0
        %v1872 = vpop.f32.mrb[0].mxu0
        %v1873 = vadd.f32 %v1777, %v1872
        %v1874 = vpop.f32.mrb[0].mxu0
        %1875 = vmatprep.mubr.bf16.mxu0 0
        %1876 = vmatmul.mubr.bf16.gmra.mrb[0].mxu0 %v1726
        %v1877 = vpop.f32.mrb[0].mxu0
        %v1878 = vadd.f32 %v1777, %v1877
        %v1879 = vpop.f32.mrb[0].mxu0
        %v1880 = vpop.f32.mrb[0].mxu0
        %v1881 = vadd.f32 %v1777, %v1880
        %v1882 = vpop.f32.mrb[0].mxu0
        %1883 = vmatprep.mubr.bf16.mxu0 0
        %1884 = vmatmul.mubr.bf16.gmra.mrb[0].mxu0 %v1727
        %v1885 = vpop.f32.mrb[0].mxu0
        %v1886 = vadd.f32 %v1777, %v1885
        %v1887 = vpop.f32.mrb[0].mxu0
        %v1888 = vpop.f32.mrb[0].mxu0
        %v1889 = vadd.f32 %v1777, %v1888
        %v1890 = vpop.f32.mrb[0].mxu0
        %1891 = vmatprep.mubr.bf16.mxu0 0
        %1892 = vmatmul.mubr.bf16.gmra.mrb[0].mxu0 %v1728
        %v1893 = vpop.f32.mrb[0].mxu0
        %v1894 = vadd.f32 %v1777, %v1893
        %v1895 = vpop.f32.mrb[0].mxu0
        %v1896 = vpop.f32.mrb[0].mxu0
        %v1897 = vadd.f32 %v1777, %v1896
        %v1898 = vpop.f32.mrb[0].mxu0
        %1899 = vmatprep.mubr.bf16.mxu0 0
        %1900 = vmatmul.mubr.bf16.gmra.mrb[0].mxu0 %v1729
        %v1901 = vpop.f32.mrb[0].mxu0
        %v1902 = vadd.f32 %v1777, %v1901
        %v1903 = vpop.f32.mrb[0].mxu0
        %v1904 = vpop.f32.mrb[0].mxu0
        %v1905 = vadd.f32 %v1777, %v1904
        %v1906 = vpop.f32.mrb[0].mxu0
        %1907 = vmatprep.mubr.bf16.mxu0 0
        %1908 = vmatmul.mubr.bf16.gmra.mrb[0].mxu0 %v1730
        %v1909 = vpop.f32.mrb[0].mxu0
        %v1910 = vadd.f32 %v1777, %v1909
        %v1911 = vpop.f32.mrb[0].mxu0
        %v1912 = vpop.f32.mrb[0].mxu0
        %v1913 = vadd.f32 %v1777, %v1912
        %v1914 = vpop.f32.mrb[0].mxu0
        %1915 = vmatprep.mubr.bf16.mxu0 0
        %1916 = vmatmul.mubr.bf16.gmra.mrb[0].mxu0 %v1731
        %v1917 = vpop.f32.mrb[0].mxu0
        %v1918 = vadd.f32 %v1777, %v1917
        %v1919 = vpop.f32.mrb[0].mxu0
        %v1920 = vpop.f32.mrb[0].mxu0
        %v1921 = vadd.f32 %v1777, %v1920
        %v1922 = vpop.f32.mrb[0].mxu0
        %1923 = vmatprep.mubr.bf16.mxu0 0
        %1924 = vmatmul.mubr.bf16.gmra.mrb[0].mxu0 %v1732
        %v1925 = vpop.f32.mrb[0].mxu0
        %v1926 = vadd.f32 %v1777, %v1925
        %v1927 = vpop.f32.mrb[0].mxu0
        %v1928 = vpop.f32.mrb[0].mxu0
        %v1929 = vadd.f32 %v1777, %v1928
        %v1930 = vpop.f32.mrb[0].mxu0
        %1931 = vmatprep.mubr.bf16.mxu0 0
        %1932 = vmatmul.mubr.bf16.gmra.mrb[0].mxu0 %v1733
        %v1933 = vpop.f32.mrb[0].mxu0
        %v1934 = vadd.f32 %v1777, %v1933
        %v1935 = vpop.f32.mrb[0].mxu0
        %v1936 = vpop.f32.mrb[0].mxu0
        %v1937 = vadd.f32 %v1777, %v1936
        %v1938 = vpop.f32.mrb[0].mxu0
        %1939 = vmatprep.mubr.bf16.mxu0 0
        %1940 = vmatmul.mubr.bf16.gmra.mrb[0].mxu0 %v1734
        %v1941 = vpop.f32.mrb[0].mxu0
        %v1942 = vadd.f32 %v1777, %v1941
        %v1943 = vpop.f32.mrb[0].mxu0
        %v1944 = vpop.f32.mrb[0].mxu0
        %v1945 = vadd.f32 %v1777, %v1944
        %v1946 = vpop.f32.mrb[0].mxu0
        %1947 = vmatprep.mubr.bf16.mxu0 0
        %1948 = vmatmul.mubr.bf16.gmra.mrb[0].mxu0 %v1735
        %v1949 = vpop.f32.mrb[0].mxu0
        %v1950 = vadd.f32 %v1777, %v1949
        %v1951 = vpop.f32.mrb[0].mxu0
        %v1952 = vpop.f32.mrb[0].mxu0
        %v1953 = vadd.f32 %v1777, %v1952
        %v1954 = vpop.f32.mrb[0].mxu0
        %1955 = vmatprep.mubr.bf16.mxu0 0
        %1956 = vmatmul.mubr.bf16.gmra.mrb[0].mxu0 %v1736
        %v1957 = vpop.f32.mrb[0].mxu0
        %v1958 = vadd.f32 %v1777, %v1957
        %v1959 = vpop.f32.mrb[0].mxu0
        %v1960 = vpop.f32.mrb[0].mxu0
        %v1961 = vadd.f32 %v1777, %v1960
        %v1962 = vpop.f32.mrb[0].mxu0
        %1963 = vmatprep.mubr.bf16.mxu0 0
        %1964 = vmatmul.mubr.bf16.gmra.mrb[0].mxu0 %v1737
        %v1965 = vpop.f32.mrb[0].mxu0
        %v1966 = vadd.f32 %v1777, %v1965
        %v1967 = vpop.f32.mrb[0].mxu0
        %v1968 = vpop.f32.mrb[0].mxu0
        %v1969 = vadd.f32 %v1777, %v1968
        %v1970 = vpop.f32.mrb[0].mxu0
        %1971 = vmatprep.mubr.bf16.mxu0 0
        %1972 = vmatmul.mubr.bf16.gmra.mrb[0].mxu0 %v1738
        %v1973 = vpop.f32.mrb[0].mxu0
        %v1974 = vadd.f32 %v1777, %v1973
        %v1975 = vpop.f32.mrb[0].mxu0
        %v1976 = vpop.f32.mrb[0].mxu0
        %v1977 = vadd.f32 %v1777, %v1976
        %v1978 = vpop.f32.mrb[0].mxu0
        %1979 = vmatprep.mubr.bf16.mxu0 0
        %1980 = vmatmul.mubr.bf16.gmra.mrb[0].mxu0 %v1739
        %v1981 = vpop.f32.mrb[0].mxu0
        %v1982 = vadd.f32 %v1777, %v1981
        %v1983 = vpop.f32.mrb[0].mxu0
        %v1984 = vpop.f32.mrb[0].mxu0
        %v1985 = vadd.f32 %v1777, %v1984
        %v1986 = vpop.f32.mrb[0].mxu0
        %1987 = vmatprep.mubr.bf16.mxu0 0
        %1988 = vmatmul.mubr.bf16.gmra.mrb[0].mxu0 %v1740
        %v1989 = vpop.f32.mrb[0].mxu0
        %v1990 = vadd.f32 %v1777, %v1989
        %v1991 = vpop.f32.mrb[0].mxu0
        %v1992 = vpop.f32.mrb[0].mxu0
        %v1993 = vadd.f32 %v1777, %v1992
        %v1994 = vpop.f32.mrb[0].mxu0
        %1995 = vmatprep.mubr.bf16.mxu0 0
        %1996 = vmatmul.mubr.bf16.gmra.mrb[0].mxu0 %v1741
        %v1997 = vpop.f32.mrb[0].mxu0
        %v1998 = vadd.f32 %v1777, %v1997
        %v1999 = vpop.f32.mrb[0].mxu0
        %v2000 = vpop.f32.mrb[0].mxu0
        %v2001 = vadd.f32 %v1777, %v2000
        %v2002 = vpop.f32.mrb[0].mxu0
        %2003 = vmatprep.mubr.bf16.mxu0 0
        %2004 = vmatmul.mubr.bf16.gmra.mrb[0].mxu0 %v1742
        %v2005 = vpop.f32.mrb[0].mxu0
        %v2006 = vadd.f32 %v1777, %v2005
        %v2007 = vpop.f32.mrb[0].mxu0
        %v2008 = vpop.f32.mrb[0].mxu0
        %v2009 = vadd.f32 %v1777, %v2008
        %v2010 = vpop.f32.mrb[0].mxu0
        %2011 = vmatprep.mubr.bf16.mxu0 0
        %2012 = vmatmul.mubr.bf16.gmra.mrb[0].mxu0 %v1743
        %v2013 = vpop.f32.mrb[0].mxu0
        %v2014 = vadd.f32 %v1777, %v2013
        %v2015 = vpop.f32.mrb[0].mxu0
        %v2016 = vpop.f32.mrb[0].mxu0
        %v2017 = vadd.f32 %v1777, %v2016
        %v2018 = vpop.f32.mrb[0].mxu0
        %2019 = vmatprep.mubr.bf16.mxu0 0
        %2020 = vmatmul.mubr.bf16.gmra.mrb[0].mxu0 %v1744
        %v2021 = vpop.f32.mrb[0].mxu0
        %v2022 = vadd.f32 %v1777, %v2021
        %v2023 = vpop.f32.mrb[0].mxu0
        %v2024 = vpop.f32.mrb[0].mxu0
        %v2025 = vadd.f32 %v1777, %v2024
        %v2026 = vpop.f32.mrb[0].mxu0
        %2027 = vmatprep.mubr.bf16.mxu0 0
        %2028 = vmatmul.mubr.bf16.gmra.mrb[0].mxu0 %v1745
        %v2029 = vpop.f32.mrb[0].mxu0
        %v2030 = vadd.f32 %v1777, %v2029
        %v2031 = vpop.f32.mrb[0].mxu0
        %v2032 = vpop.f32.mrb[0].mxu0
        %v2033 = vadd.f32 %v1777, %v2032
        %v2034 = vpop.f32.mrb[0].mxu0
        %2035 = vmatprep.mubr.bf16.mxu0 0
        %2036 = vmatmul.mubr.bf16.gmra.mrb[0].mxu0 %v1746
        %v2037 = vpop.f32.mrb[0].mxu0
        %v2038 = vadd.f32 %v1777, %v2037
        %v2039 = vpop.f32.mrb[0].mxu0
        %v2040 = vpop.f32.mrb[0].mxu0
        %v2041 = vadd.f32 %v1777, %v2040
        %v2042 = vpop.f32.mrb[0].mxu0
        %2043 = vmatprep.mubr.bf16.mxu0 0
        %2044 = vmatmul.mubr.bf16.gmra.mrb[0].mxu0 %v1747
        %v2045 = vpop.f32.mrb[0].mxu0
        %v2046 = vadd.f32 %v1777, %v2045
        %v2047 = vpop.f32.mrb[0].mxu0
        %v2048 = vpop.f32.mrb[0].mxu0
        %v2049 = vadd.f32 %v1777, %v2048
        %v2050 = vpop.f32.mrb[0].mxu0
        %2051 = vmatprep.mubr.bf16.mxu0 0
        %2052 = vmatmul.mubr.bf16.gmra.mrb[0].mxu0 %v1748
        %v2053 = vpop.f32.mrb[0].mxu0
        %v2054 = vadd.f32 %v1777, %v2053
        %v2055 = vpop.f32.mrb[0].mxu0
        %v2056 = vpop.f32.mrb[0].mxu0
        %v2057 = vadd.f32 %v1777, %v2056
        %v2058 = vpop.f32.mrb[0].mxu0
        %2059 = vmatprep.mubr.bf16.mxu0 0
        %2060 = vmatmul.mubr.bf16.gmra.mrb[0].mxu0 %v1749
        %v2061 = vpop.f32.mrb[0].mxu0
        %v2062 = vadd.f32 %v1777, %v2061
        %v2063 = vpop.f32.mrb[0].mxu0
        %v2064 = vpop.f32.mrb[0].mxu0
        %v2065 = vadd.f32 %v1777, %v2064
        %v2066 = vpop.f32.mrb[0].mxu0
        %2067 = vmatprep.mubr.bf16.mxu0 0
        %2068 = vmatmul.mubr.bf16.gmra.mrb[0].mxu0 %v1750
        %v2069 = vpop.f32.mrb[0].mxu0
        %v2070 = vadd.f32 %v1777, %v2069
        %v2071 = vpop.f32.mrb[0].mxu0
        %v2072 = vpop.f32.mrb[0].mxu0
        %v2073 = vadd.f32 %v1777, %v2072
        %v2074 = vpop.f32.mrb[0].mxu0
        %2075 = vmatprep.mubr.bf16.mxu0 0
        %2076 = vmatmul.mubr.bf16.gmra.mrb[0].mxu0 %v1751
        %v2077 = vpop.f32.mrb[0].mxu0
        %v2078 = vadd.f32 %v1777, %v2077
        %v2079 = vpop.f32.mrb[0].mxu0
        %v2080 = vpop.f32.mrb[0].mxu0
        %v2081 = vadd.f32 %v1777, %v2080
        %v2082 = vpop.f32.mrb[0].mxu0
        %2083 = vmatprep.mubr.bf16.mxu0 0
        %2084 = vmatmul.mubr.bf16.gmra.mrb[0].mxu0 %v1752
        %v2085 = vpop.f32.mrb[0].mxu0
        %v2086 = vadd.f32 %v1777, %v2085
        %v2087 = vpop.f32.mrb[0].mxu0
        %v2088 = vpop.f32.mrb[0].mxu0
        %v2089 = vadd.f32 %v1777, %v2088
        %v2090 = vpop.f32.mrb[0].mxu0
        %2091 = vmatprep.mubr.bf16.mxu0 0
        %2092 = vmatmul.mubr.bf16.gmra.mrb[0].mxu0 %v1753
        %v2093 = vpop.f32.mrb[0].mxu0
        %v2094 = vadd.f32 %v1777, %v2093
        %v2095 = vpop.f32.mrb[0].mxu0
        %v2096 = vpop.f32.mrb[0].mxu0
        %v2097 = vadd.f32 %v1777, %v2096
        %v2098 = vpop.f32.mrb[0].mxu0
        %2099 = vmatprep.mubr.bf16.mxu0 0
        %2100 = vmatmul.mubr.bf16.gmra.mrb[0].mxu0 %v1754
        %v2101 = vpop.f32.mrb[0].mxu0
        %v2102 = vadd.f32 %v1777, %v2101
        %v2103 = vpop.f32.mrb[0].mxu0
        %v2104 = vpop.f32.mrb[0].mxu0
        %v2105 = vadd.f32 %v1777, %v2104
        %v2106 = vpop.f32.mrb[0].mxu0
        %2107 = vmatprep.mubr.bf16.mxu0 0
        %2108 = vmatmul.mubr.bf16.gmra.mrb[0].mxu0 %v1755
        %v2109 = vpop.f32.mrb[0].mxu0
        %v2110 = vadd.f32 %v1777, %v2109
        %v2111 = vpop.f32.mrb[0].mxu0
        %v2112 = vpop.f32.mrb[0].mxu0
        %v2113 = vadd.f32 %v1777, %v2112
        %v2114 = vpop.f32.mrb[0].mxu0
        %2115 = vdwg.mxu0
        %v2116 = vmax.f32 %v1862, 0.0
        %v2117 = vmax.f32 %v1865, 0.0
        %v2118 = vmax.f32 %v1870, 0.0
        %v2119 = vmax.f32 %v1873, 0.0
        %v2120 = vmax.f32 %v1878, 0.0
        %v2121 = vmax.f32 %v1881, 0.0
        %v2122 = vmax.f32 %v1886, 0.0
        %v2123 = vmax.f32 %v1889, 0.0
        %v2124 = vmax.f32 %v1894, 0.0
        %v2125 = vmax.f32 %v1897, 0.0
        %v2126 = vmax.f32 %v1902, 0.0
        %v2127 = vmax.f32 %v1905, 0.0
        %v2128 = vmax.f32 %v1910, 0.0
        %v2129 = vmax.f32 %v1913, 0.0
        %v2130 = vmax.f32 %v1918, 0.0
        %v2131 = vmax.f32 %v1921, 0.0
        %v2132 = vmax.f32 %v1926, 0.0
        %v2133 = vmax.f32 %v1929, 0.0
        %v2134 = vmax.f32 %v1934, 0.0
        %v2135 = vmax.f32 %v1937, 0.0
        %v2136 = vmax.f32 %v1942, 0.0
        %v2137 = vmax.f32 %v1945, 0.0
        %v2138 = vmax.f32 %v1950, 0.0
        %v2139 = vmax.f32 %v1953, 0.0
        %v2140 = vmax.f32 %v1958, 0.0
        %v2141 = vmax.f32 %v1961, 0.0
        %v2142 = vmax.f32 %v1966, 0.0
        %v2143 = vmax.f32 %v1969, 0.0
        %v2144 = vmax.f32 %v1974, 0.0
        %v2145 = vmax.f32 %v1977, 0.0
        %v2146 = vmax.f32 %v1982, 0.0
        %v2147 = vmax.f32 %v1985, 0.0
        %v2148 = vmax.f32 %v1990, 0.0
        %v2149 = vmax.f32 %v1993, 0.0
        %v2150 = vmax.f32 %v1998, 0.0
        %v2151 = vmax.f32 %v2001, 0.0
        %v2152 = vmax.f32 %v2006, 0.0
        %v2153 = vmax.f32 %v2009, 0.0
        %v2154 = vmax.f32 %v2014, 0.0
        %v2155 = vmax.f32 %v2017, 0.0
        %v2156 = vmax.f32 %v2022, 0.0
        %v2157 = vmax.f32 %v2025, 0.0
        %v2158 = vmax.f32 %v2030, 0.0
        %v2159 = vmax.f32 %v2033, 0.0
        %v2160 = vmax.f32 %v2038, 0.0
        %v2161 = vmax.f32 %v2041, 0.0
        %v2162 = vmax.f32 %v2046, 0.0
        %v2163 = vmax.f32 %v2049, 0.0
        %v2164 = vmax.f32 %v2054, 0.0
        %v2165 = vmax.f32 %v2057, 0.0
        %v2166 = vmax.f32 %v2062, 0.0
        %v2167 = vmax.f32 %v2065, 0.0
        %v2168 = vmax.f32 %v2070, 0.0
        %v2169 = vmax.f32 %v2073, 0.0
        %v2170 = vmax.f32 %v2078, 0.0
        %v2171 = vmax.f32 %v2081, 0.0
        %v2172 = vmax.f32 %v2086, 0.0
        %v2173 = vmax.f32 %v2089, 0.0
        %v2174 = vmax.f32 %v2094, 0.0
        %v2175 = vmax.f32 %v2097, 0.0
        %v2176 = vmax.f32 %v2102, 0.0
        %v2177 = vmax.f32 %v2105, 0.0
        %v2178 = vmax.f32 %v2110, 0.0
        %v2179 = vmax.f32 %v2113, 0.0
        // Predicated region
        $region81: #{audio_aligner_forward.1} parent=63 // pred_check
          %p2180 = pneg %p426
        $region82: #{audio_aligner_forward.1} parent=63 // pred_check_branch
          %2182 = sbr.rel (%p2180) target = $region84
        $region83: #{audio_aligner_forward.1} parent=63 // pred_region
          %v2183 = vld [vmem:[#allocation2] sm:$0x1]
          %vm2184 = vcmask 523264
          %v2185 = vsel %vm2184, %v2116, 0.0
          %v2186 = vsel %vm2184, %v2117, 0.0
          %v2187 = vadd.f32 %v2185, %v2186
          %v2188 = vsel %vm2184, %v2118, 0.0
          %v2189 = vadd.f32 %v2187, %v2188
          %v2190 = vsel %vm2184, %v2119, 0.0
          %v2191 = vadd.f32 %v2189, %v2190
          %v2192 = vsel %vm2184, %v2120, 0.0
          %v2193 = vadd.f32 %v2191, %v2192
          %v2194 = vsel %vm2184, %v2121, 0.0
          %v2195 = vadd.f32 %v2193, %v2194
          %v2196 = vsel %vm2184, %v2122, 0.0
          %v2197 = vadd.f32 %v2195, %v2196
          %v2198 = vsel %vm2184, %v2123, 0.0
          %v2199 = vadd.f32 %v2197, %v2198
          %v2200 = vsel %vm2184, %v2124, 0.0
          %v2201 = vadd.f32 %v2199, %v2200
          %v2202 = vsel %vm2184, %v2125, 0.0
          %v2203 = vadd.f32 %v2201, %v2202
          %v2204 = vsel %vm2184, %v2126, 0.0
          %v2205 = vadd.f32 %v2203, %v2204
          %v2206 = vsel %vm2184, %v2127, 0.0
          %v2207 = vadd.f32 %v2205, %v2206
          %v2208 = vsel %vm2184, %v2128, 0.0
          %v2209 = vadd.f32 %v2207, %v2208
          %v2210 = vsel %vm2184, %v2129, 0.0
          %v2211 = vadd.f32 %v2209, %v2210
          %v2212 = vsel %vm2184, %v2130, 0.0
          %v2213 = vadd.f32 %v2211, %v2212
          %v2214 = vsel %vm2184, %v2131, 0.0
          %v2215 = vadd.f32 %v2213, %v2214
          %v2216 = vsel %vm2184, %v2132, 0.0
          %v2217 = vadd.f32 %v2215, %v2216
          %v2218 = vsel %vm2184, %v2133, 0.0
          %v2219 = vadd.f32 %v2217, %v2218
          %v2220 = vsel %vm2184, %v2134, 0.0
          %v2221 = vadd.f32 %v2219, %v2220
          %v2222 = vsel %vm2184, %v2135, 0.0
          %v2223 = vadd.f32 %v2221, %v2222
          %v2224 = vsel %vm2184, %v2136, 0.0
          %v2225 = vadd.f32 %v2223, %v2224
          %v2226 = vsel %vm2184, %v2137, 0.0
          %v2227 = vadd.f32 %v2225, %v2226
          %v2228 = vsel %vm2184, %v2138, 0.0
          %v2229 = vadd.f32 %v2227, %v2228
          %v2230 = vsel %vm2184, %v2139, 0.0
          %v2231 = vadd.f32 %v2229, %v2230
          %v2232 = vsel %vm2184, %v2140, 0.0
          %v2233 = vadd.f32 %v2231, %v2232
          %v2234 = vsel %vm2184, %v2141, 0.0
          %v2235 = vadd.f32 %v2233, %v2234
          %v2236 = vsel %vm2184, %v2142, 0.0
          %v2237 = vadd.f32 %v2235, %v2236
          %v2238 = vsel %vm2184, %v2143, 0.0
          %v2239 = vadd.f32 %v2237, %v2238
          %v2240 = vsel %vm2184, %v2144, 0.0
          %v2241 = vadd.f32 %v2239, %v2240
          %v2242 = vsel %vm2184, %v2145, 0.0
          %v2243 = vadd.f32 %v2241, %v2242
          %v2244 = vsel %vm2184, %v2146, 0.0
          %v2245 = vadd.f32 %v2243, %v2244
          %v2246 = vsel %vm2184, %v2147, 0.0
          %v2247 = vadd.f32 %v2245, %v2246
          %v2248 = vsel %vm2184, %v2148, 0.0
          %v2249 = vadd.f32 %v2247, %v2248
          %v2250 = vsel %vm2184, %v2149, 0.0
          %v2251 = vadd.f32 %v2249, %v2250
          %v2252 = vsel %vm2184, %v2150, 0.0
          %v2253 = vadd.f32 %v2251, %v2252
          %v2254 = vsel %vm2184, %v2151, 0.0
          %v2255 = vadd.f32 %v2253, %v2254
          %v2256 = vsel %vm2184, %v2152, 0.0
          %v2257 = vadd.f32 %v2255, %v2256
          %v2258 = vsel %vm2184, %v2153, 0.0
          %v2259 = vadd.f32 %v2257, %v2258
          %v2260 = vsel %vm2184, %v2154, 0.0
          %v2261 = vadd.f32 %v2259, %v2260
          %v2262 = vsel %vm2184, %v2155, 0.0
          %v2263 = vadd.f32 %v2261, %v2262
          %v2264 = vsel %vm2184, %v2156, 0.0
          %v2265 = vadd.f32 %v2263, %v2264
          %v2266 = vsel %vm2184, %v2157, 0.0
          %v2267 = vadd.f32 %v2265, %v2266
          %v2268 = vsel %vm2184, %v2158, 0.0
          %v2269 = vadd.f32 %v2267, %v2268
          %v2270 = vsel %vm2184, %v2159, 0.0
          %v2271 = vadd.f32 %v2269, %v2270
          %v2272 = vsel %vm2184, %v2160, 0.0
          %v2273 = vadd.f32 %v2271, %v2272
          %v2274 = vsel %vm2184, %v2161, 0.0
          %v2275 = vadd.f32 %v2273, %v2274
          %v2276 = vsel %vm2184, %v2162, 0.0
          %v2277 = vadd.f32 %v2275, %v2276
          %v2278 = vsel %vm2184, %v2163, 0.0
          %v2279 = vadd.f32 %v2277, %v2278
          %v2280 = vsel %vm2184, %v2164, 0.0
          %v2281 = vadd.f32 %v2279, %v2280
          %v2282 = vsel %vm2184, %v2165, 0.0
          %v2283 = vadd.f32 %v2281, %v2282
          %v2284 = vsel %vm2184, %v2166, 0.0
          %v2285 = vadd.f32 %v2283, %v2284
          %v2286 = vsel %vm2184, %v2167, 0.0
          %v2287 = vadd.f32 %v2285, %v2286
          %v2288 = vsel %vm2184, %v2168, 0.0
          %v2289 = vadd.f32 %v2287, %v2288
          %v2290 = vsel %vm2184, %v2169, 0.0
          %v2291 = vadd.f32 %v2289, %v2290
          %v2292 = vsel %vm2184, %v2170, 0.0
          %v2293 = vadd.f32 %v2291, %v2292
          %v2294 = vsel %vm2184, %v2171, 0.0
          %v2295 = vadd.f32 %v2293, %v2294
          %v2296 = vsel %vm2184, %v2172, 0.0
          %v2297 = vadd.f32 %v2295, %v2296
          %v2298 = vsel %vm2184, %v2173, 0.0
          %v2299 = vadd.f32 %v2297, %v2298
          %v2300 = vsel %vm2184, %v2174, 0.0
          %v2301 = vadd.f32 %v2299, %v2300
          %v2302 = vsel %vm2184, %v2175, 0.0
          %v2303 = vadd.f32 %v2301, %v2302
          %v2304 = vsel %vm2184, %v2176, 0.0
          %v2305 = vadd.f32 %v2303, %v2304
          %v2306 = vsel %vm2184, %v2177, 0.0
          %v2307 = vadd.f32 %v2305, %v2306
          %v2308 = vsel %vm2184, %v2178, 0.0
          %v2309 = vadd.f32 %v2307, %v2308
          %v2310 = vsel %vm2184, %v2179, 0.0
          %v2311 = vadd.f32 %v2309, %v2310
          %v2312 = vrot.slane %v2311, 4
          %v2313 = vadd.f32 %v2311, %v2312
          %v2314 = vrot.slane %v2313, 2
          %v2315 = vadd.f32 %v2313, %v2314
          %v2316 = vrot.slane %v2315, 1
          %v2317 = vadd.f32 %v2315, %v2316
          %v2318 = vadd.f32 %v2183, %v2317
          %vm2319 = vcmask 516096
          %2320 = vst.msk [vmem:[#allocation2] sm:$0x1] %vm2319, %v2318
        $region84: #{audio_aligner_forward.1} parent=63 // pred_fallthru
          _
        %p2321 = scmp.eq.s32.totalorder %s29, 1
        // Predicated region
        $region85: #{audio_aligner_forward.1} parent=63 // pred_check
          %p2322 = pneg %p2321
        $region86: #{audio_aligner_forward.1} parent=63 // pred_check_branch
          %2324 = sbr.rel (%p2322) target = $region88
        $region87: #{audio_aligner_forward.1} parent=63 // pred_region
          %v2325 = vld [vmem:[#allocation2] sm:$0x1]
          %v2326 = vmul.f32 %v2325, 0.001953125
          %v2328 = vlaneseq
          %v2329 = vshrl.u32 %v2328, 7
          %v2330 = vsub.s32 0, %v2329
          %v2331 = vrot.slane %v2326, %v2330
          %v2333 = vsub.f32 %v2116, %v2331
          %v2334 = vsub.f32 %v2117, %v2331
          %v2335 = vsub.f32 %v2118, %v2331
          %v2336 = vsub.f32 %v2119, %v2331
          %v2337 = vsub.f32 %v2120, %v2331
          %v2338 = vsub.f32 %v2121, %v2331
          %v2339 = vsub.f32 %v2122, %v2331
          %v2340 = vsub.f32 %v2123, %v2331
          %v2341 = vsub.f32 %v2124, %v2331
          %v2342 = vsub.f32 %v2125, %v2331
          %v2343 = vsub.f32 %v2126, %v2331
          %v2344 = vsub.f32 %v2127, %v2331
          %v2345 = vsub.f32 %v2128, %v2331
          %v2346 = vsub.f32 %v2129, %v2331
          %v2347 = vsub.f32 %v2130, %v2331
          %v2348 = vsub.f32 %v2131, %v2331
          %v2349 = vsub.f32 %v2132, %v2331
          %v2350 = vsub.f32 %v2133, %v2331
          %v2351 = vsub.f32 %v2134, %v2331
          %v2352 = vsub.f32 %v2135, %v2331
          %v2353 = vsub.f32 %v2136, %v2331
          %v2354 = vsub.f32 %v2137, %v2331
          %v2355 = vsub.f32 %v2138, %v2331
          %v2356 = vsub.f32 %v2139, %v2331
          %v2357 = vsub.f32 %v2140, %v2331
          %v2358 = vsub.f32 %v2141, %v2331
          %v2359 = vsub.f32 %v2142, %v2331
          %v2360 = vsub.f32 %v2143, %v2331
          %v2361 = vsub.f32 %v2144, %v2331
          %v2362 = vsub.f32 %v2145, %v2331
          %v2363 = vsub.f32 %v2146, %v2331
          %v2364 = vsub.f32 %v2147, %v2331
          %v2365 = vsub.f32 %v2148, %v2331
          %v2366 = vsub.f32 %v2149, %v2331
          %v2367 = vsub.f32 %v2150, %v2331
          %v2368 = vsub.f32 %v2151, %v2331
          %v2369 = vsub.f32 %v2152, %v2331
          %v2370 = vsub.f32 %v2153, %v2331
          %v2371 = vsub.f32 %v2154, %v2331
          %v2372 = vsub.f32 %v2155, %v2331
          %v2373 = vsub.f32 %v2156, %v2331
          %v2374 = vsub.f32 %v2157, %v2331
          %v2375 = vsub.f32 %v2158, %v2331
          %v2376 = vsub.f32 %v2159, %v2331
          %v2377 = vsub.f32 %v2160, %v2331
          %v2378 = vsub.f32 %v2161, %v2331
          %v2379 = vsub.f32 %v2162, %v2331
          %v2380 = vsub.f32 %v2163, %v2331
          %v2381 = vsub.f32 %v2164, %v2331
          %v2382 = vsub.f32 %v2165, %v2331
          %v2383 = vsub.f32 %v2166, %v2331
          %v2384 = vsub.f32 %v2167, %v2331
          %v2385 = vsub.f32 %v2168, %v2331
          %v2386 = vsub.f32 %v2169, %v2331
          %v2387 = vsub.f32 %v2170, %v2331
          %v2388 = vsub.f32 %v2171, %v2331
          %v2389 = vsub.f32 %v2172, %v2331
          %v2390 = vsub.f32 %v2173, %v2331
          %v2391 = vsub.f32 %v2174, %v2331
          %v2392 = vsub.f32 %v2175, %v2331
          %v2393 = vsub.f32 %v2176, %v2331
          %v2394 = vsub.f32 %v2177, %v2331
          %v2395 = vsub.f32 %v2178, %v2331
          %v2396 = vsub.f32 %v2179, %v2331
          %v2397 = vld [vmem:[#allocation3] sm:$0x1]
          %v2398 = vmul.f32 %v2333, %v2333
          %v2399 = vmul.f32 %v2334, %v2334
          %v2400 = vmul.f32 %v2335, %v2335
          %v2401 = vmul.f32 %v2336, %v2336
          %v2402 = vmul.f32 %v2337, %v2337
          %v2403 = vmul.f32 %v2338, %v2338
          %v2404 = vmul.f32 %v2339, %v2339
          %v2405 = vmul.f32 %v2340, %v2340
          %v2406 = vmul.f32 %v2341, %v2341
          %v2407 = vmul.f32 %v2342, %v2342
          %v2408 = vmul.f32 %v2343, %v2343
          %v2409 = vmul.f32 %v2344, %v2344
          %v2410 = vmul.f32 %v2345, %v2345
          %v2411 = vmul.f32 %v2346, %v2346
          %v2412 = vmul.f32 %v2347, %v2347
          %v2413 = vmul.f32 %v2348, %v2348
          %v2414 = vmul.f32 %v2349, %v2349
          %v2415 = vmul.f32 %v2350, %v2350
          %v2416 = vmul.f32 %v2351, %v2351
          %v2417 = vmul.f32 %v2352, %v2352
          %v2418 = vmul.f32 %v2353, %v2353
          %v2419 = vmul.f32 %v2354, %v2354
          %v2420 = vmul.f32 %v2355, %v2355
          %v2421 = vmul.f32 %v2356, %v2356
          %v2422 = vmul.f32 %v2357, %v2357
          %v2423 = vmul.f32 %v2358, %v2358
          %v2424 = vmul.f32 %v2359, %v2359
          %v2425 = vmul.f32 %v2360, %v2360
          %v2426 = vmul.f32 %v2361, %v2361
          %v2427 = vmul.f32 %v2362, %v2362
          %v2428 = vmul.f32 %v2363, %v2363
          %v2429 = vmul.f32 %v2364, %v2364
          %v2430 = vmul.f32 %v2365, %v2365
          %v2431 = vmul.f32 %v2366, %v2366
          %v2432 = vmul.f32 %v2367, %v2367
          %v2433 = vmul.f32 %v2368, %v2368
          %v2434 = vmul.f32 %v2369, %v2369
          %v2435 = vmul.f32 %v2370, %v2370
          %v2436 = vmul.f32 %v2371, %v2371
          %v2437 = vmul.f32 %v2372, %v2372
          %v2438 = vmul.f32 %v2373, %v2373
          %v2439 = vmul.f32 %v2374, %v2374
          %v2440 = vmul.f32 %v2375, %v2375
          %v2441 = vmul.f32 %v2376, %v2376
          %v2442 = vmul.f32 %v2377, %v2377
          %v2443 = vmul.f32 %v2378, %v2378
          %v2444 = vmul.f32 %v2379, %v2379
          %v2445 = vmul.f32 %v2380, %v2380
          %v2446 = vmul.f32 %v2381, %v2381
          %v2447 = vmul.f32 %v2382, %v2382
          %v2448 = vmul.f32 %v2383, %v2383
          %v2449 = vmul.f32 %v2384, %v2384
          %v2450 = vmul.f32 %v2385, %v2385
          %v2451 = vmul.f32 %v2386, %v2386
          %v2452 = vmul.f32 %v2387, %v2387
          %v2453 = vmul.f32 %v2388, %v2388
          %v2454 = vmul.f32 %v2389, %v2389
          %v2455 = vmul.f32 %v2390, %v2390
          %v2456 = vmul.f32 %v2391, %v2391
          %v2457 = vmul.f32 %v2392, %v2392
          %v2458 = vmul.f32 %v2393, %v2393
          %v2459 = vmul.f32 %v2394, %v2394
          %v2460 = vmul.f32 %v2395, %v2395
          %v2461 = vmul.f32 %v2396, %v2396
          %vm2462 = vcmask 523264
          %v2463 = vsel %vm2462, %v2398, 0.0
          %v2464 = vsel %vm2462, %v2399, 0.0
          %v2465 = vadd.f32 %v2463, %v2464
          %v2466 = vsel %vm2462, %v2400, 0.0
          %v2467 = vadd.f32 %v2465, %v2466
          %v2468 = vsel %vm2462, %v2401, 0.0
          %v2469 = vadd.f32 %v2467, %v2468
          %v2470 = vsel %vm2462, %v2402, 0.0
          %v2471 = vadd.f32 %v2469, %v2470
          %v2472 = vsel %vm2462, %v2403, 0.0
          %v2473 = vadd.f32 %v2471, %v2472
          %v2474 = vsel %vm2462, %v2404, 0.0
          %v2475 = vadd.f32 %v2473, %v2474
          %v2476 = vsel %vm2462, %v2405, 0.0
          %v2477 = vadd.f32 %v2475, %v2476
          %v2478 = vsel %vm2462, %v2406, 0.0
          %v2479 = vadd.f32 %v2477, %v2478
          %v2480 = vsel %vm2462, %v2407, 0.0
          %v2481 = vadd.f32 %v2479, %v2480
          %v2482 = vsel %vm2462, %v2408, 0.0
          %v2483 = vadd.f32 %v2481, %v2482
          %v2484 = vsel %vm2462, %v2409, 0.0
          %v2485 = vadd.f32 %v2483, %v2484
          %v2486 = vsel %vm2462, %v2410, 0.0
          %v2487 = vadd.f32 %v2485, %v2486
          %v2488 = vsel %vm2462, %v2411, 0.0
          %v2489 = vadd.f32 %v2487, %v2488
          %v2490 = vsel %vm2462, %v2412, 0.0
          %v2491 = vadd.f32 %v2489, %v2490
          %v2492 = vsel %vm2462, %v2413, 0.0
          %v2493 = vadd.f32 %v2491, %v2492
          %v2494 = vsel %vm2462, %v2414, 0.0
          %v2495 = vadd.f32 %v2493, %v2494
          %v2496 = vsel %vm2462, %v2415, 0.0
          %v2497 = vadd.f32 %v2495, %v2496
          %v2498 = vsel %vm2462, %v2416, 0.0
          %v2499 = vadd.f32 %v2497, %v2498
          %v2500 = vsel %vm2462, %v2417, 0.0
          %v2501 = vadd.f32 %v2499, %v2500
          %v2502 = vsel %vm2462, %v2418, 0.0
          %v2503 = vadd.f32 %v2501, %v2502
          %v2504 = vsel %vm2462, %v2419, 0.0
          %v2505 = vadd.f32 %v2503, %v2504
          %v2506 = vsel %vm2462, %v2420, 0.0
          %v2507 = vadd.f32 %v2505, %v2506
          %v2508 = vsel %vm2462, %v2421, 0.0
          %v2509 = vadd.f32 %v2507, %v2508
          %v2510 = vsel %vm2462, %v2422, 0.0
          %v2511 = vadd.f32 %v2509, %v2510
          %v2512 = vsel %vm2462, %v2423, 0.0
          %v2513 = vadd.f32 %v2511, %v2512
          %v2514 = vsel %vm2462, %v2424, 0.0
          %v2515 = vadd.f32 %v2513, %v2514
          %v2516 = vsel %vm2462, %v2425, 0.0
          %v2517 = vadd.f32 %v2515, %v2516
          %v2518 = vsel %vm2462, %v2426, 0.0
          %v2519 = vadd.f32 %v2517, %v2518
          %v2520 = vsel %vm2462, %v2427, 0.0
          %v2521 = vadd.f32 %v2519, %v2520
          %v2522 = vsel %vm2462, %v2428, 0.0
          %v2523 = vadd.f32 %v2521, %v2522
          %v2524 = vsel %vm2462, %v2429, 0.0
          %v2525 = vadd.f32 %v2523, %v2524
          %v2526 = vsel %vm2462, %v2430, 0.0
          %v2527 = vadd.f32 %v2525, %v2526
          %v2528 = vsel %vm2462, %v2431, 0.0
          %v2529 = vadd.f32 %v2527, %v2528
          %v2530 = vsel %vm2462, %v2432, 0.0
          %v2531 = vadd.f32 %v2529, %v2530
          %v2532 = vsel %vm2462, %v2433, 0.0
          %v2533 = vadd.f32 %v2531, %v2532
          %v2534 = vsel %vm2462, %v2434, 0.0
          %v2535 = vadd.f32 %v2533, %v2534
          %v2536 = vsel %vm2462, %v2435, 0.0
          %v2537 = vadd.f32 %v2535, %v2536
          %v2538 = vsel %vm2462, %v2436, 0.0
          %v2539 = vadd.f32 %v2537, %v2538
          %v2540 = vsel %vm2462, %v2437, 0.0
          %v2541 = vadd.f32 %v2539, %v2540
          %v2542 = vsel %vm2462, %v2438, 0.0
          %v2543 = vadd.f32 %v2541, %v2542
          %v2544 = vsel %vm2462, %v2439, 0.0
          %v2545 = vadd.f32 %v2543, %v2544
          %v2546 = vsel %vm2462, %v2440, 0.0
          %v2547 = vadd.f32 %v2545, %v2546
          %v2548 = vsel %vm2462, %v2441, 0.0
          %v2549 = vadd.f32 %v2547, %v2548
          %v2550 = vsel %vm2462, %v2442, 0.0
          %v2551 = vadd.f32 %v2549, %v2550
          %v2552 = vsel %vm2462, %v2443, 0.0
          %v2553 = vadd.f32 %v2551, %v2552
          %v2554 = vsel %vm2462, %v2444, 0.0
          %v2555 = vadd.f32 %v2553, %v2554
          %v2556 = vsel %vm2462, %v2445, 0.0
          %v2557 = vadd.f32 %v2555, %v2556
          %v2558 = vsel %vm2462, %v2446, 0.0
          %v2559 = vadd.f32 %v2557, %v2558
          %v2560 = vsel %vm2462, %v2447, 0.0
          %v2561 = vadd.f32 %v2559, %v2560
          %v2562 = vsel %vm2462, %v2448, 0.0
          %v2563 = vadd.f32 %v2561, %v2562
          %v2564 = vsel %vm2462, %v2449, 0.0
          %v2565 = vadd.f32 %v2563, %v2564
          %v2566 = vsel %vm2462, %v2450, 0.0
          %v2567 = vadd.f32 %v2565, %v2566
          %v2568 = vsel %vm2462, %v2451, 0.0
          %v2569 = vadd.f32 %v2567, %v2568
          %v2570 = vsel %vm2462, %v2452, 0.0
          %v2571 = vadd.f32 %v2569, %v2570
          %v2572 = vsel %vm2462, %v2453, 0.0
          %v2573 = vadd.f32 %v2571, %v2572
          %v2574 = vsel %vm2462, %v2454, 0.0
          %v2575 = vadd.f32 %v2573, %v2574
          %v2576 = vsel %vm2462, %v2455, 0.0
          %v2577 = vadd.f32 %v2575, %v2576
          %v2578 = vsel %vm2462, %v2456, 0.0
          %v2579 = vadd.f32 %v2577, %v2578
          %v2580 = vsel %vm2462, %v2457, 0.0
          %v2581 = vadd.f32 %v2579, %v2580
          %v2582 = vsel %vm2462, %v2458, 0.0
          %v2583 = vadd.f32 %v2581, %v2582
          %v2584 = vsel %vm2462, %v2459, 0.0
          %v2585 = vadd.f32 %v2583, %v2584
          %v2586 = vsel %vm2462, %v2460, 0.0
          %v2587 = vadd.f32 %v2585, %v2586
          %v2588 = vsel %vm2462, %v2461, 0.0
          %v2589 = vadd.f32 %v2587, %v2588
          %v2590 = vrot.slane %v2589, 4
          %v2591 = vadd.f32 %v2589, %v2590
          %v2592 = vrot.slane %v2591, 2
          %v2593 = vadd.f32 %v2591, %v2592
          %v2594 = vrot.slane %v2593, 1
          %v2595 = vadd.f32 %v2593, %v2594
          %v2596 = vadd.f32 %v2397, %v2595
          %vm2597 = vcmask 516096
          %2598 = vst.msk [vmem:[#allocation3] sm:$0x1] %vm2597, %v2596
        $region88: #{audio_aligner_forward.1} parent=63 // pred_fallthru
          _
        %p2599 = scmp.eq.s32.totalorder %s29, 2
        // Predicated region
        $region89: #{audio_aligner_forward.1} parent=63 // pred_check
          %p2600 = pneg %p2599
        $region90: #{audio_aligner_forward.1} parent=63 // pred_check_branch
          %2602 = sbr.rel (%p2600) target = $region92
        $region91: #{audio_aligner_forward.1} parent=63 // pred_region
          %v2603 = vld [vmem:[#allocation2] sm:$0x1]
          %v2604 = vmul.f32 %v2603, 0.001953125
          %v2605 = vld [vmem:[#allocation3] sm:$0x1]
          %v2606 = vmul.f32 %v2605, 0.001953125
          %v2607 = vadd.f32 %v2606, 1e-05
          %v2608 = vrsqrt.pop %v2607
          %v2610 = vlaneseq
          %v2611 = vshrl.u32 %v2610, 7
          %v2612 = vsub.s32 0, %v2611
          %v2613 = vrot.slane %v2604, %v2612
          %v2615 = vsub.f32 %v2116, %v2613
          %v2616 = vsub.f32 %v2117, %v2613
          %v2617 = vsub.f32 %v2118, %v2613
          %v2618 = vsub.f32 %v2119, %v2613
          %v2619 = vsub.f32 %v2120, %v2613
          %v2620 = vsub.f32 %v2121, %v2613
          %v2621 = vsub.f32 %v2122, %v2613
          %v2622 = vsub.f32 %v2123, %v2613
          %v2623 = vsub.f32 %v2124, %v2613
          %v2624 = vsub.f32 %v2125, %v2613
          %v2625 = vsub.f32 %v2126, %v2613
          %v2626 = vsub.f32 %v2127, %v2613
          %v2627 = vsub.f32 %v2128, %v2613
          %v2628 = vsub.f32 %v2129, %v2613
          %v2629 = vsub.f32 %v2130, %v2613
          %v2630 = vsub.f32 %v2131, %v2613
          %v2631 = vsub.f32 %v2132, %v2613
          %v2632 = vsub.f32 %v2133, %v2613
          %v2633 = vsub.f32 %v2134, %v2613
          %v2634 = vsub.f32 %v2135, %v2613
          %v2635 = vsub.f32 %v2136, %v2613
          %v2636 = vsub.f32 %v2137, %v2613
          %v2637 = vsub.f32 %v2138, %v2613
          %v2638 = vsub.f32 %v2139, %v2613
          %v2639 = vsub.f32 %v2140, %v2613
          %v2640 = vsub.f32 %v2141, %v2613
          %v2641 = vsub.f32 %v2142, %v2613
          %v2642 = vsub.f32 %v2143, %v2613
          %v2643 = vsub.f32 %v2144, %v2613
          %v2644 = vsub.f32 %v2145, %v2613
          %v2645 = vsub.f32 %v2146, %v2613
          %v2646 = vsub.f32 %v2147, %v2613
          %v2647 = vsub.f32 %v2148, %v2613
          %v2648 = vsub.f32 %v2149, %v2613
          %v2649 = vsub.f32 %v2150, %v2613
          %v2650 = vsub.f32 %v2151, %v2613
          %v2651 = vsub.f32 %v2152, %v2613
          %v2652 = vsub.f32 %v2153, %v2613
          %v2653 = vsub.f32 %v2154, %v2613
          %v2654 = vsub.f32 %v2155, %v2613
          %v2655 = vsub.f32 %v2156, %v2613
          %v2656 = vsub.f32 %v2157, %v2613
          %v2657 = vsub.f32 %v2158, %v2613
          %v2658 = vsub.f32 %v2159, %v2613
          %v2659 = vsub.f32 %v2160, %v2613
          %v2660 = vsub.f32 %v2161, %v2613
          %v2661 = vsub.f32 %v2162, %v2613
          %v2662 = vsub.f32 %v2163, %v2613
          %v2663 = vsub.f32 %v2164, %v2613
          %v2664 = vsub.f32 %v2165, %v2613
          %v2665 = vsub.f32 %v2166, %v2613
          %v2666 = vsub.f32 %v2167, %v2613
          %v2667 = vsub.f32 %v2168, %v2613
          %v2668 = vsub.f32 %v2169, %v2613
          %v2669 = vsub.f32 %v2170, %v2613
          %v2670 = vsub.f32 %v2171, %v2613
          %v2671 = vsub.f32 %v2172, %v2613
          %v2672 = vsub.f32 %v2173, %v2613
          %v2673 = vsub.f32 %v2174, %v2613
          %v2674 = vsub.f32 %v2175, %v2613
          %v2675 = vsub.f32 %v2176, %v2613
          %v2676 = vsub.f32 %v2177, %v2613
          %v2677 = vsub.f32 %v2178, %v2613
          %v2678 = vsub.f32 %v2179, %v2613
          %v2679 = vld [vmem:[%s5] sm:$0x1]
          %v2680 = vmul.f32 %v2608, %v2679
          %v2682 = vlaneseq
          %v2683 = vshrl.u32 %v2682, 7
          %v2684 = vsub.s32 0, %v2683
          %v2685 = vrot.slane %v2680, %v2684
          %v2687 = vmul.f32 %v2615, %v2685
          %v2688 = vmul.f32 %v2616, %v2685
          %v2689 = vmul.f32 %v2617, %v2685
          %v2690 = vmul.f32 %v2618, %v2685
          %v2691 = vmul.f32 %v2619, %v2685
          %v2692 = vmul.f32 %v2620, %v2685
          %v2693 = vmul.f32 %v2621, %v2685
          %v2694 = vmul.f32 %v2622, %v2685
          %v2695 = vmul.f32 %v2623, %v2685
          %v2696 = vmul.f32 %v2624, %v2685
          %v2697 = vmul.f32 %v2625, %v2685
          %v2698 = vmul.f32 %v2626, %v2685
          %v2699 = vmul.f32 %v2627, %v2685
          %v2700 = vmul.f32 %v2628, %v2685
          %v2701 = vmul.f32 %v2629, %v2685
          %v2702 = vmul.f32 %v2630, %v2685
          %v2703 = vmul.f32 %v2631, %v2685
          %v2704 = vmul.f32 %v2632, %v2685
          %v2705 = vmul.f32 %v2633, %v2685
          %v2706 = vmul.f32 %v2634, %v2685
          %v2707 = vmul.f32 %v2635, %v2685
          %v2708 = vmul.f32 %v2636, %v2685
          %v2709 = vmul.f32 %v2637, %v2685
          %v2710 = vmul.f32 %v2638, %v2685
          %v2711 = vmul.f32 %v2639, %v2685
          %v2712 = vmul.f32 %v2640, %v2685
          %v2713 = vmul.f32 %v2641, %v2685
          %v2714 = vmul.f32 %v2642, %v2685
          %v2715 = vmul.f32 %v2643, %v2685
          %v2716 = vmul.f32 %v2644, %v2685
          %v2717 = vmul.f32 %v2645, %v2685
          %v2718 = vmul.f32 %v2646, %v2685
          %v2719 = vmul.f32 %v2647, %v2685
          %v2720 = vmul.f32 %v2648, %v2685
          %v2721 = vmul.f32 %v2649, %v2685
          %v2722 = vmul.f32 %v2650, %v2685
          %v2723 = vmul.f32 %v2651, %v2685
          %v2724 = vmul.f32 %v2652, %v2685
          %v2725 = vmul.f32 %v2653, %v2685
          %v2726 = vmul.f32 %v2654, %v2685
          %v2727 = vmul.f32 %v2655, %v2685
          %v2728 = vmul.f32 %v2656, %v2685
          %v2729 = vmul.f32 %v2657, %v2685
          %v2730 = vmul.f32 %v2658, %v2685
          %v2731 = vmul.f32 %v2659, %v2685
          %v2732 = vmul.f32 %v2660, %v2685
          %v2733 = vmul.f32 %v2661, %v2685
          %v2734 = vmul.f32 %v2662, %v2685
          %v2735 = vmul.f32 %v2663, %v2685
          %v2736 = vmul.f32 %v2664, %v2685
          %v2737 = vmul.f32 %v2665, %v2685
          %v2738 = vmul.f32 %v2666, %v2685
          %v2739 = vmul.f32 %v2667, %v2685
          %v2740 = vmul.f32 %v2668, %v2685
          %v2741 = vmul.f32 %v2669, %v2685
          %v2742 = vmul.f32 %v2670, %v2685
          %v2743 = vmul.f32 %v2671, %v2685
          %v2744 = vmul.f32 %v2672, %v2685
          %v2745 = vmul.f32 %v2673, %v2685
          %v2746 = vmul.f32 %v2674, %v2685
          %v2747 = vmul.f32 %v2675, %v2685
          %v2748 = vmul.f32 %v2676, %v2685
          %v2749 = vmul.f32 %v2677, %v2685
          %v2750 = vmul.f32 %v2678, %v2685
          %v2751 = vld [vmem:[%s6] sm:$0x1]
          %v2753 = vlaneseq
          %v2754 = vshrl.u32 %v2753, 7
          %v2755 = vsub.s32 0, %v2754
          %v2756 = vrot.slane %v2751, %v2755
          %v2758 = vadd.f32 %v2687, %v2756
          %v2759 = vadd.f32 %v2688, %v2756
          %v2760 = vadd.f32 %v2689, %v2756
          %v2761 = vadd.f32 %v2690, %v2756
          %v2762 = vadd.f32 %v2691, %v2756
          %v2763 = vadd.f32 %v2692, %v2756
          %v2764 = vadd.f32 %v2693, %v2756
          %v2765 = vadd.f32 %v2694, %v2756
          %v2766 = vadd.f32 %v2695, %v2756
          %v2767 = vadd.f32 %v2696, %v2756
          %v2768 = vadd.f32 %v2697, %v2756
          %v2769 = vadd.f32 %v2698, %v2756
          %v2770 = vadd.f32 %v2699, %v2756
          %v2771 = vadd.f32 %v2700, %v2756
          %v2772 = vadd.f32 %v2701, %v2756
          %v2773 = vadd.f32 %v2702, %v2756
          %v2774 = vadd.f32 %v2703, %v2756
          %v2775 = vadd.f32 %v2704, %v2756
          %v2776 = vadd.f32 %v2705, %v2756
          %v2777 = vadd.f32 %v2706, %v2756
          %v2778 = vadd.f32 %v2707, %v2756
          %v2779 = vadd.f32 %v2708, %v2756
          %v2780 = vadd.f32 %v2709, %v2756
          %v2781 = vadd.f32 %v2710, %v2756
          %v2782 = vadd.f32 %v2711, %v2756
          %v2783 = vadd.f32 %v2712, %v2756
          %v2784 = vadd.f32 %v2713, %v2756
          %v2785 = vadd.f32 %v2714, %v2756
          %v2786 = vadd.f32 %v2715, %v2756
          %v2787 = vadd.f32 %v2716, %v2756
          %v2788 = vadd.f32 %v2717, %v2756
          %v2789 = vadd.f32 %v2718, %v2756
          %v2790 = vadd.f32 %v2719, %v2756
          %v2791 = vadd.f32 %v2720, %v2756
          %v2792 = vadd.f32 %v2721, %v2756
          %v2793 = vadd.f32 %v2722, %v2756
          %v2794 = vadd.f32 %v2723, %v2756
          %v2795 = vadd.f32 %v2724, %v2756
          %v2796 = vadd.f32 %v2725, %v2756
          %v2797 = vadd.f32 %v2726, %v2756
          %v2798 = vadd.f32 %v2727, %v2756
          %v2799 = vadd.f32 %v2728, %v2756
          %v2800 = vadd.f32 %v2729, %v2756
          %v2801 = vadd.f32 %v2730, %v2756
          %v2802 = vadd.f32 %v2731, %v2756
          %v2803 = vadd.f32 %v2732, %v2756
          %v2804 = vadd.f32 %v2733, %v2756
          %v2805 = vadd.f32 %v2734, %v2756
          %v2806 = vadd.f32 %v2735, %v2756
          %v2807 = vadd.f32 %v2736, %v2756
          %v2808 = vadd.f32 %v2737, %v2756
          %v2809 = vadd.f32 %v2738, %v2756
          %v2810 = vadd.f32 %v2739, %v2756
          %v2811 = vadd.f32 %v2740, %v2756
          %v2812 = vadd.f32 %v2741, %v2756
          %v2813 = vadd.f32 %v2742, %v2756
          %v2814 = vadd.f32 %v2743, %v2756
          %v2815 = vadd.f32 %v2744, %v2756
          %v2816 = vadd.f32 %v2745, %v2756
          %v2817 = vadd.f32 %v2746, %v2756
          %v2818 = vadd.f32 %v2747, %v2756
          %v2819 = vadd.f32 %v2748, %v2756
          %v2820 = vadd.f32 %v2749, %v2756
          %v2821 = vadd.f32 %v2750, %v2756
          %v2822 = vpack.c.bf16 %v2759, %v2758
          %v2823 = vpack.c.bf16 %v2761, %v2760
          %v2824 = vpack.c.bf16 %v2763, %v2762
          %v2825 = vpack.c.bf16 %v2765, %v2764
          %v2826 = vpack.c.bf16 %v2767, %v2766
          %v2827 = vpack.c.bf16 %v2769, %v2768
          %v2828 = vpack.c.bf16 %v2771, %v2770
          %v2829 = vpack.c.bf16 %v2773, %v2772
          %v2830 = vpack.c.bf16 %v2775, %v2774
          %v2831 = vpack.c.bf16 %v2777, %v2776
          %v2832 = vpack.c.bf16 %v2779, %v2778
          %v2833 = vpack.c.bf16 %v2781, %v2780
          %v2834 = vpack.c.bf16 %v2783, %v2782
          %v2835 = vpack.c.bf16 %v2785, %v2784
          %v2836 = vpack.c.bf16 %v2787, %v2786
          %v2837 = vpack.c.bf16 %v2789, %v2788
          %v2838 = vpack.c.bf16 %v2791, %v2790
          %v2839 = vpack.c.bf16 %v2793, %v2792
          %v2840 = vpack.c.bf16 %v2795, %v2794
          %v2841 = vpack.c.bf16 %v2797, %v2796
          %v2842 = vpack.c.bf16 %v2799, %v2798
          %v2843 = vpack.c.bf16 %v2801, %v2800
          %v2844 = vpack.c.bf16 %v2803, %v2802
          %v2845 = vpack.c.bf16 %v2805, %v2804
          %v2846 = vpack.c.bf16 %v2807, %v2806
          %v2847 = vpack.c.bf16 %v2809, %v2808
          %v2848 = vpack.c.bf16 %v2811, %v2810
          %v2849 = vpack.c.bf16 %v2813, %v2812
          %v2850 = vpack.c.bf16 %v2815, %v2814
          %v2851 = vpack.c.bf16 %v2817, %v2816
          %v2852 = vpack.c.bf16 %v2819, %v2818
          %v2853 = vpack.c.bf16 %v2821, %v2820
          %v2854 = vld [vmem:[%s7] sm:$0xf]
          %v2855 = vld [vmem:[%s7 + $0x4] sm:$0xf]
          %v2856 = vld [vmem:[%s7 + $0x8] sm:$0xf]
          %v2857 = vld [vmem:[%s7 + $0xc] sm:$0xf]
          %v2858 = vld [vmem:[%s7 + $0x10] sm:$0xf]
          %v2859 = vld [vmem:[%s7 + $0x14] sm:$0xf]
          %v2860 = vld [vmem:[%s7 + $0x18] sm:$0xf]
          %v2861 = vld [vmem:[%s7 + $0x1c] sm:$0xf]
          %v2862 = vld [vmem:[%s8] sm:$0x1]
          %v2864 = vlaneseq
          %v2865 = vshrl.u32 %v2864, 7
          %v2866 = vsub.s32 0, %v2865
          %v2867 = vrot.slane %v2862, %v2866
          %v2877 = vunpack.c.l.b16 %v2854
          %v2878 = vunpack.c.l.b16 %v2855
          %v2879 = vunpack.c.l.b16 %v2856
          %v2880 = vunpack.c.l.b16 %v2857
          %v2881 = vunpack.c.l.b16 %v2858
          %v2882 = vunpack.c.l.b16 %v2859
          %v2883 = vunpack.c.l.b16 %v2860
          %v2884 = vunpack.c.l.b16 %v2861
          %v2885 = vpack.c.b16 %v2878, %v2877
          %v2886 = vpack.c.b16 %v2880, %v2879
          %v2887 = vpack.c.b16 %v2882, %v2881
          %v2888 = vpack.c.b16 %v2884, %v2883
          %vm2893 = vcmask 523264
          %v2895 = vsel %vm2893, %v2822, 0
          %v2898 = vsel %vm2893, %v2823, 0
          %v2901 = vsel %vm2893, %v2824, 0
          %v2904 = vsel %vm2893, %v2825, 0
          %v2907 = vsel %vm2893, %v2826, 0
          %v2910 = vsel %vm2893, %v2827, 0
          %v2913 = vsel %vm2893, %v2828, 0
          %v2916 = vsel %vm2893, %v2829, 0
          %v2919 = vsel %vm2893, %v2830, 0
          %v2922 = vsel %vm2893, %v2831, 0
          %v2925 = vsel %vm2893, %v2832, 0
          %v2928 = vsel %vm2893, %v2833, 0
          %v2931 = vsel %vm2893, %v2834, 0
          %v2934 = vsel %vm2893, %v2835, 0
          %v2937 = vsel %vm2893, %v2836, 0
          %v2940 = vsel %vm2893, %v2837, 0
          %v2943 = vsel %vm2893, %v2838, 0
          %v2946 = vsel %vm2893, %v2839, 0
          %v2949 = vsel %vm2893, %v2840, 0
          %v2952 = vsel %vm2893, %v2841, 0
          %v2955 = vsel %vm2893, %v2842, 0
          %v2958 = vsel %vm2893, %v2843, 0
          %v2961 = vsel %vm2893, %v2844, 0
          %v2964 = vsel %vm2893, %v2845, 0
          %v2967 = vsel %vm2893, %v2846, 0
          %v2970 = vsel %vm2893, %v2847, 0
          %v2973 = vsel %vm2893, %v2848, 0
          %v2976 = vsel %vm2893, %v2849, 0
          %v2979 = vsel %vm2893, %v2850, 0
          %v2982 = vsel %vm2893, %v2851, 0
          %v2985 = vsel %vm2893, %v2852, 0
          %v2988 = vsel %vm2893, %v2853, 0
          %2990 = vmatprep.subr.bf16.mxu0 0
          %2991 = vmatpush1.bf16.msra.mxu0 %v2885
          %2992 = vmatprep.subr.bf16.mxu0 0
          %2993 = vmatpush1.bf16.msra.mxu0 %v2886
          %2994 = vmatprep.subr.bf16.mxu0 0
          %2995 = vmatpush1.bf16.msra.mxu0 %v2887
          %2996 = vmatprep.subr.bf16.mxu0 0
          %2997 = vmatpush1.bf16.msra.mxu0 %v2888
          %2998 = vmatprep.subr.bf16.mxu0 0
          %2999 = vmatpush1.bf16.msra.mxu0 0
          %3000 = vmatprep.subr.bf16.mxu0 0
          %3001 = vmatpush1.bf16.msra.mxu0 0
          %3002 = vmatprep.subr.bf16.mxu0 0
          %3003 = vmatpush1.bf16.msra.mxu0 0
          %3004 = vmatprep.subr.bf16.mxu0 0
          %3005 = vmatpush1.bf16.msra.mxu0 0
          %3006 = vmatprep.subr.bf16.mxu0 0
          %3007 = vmatpush1.bf16.msra.mxu0 0
          %3008 = vmatprep.subr.bf16.mxu0 0
          %3009 = vmatpush1.bf16.msra.mxu0 0
          %3010 = vmatprep.subr.bf16.mxu0 0
          %3011 = vmatpush1.bf16.msra.mxu0 0
          %3012 = vmatprep.subr.bf16.mxu0 0
          %3013 = vmatpush1.bf16.msra.mxu0 0
          %3014 = vmatprep.subr.bf16.mxu0 0
          %3015 = vmatpush1.bf16.msra.mxu0 0
          %3016 = vmatprep.subr.bf16.mxu0 0
          %3017 = vmatpush1.bf16.msra.mxu0 0
          %3018 = vmatprep.subr.bf16.mxu0 0
          %3019 = vmatpush1.bf16.msra.mxu0 0
          %3020 = vmatprep.subr.bf16.mxu0 0
          %3021 = vmatpush1.bf16.msra.mxu0 0
          %3022 = vmatprep.mubr.bf16.mxu0 0
          %3023 = vmatmul.mubr.bf16.gmra.mrb[0].mxu0 %v2895
          %v3024 = vpop.f32.mrb[0].mxu0
          %v3025 = vadd.f32 %v2867, %v3024
          %v3026 = vpop.f32.mrb[0].mxu0
          %v3027 = vpop.f32.mrb[0].mxu0
          %v3028 = vadd.f32 %v2867, %v3027
          %v3029 = vpop.f32.mrb[0].mxu0
          %3030 = vmatprep.mubr.bf16.mxu0 0
          %3031 = vmatmul.mubr.bf16.gmra.mrb[0].mxu0 %v2898
          %v3032 = vpop.f32.mrb[0].mxu0
          %v3033 = vadd.f32 %v2867, %v3032
          %v3034 = vpop.f32.mrb[0].mxu0
          %v3035 = vpop.f32.mrb[0].mxu0
          %v3036 = vadd.f32 %v2867, %v3035
          %v3037 = vpop.f32.mrb[0].mxu0
          %3038 = vmatprep.mubr.bf16.mxu0 0
          %3039 = vmatmul.mubr.bf16.gmra.mrb[0].mxu0 %v2901
          %v3040 = vpop.f32.mrb[0].mxu0
          %v3041 = vadd.f32 %v2867, %v3040
          %v3042 = vpop.f32.mrb[0].mxu0
          %v3043 = vpop.f32.mrb[0].mxu0
          %v3044 = vadd.f32 %v2867, %v3043
          %v3045 = vpop.f32.mrb[0].mxu0
          %3046 = vmatprep.mubr.bf16.mxu0 0
          %3047 = vmatmul.mubr.bf16.gmra.mrb[0].mxu0 %v2904
          %v3048 = vpop.f32.mrb[0].mxu0
          %v3049 = vadd.f32 %v2867, %v3048
          %v3050 = vpop.f32.mrb[0].mxu0
          %v3051 = vpop.f32.mrb[0].mxu0
          %v3052 = vadd.f32 %v2867, %v3051
          %v3053 = vpop.f32.mrb[0].mxu0
          %3054 = vmatprep.mubr.bf16.mxu0 0
          %3055 = vmatmul.mubr.bf16.gmra.mrb[0].mxu0 %v2907
          %v3056 = vpop.f32.mrb[0].mxu0
          %v3057 = vadd.f32 %v2867, %v3056
          %v3058 = vpop.f32.mrb[0].mxu0
          %v3059 = vpop.f32.mrb[0].mxu0
          %v3060 = vadd.f32 %v2867, %v3059
          %v3061 = vpop.f32.mrb[0].mxu0
          %3062 = vmatprep.mubr.bf16.mxu0 0
          %3063 = vmatmul.mubr.bf16.gmra.mrb[0].mxu0 %v2910
          %v3064 = vpop.f32.mrb[0].mxu0
          %v3065 = vadd.f32 %v2867, %v3064
          %v3066 = vpop.f32.mrb[0].mxu0
          %v3067 = vpop.f32.mrb[0].mxu0
          %v3068 = vadd.f32 %v2867, %v3067
          %v3069 = vpop.f32.mrb[0].mxu0
          %3070 = vmatprep.mubr.bf16.mxu0 0
          %3071 = vmatmul.mubr.bf16.gmra.mrb[0].mxu0 %v2913
          %v3072 = vpop.f32.mrb[0].mxu0
          %v3073 = vadd.f32 %v2867, %v3072
          %v3074 = vpop.f32.mrb[0].mxu0
          %v3075 = vpop.f32.mrb[0].mxu0
          %v3076 = vadd.f32 %v2867, %v3075
          %v3077 = vpop.f32.mrb[0].mxu0
          %3078 = vmatprep.mubr.bf16.mxu0 0
          %3079 = vmatmul.mubr.bf16.gmra.mrb[0].mxu0 %v2916
          %v3080 = vpop.f32.mrb[0].mxu0
          %v3081 = vadd.f32 %v2867, %v3080
          %v3082 = vpop.f32.mrb[0].mxu0
          %v3083 = vpop.f32.mrb[0].mxu0
          %v3084 = vadd.f32 %v2867, %v3083
          %v3085 = vpop.f32.mrb[0].mxu0
          %3086 = vmatprep.mubr.bf16.mxu0 0
          %3087 = vmatmul.mubr.bf16.gmra.mrb[0].mxu0 %v2919
          %v3088 = vpop.f32.mrb[0].mxu0
          %v3089 = vadd.f32 %v2867, %v3088
          %v3090 = vpop.f32.mrb[0].mxu0
          %v3091 = vpop.f32.mrb[0].mxu0
          %v3092 = vadd.f32 %v2867, %v3091
          %v3093 = vpop.f32.mrb[0].mxu0
          %3094 = vmatprep.mubr.bf16.mxu0 0
          %3095 = vmatmul.mubr.bf16.gmra.mrb[0].mxu0 %v2922
          %v3096 = vpop.f32.mrb[0].mxu0
          %v3097 = vadd.f32 %v2867, %v3096
          %v3098 = vpop.f32.mrb[0].mxu0
          %v3099 = vpop.f32.mrb[0].mxu0
          %v3100 = vadd.f32 %v2867, %v3099
          %v3101 = vpop.f32.mrb[0].mxu0
          %3102 = vmatprep.mubr.bf16.mxu0 0
          %3103 = vmatmul.mubr.bf16.gmra.mrb[0].mxu0 %v2925
          %v3104 = vpop.f32.mrb[0].mxu0
          %v3105 = vadd.f32 %v2867, %v3104
          %v3106 = vpop.f32.mrb[0].mxu0
          %v3107 = vpop.f32.mrb[0].mxu0
          %v3108 = vadd.f32 %v2867, %v3107
          %v3109 = vpop.f32.mrb[0].mxu0
          %3110 = vmatprep.mubr.bf16.mxu0 0
          %3111 = vmatmul.mubr.bf16.gmra.mrb[0].mxu0 %v2928
          %v3112 = vpop.f32.mrb[0].mxu0
          %v3113 = vadd.f32 %v2867, %v3112
          %v3114 = vpop.f32.mrb[0].mxu0
          %v3115 = vpop.f32.mrb[0].mxu0
          %v3116 = vadd.f32 %v2867, %v3115
          %v3117 = vpop.f32.mrb[0].mxu0
          %3118 = vmatprep.mubr.bf16.mxu0 0
          %3119 = vmatmul.mubr.bf16.gmra.mrb[0].mxu0 %v2931
          %v3120 = vpop.f32.mrb[0].mxu0
          %v3121 = vadd.f32 %v2867, %v3120
          %v3122 = vpop.f32.mrb[0].mxu0
          %v3123 = vpop.f32.mrb[0].mxu0
          %v3124 = vadd.f32 %v2867, %v3123
          %v3125 = vpop.f32.mrb[0].mxu0
          %3126 = vmatprep.mubr.bf16.mxu0 0
          %3127 = vmatmul.mubr.bf16.gmra.mrb[0].mxu0 %v2934
          %v3128 = vpop.f32.mrb[0].mxu0
          %v3129 = vadd.f32 %v2867, %v3128
          %v3130 = vpop.f32.mrb[0].mxu0
          %v3131 = vpop.f32.mrb[0].mxu0
          %v3132 = vadd.f32 %v2867, %v3131
          %v3133 = vpop.f32.mrb[0].mxu0
          %3134 = vmatprep.mubr.bf16.mxu0 0
          %3135 = vmatmul.mubr.bf16.gmra.mrb[0].mxu0 %v2937
          %v3136 = vpop.f32.mrb[0].mxu0
          %v3137 = vadd.f32 %v2867, %v3136
          %v3138 = vpop.f32.mrb[0].mxu0
          %v3139 = vpop.f32.mrb[0].mxu0
          %v3140 = vadd.f32 %v2867, %v3139
          %v3141 = vpop.f32.mrb[0].mxu0
          %3142 = vmatprep.mubr.bf16.mxu0 0
          %3143 = vmatmul.mubr.bf16.gmra.mrb[0].mxu0 %v2940
          %v3144 = vpop.f32.mrb[0].mxu0
          %v3145 = vadd.f32 %v2867, %v3144
          %v3146 = vpop.f32.mrb[0].mxu0
          %v3147 = vpop.f32.mrb[0].mxu0
          %v3148 = vadd.f32 %v2867, %v3147
          %v3149 = vpop.f32.mrb[0].mxu0
          %3150 = vmatprep.mubr.bf16.mxu0 0
          %3151 = vmatmul.mubr.bf16.gmra.mrb[0].mxu0 %v2943
          %v3152 = vpop.f32.mrb[0].mxu0
          %v3153 = vadd.f32 %v2867, %v3152
          %v3154 = vpop.f32.mrb[0].mxu0
          %v3155 = vpop.f32.mrb[0].mxu0
          %v3156 = vadd.f32 %v2867, %v3155
          %v3157 = vpop.f32.mrb[0].mxu0
          %3158 = vmatprep.mubr.bf16.mxu0 0
          %3159 = vmatmul.mubr.bf16.gmra.mrb[0].mxu0 %v2946
          %v3160 = vpop.f32.mrb[0].mxu0
          %v3161 = vadd.f32 %v2867, %v3160
          %v3162 = vpop.f32.mrb[0].mxu0
          %v3163 = vpop.f32.mrb[0].mxu0
          %v3164 = vadd.f32 %v2867, %v3163
          %v3165 = vpop.f32.mrb[0].mxu0
          %3166 = vmatprep.mubr.bf16.mxu0 0
          %3167 = vmatmul.mubr.bf16.gmra.mrb[0].mxu0 %v2949
          %v3168 = vpop.f32.mrb[0].mxu0
          %v3169 = vadd.f32 %v2867, %v3168
          %v3170 = vpop.f32.mrb[0].mxu0
          %v3171 = vpop.f32.mrb[0].mxu0
          %v3172 = vadd.f32 %v2867, %v3171
          %v3173 = vpop.f32.mrb[0].mxu0
          %3174 = vmatprep.mubr.bf16.mxu0 0
          %3175 = vmatmul.mubr.bf16.gmra.mrb[0].mxu0 %v2952
          %v3176 = vpop.f32.mrb[0].mxu0
          %v3177 = vadd.f32 %v2867, %v3176
          %v3178 = vpop.f32.mrb[0].mxu0
          %v3179 = vpop.f32.mrb[0].mxu0
          %v3180 = vadd.f32 %v2867, %v3179
          %v3181 = vpop.f32.mrb[0].mxu0
          %3182 = vmatprep.mubr.bf16.mxu0 0
          %3183 = vmatmul.mubr.bf16.gmra.mrb[0].mxu0 %v2955
          %v3184 = vpop.f32.mrb[0].mxu0
          %v3185 = vadd.f32 %v2867, %v3184
          %v3186 = vpop.f32.mrb[0].mxu0
          %v3187 = vpop.f32.mrb[0].mxu0
          %v3188 = vadd.f32 %v2867, %v3187
          %v3189 = vpop.f32.mrb[0].mxu0
          %3190 = vmatprep.mubr.bf16.mxu0 0
          %3191 = vmatmul.mubr.bf16.gmra.mrb[0].mxu0 %v2958
          %v3192 = vpop.f32.mrb[0].mxu0
          %v3193 = vadd.f32 %v2867, %v3192
          %v3194 = vpop.f32.mrb[0].mxu0
          %v3195 = vpop.f32.mrb[0].mxu0
          %v3196 = vadd.f32 %v2867, %v3195
          %v3197 = vpop.f32.mrb[0].mxu0
          %3198 = vmatprep.mubr.bf16.mxu0 0
          %3199 = vmatmul.mubr.bf16.gmra.mrb[0].mxu0 %v2961
          %v3200 = vpop.f32.mrb[0].mxu0
          %v3201 = vadd.f32 %v2867, %v3200
          %v3202 = vpop.f32.mrb[0].mxu0
          %v3203 = vpop.f32.mrb[0].mxu0
          %v3204 = vadd.f32 %v2867, %v3203
          %v3205 = vpop.f32.mrb[0].mxu0
          %3206 = vmatprep.mubr.bf16.mxu0 0
          %3207 = vmatmul.mubr.bf16.gmra.mrb[0].mxu0 %v2964
          %v3208 = vpop.f32.mrb[0].mxu0
          %v3209 = vadd.f32 %v2867, %v3208
          %v3210 = vpop.f32.mrb[0].mxu0
          %v3211 = vpop.f32.mrb[0].mxu0
          %v3212 = vadd.f32 %v2867, %v3211
          %v3213 = vpop.f32.mrb[0].mxu0
          %3214 = vmatprep.mubr.bf16.mxu0 0
          %3215 = vmatmul.mubr.bf16.gmra.mrb[0].mxu0 %v2967
          %v3216 = vpop.f32.mrb[0].mxu0
          %v3217 = vadd.f32 %v2867, %v3216
          %v3218 = vpop.f32.mrb[0].mxu0
          %v3219 = vpop.f32.mrb[0].mxu0
          %v3220 = vadd.f32 %v2867, %v3219
          %v3221 = vpop.f32.mrb[0].mxu0
          %3222 = vmatprep.mubr.bf16.mxu0 0
          %3223 = vmatmul.mubr.bf16.gmra.mrb[0].mxu0 %v2970
          %v3224 = vpop.f32.mrb[0].mxu0
          %v3225 = vadd.f32 %v2867, %v3224
          %v3226 = vpop.f32.mrb[0].mxu0
          %v3227 = vpop.f32.mrb[0].mxu0
          %v3228 = vadd.f32 %v2867, %v3227
          %v3229 = vpop.f32.mrb[0].mxu0
          %3230 = vmatprep.mubr.bf16.mxu0 0
          %3231 = vmatmul.mubr.bf16.gmra.mrb[0].mxu0 %v2973
          %v3232 = vpop.f32.mrb[0].mxu0
          %v3233 = vadd.f32 %v2867, %v3232
          %v3234 = vpop.f32.mrb[0].mxu0
          %v3235 = vpop.f32.mrb[0].mxu0
          %v3236 = vadd.f32 %v2867, %v3235
          %v3237 = vpop.f32.mrb[0].mxu0
          %3238 = vmatprep.mubr.bf16.mxu0 0
          %3239 = vmatmul.mubr.bf16.gmra.mrb[0].mxu0 %v2976
          %v3240 = vpop.f32.mrb[0].mxu0
          %v3241 = vadd.f32 %v2867, %v3240
          %v3242 = vpop.f32.mrb[0].mxu0
          %v3243 = vpop.f32.mrb[0].mxu0
          %v3244 = vadd.f32 %v2867, %v3243
          %v3245 = vpop.f32.mrb[0].mxu0
          %3246 = vmatprep.mubr.bf16.mxu0 0
          %3247 = vmatmul.mubr.bf16.gmra.mrb[0].mxu0 %v2979
          %v3248 = vpop.f32.mrb[0].mxu0
          %v3249 = vadd.f32 %v2867, %v3248
          %v3250 = vpop.f32.mrb[0].mxu0
          %v3251 = vpop.f32.mrb[0].mxu0
          %v3252 = vadd.f32 %v2867, %v3251
          %v3253 = vpop.f32.mrb[0].mxu0
          %3254 = vmatprep.mubr.bf16.mxu0 0
          %3255 = vmatmul.mubr.bf16.gmra.mrb[0].mxu0 %v2982
          %v3256 = vpop.f32.mrb[0].mxu0
          %v3257 = vadd.f32 %v2867, %v3256
          %v3258 = vpop.f32.mrb[0].mxu0
          %v3259 = vpop.f32.mrb[0].mxu0
          %v3260 = vadd.f32 %v2867, %v3259
          %v3261 = vpop.f32.mrb[0].mxu0
          %3262 = vmatprep.mubr.bf16.mxu0 0
          %3263 = vmatmul.mubr.bf16.gmra.mrb[0].mxu0 %v2985
          %v3264 = vpop.f32.mrb[0].mxu0
          %v3265 = vadd.f32 %v2867, %v3264
          %v3266 = vpop.f32.mrb[0].mxu0
          %v3267 = vpop.f32.mrb[0].mxu0
          %v3268 = vadd.f32 %v2867, %v3267
          %v3269 = vpop.f32.mrb[0].mxu0
          %3270 = vmatprep.mubr.bf16.mxu0 0
          %3271 = vmatmul.mubr.bf16.gmra.mrb[0].mxu0 %v2988
          %v3272 = vpop.f32.mrb[0].mxu0
          %v3273 = vadd.f32 %v2867, %v3272
          %v3274 = vpop.f32.mrb[0].mxu0
          %v3275 = vpop.f32.mrb[0].mxu0
          %v3276 = vadd.f32 %v2867, %v3275
          %v3277 = vpop.f32.mrb[0].mxu0
          %3278 = vdwg.mxu0
          %v3279 = vmax.f32 %v3025, 0.0
          %v3280 = vmax.f32 %v3028, 0.0
          %v3281 = vmax.f32 %v3033, 0.0
          %v3282 = vmax.f32 %v3036, 0.0
          %v3283 = vmax.f32 %v3041, 0.0
          %v3284 = vmax.f32 %v3044, 0.0
          %v3285 = vmax.f32 %v3049, 0.0
          %v3286 = vmax.f32 %v3052, 0.0
          %v3287 = vmax.f32 %v3057, 0.0
          %v3288 = vmax.f32 %v3060, 0.0
          %v3289 = vmax.f32 %v3065, 0.0
          %v3290 = vmax.f32 %v3068, 0.0
          %v3291 = vmax.f32 %v3073, 0.0
          %v3292 = vmax.f32 %v3076, 0.0
          %v3293 = vmax.f32 %v3081, 0.0
          %v3294 = vmax.f32 %v3084, 0.0
          %v3295 = vmax.f32 %v3089, 0.0
          %v3296 = vmax.f32 %v3092, 0.0
          %v3297 = vmax.f32 %v3097, 0.0
          %v3298 = vmax.f32 %v3100, 0.0
          %v3299 = vmax.f32 %v3105, 0.0
          %v3300 = vmax.f32 %v3108, 0.0
          %v3301 = vmax.f32 %v3113, 0.0
          %v3302 = vmax.f32 %v3116, 0.0
          %v3303 = vmax.f32 %v3121, 0.0
          %v3304 = vmax.f32 %v3124, 0.0
          %v3305 = vmax.f32 %v3129, 0.0
          %v3306 = vmax.f32 %v3132, 0.0
          %v3307 = vmax.f32 %v3137, 0.0
          %v3308 = vmax.f32 %v3140, 0.0
          %v3309 = vmax.f32 %v3145, 0.0
          %v3310 = vmax.f32 %v3148, 0.0
          %v3311 = vmax.f32 %v3153, 0.0
          %v3312 = vmax.f32 %v3156, 0.0
          %v3313 = vmax.f32 %v3161, 0.0
          %v3314 = vmax.f32 %v3164, 0.0
          %v3315 = vmax.f32 %v3169, 0.0
          %v3316 = vmax.f32 %v3172, 0.0
          %v3317 = vmax.f32 %v3177, 0.0
          %v3318 = vmax.f32 %v3180, 0.0
          %v3319 = vmax.f32 %v3185, 0.0
          %v3320 = vmax.f32 %v3188, 0.0
          %v3321 = vmax.f32 %v3193, 0.0
          %v3322 = vmax.f32 %v3196, 0.0
          %v3323 = vmax.f32 %v3201, 0.0
          %v3324 = vmax.f32 %v3204, 0.0
          %v3325 = vmax.f32 %v3209, 0.0
          %v3326 = vmax.f32 %v3212, 0.0
          %v3327 = vmax.f32 %v3217, 0.0
          %v3328 = vmax.f32 %v3220, 0.0
          %v3329 = vmax.f32 %v3225, 0.0
          %v3330 = vmax.f32 %v3228, 0.0
          %v3331 = vmax.f32 %v3233, 0.0
          %v3332 = vmax.f32 %v3236, 0.0
          %v3333 = vmax.f32 %v3241, 0.0
          %v3334 = vmax.f32 %v3244, 0.0
          %v3335 = vmax.f32 %v3249, 0.0
          %v3336 = vmax.f32 %v3252, 0.0
          %v3337 = vmax.f32 %v3257, 0.0
          %v3338 = vmax.f32 %v3260, 0.0
          %v3339 = vmax.f32 %v3265, 0.0
          %v3340 = vmax.f32 %v3268, 0.0
          %v3341 = vmax.f32 %v3273, 0.0
          %v3342 = vmax.f32 %v3276, 0.0
          %v3343 = vpack.c.bf16 %v3280, %v3279
          %v3344 = vpack.c.bf16 %v3282, %v3281
          %v3345 = vpack.c.bf16 %v3284, %v3283
          %v3346 = vpack.c.bf16 %v3286, %v3285
          %v3347 = vpack.c.bf16 %v3288, %v3287
          %v3348 = vpack.c.bf16 %v3290, %v3289
          %v3349 = vpack.c.bf16 %v3292, %v3291
          %v3350 = vpack.c.bf16 %v3294, %v3293
          %v3351 = vpack.c.bf16 %v3296, %v3295
          %v3352 = vpack.c.bf16 %v3298, %v3297
          %v3353 = vpack.c.bf16 %v3300, %v3299
          %v3354 = vpack.c.bf16 %v3302, %v3301
          %v3355 = vpack.c.bf16 %v3304, %v3303
          %v3356 = vpack.c.bf16 %v3306, %v3305
          %v3357 = vpack.c.bf16 %v3308, %v3307
          %v3358 = vpack.c.bf16 %v3310, %v3309
          %v3359 = vpack.c.bf16 %v3312, %v3311
          %v3360 = vpack.c.bf16 %v3314, %v3313
          %v3361 = vpack.c.bf16 %v3316, %v3315
          %v3362 = vpack.c.bf16 %v3318, %v3317
          %v3363 = vpack.c.bf16 %v3320, %v3319
          %v3364 = vpack.c.bf16 %v3322, %v3321
          %v3365 = vpack.c.bf16 %v3324, %v3323
          %v3366 = vpack.c.bf16 %v3326, %v3325
          %v3367 = vpack.c.bf16 %v3328, %v3327
          %v3368 = vpack.c.bf16 %v3330, %v3329
          %v3369 = vpack.c.bf16 %v3332, %v3331
          %v3370 = vpack.c.bf16 %v3334, %v3333
          %v3371 = vpack.c.bf16 %v3336, %v3335
          %v3372 = vpack.c.bf16 %v3338, %v3337
          %v3373 = vpack.c.bf16 %v3340, %v3339
          %v3374 = vpack.c.bf16 %v3342, %v3341
          %v3375 = vld [vmem:[#allocation9] sm:$0xff]
          %v3376 = vld [vmem:[#allocation9 + $0x8] sm:$0xff]
          %v3377 = vld [vmem:[#allocation9 + $0x10] sm:$0xff]
          %v3378 = vld [vmem:[#allocation9 + $0x18] sm:$0xff]
          %v3379 = vld [vmem:[#allocation9 + $0x20] sm:$0xff]
          %v3380 = vld [vmem:[#allocation9 + $0x28] sm:$0xff]
          %v3381 = vld [vmem:[#allocation9 + $0x30] sm:$0xff]
          %v3382 = vld [vmem:[#allocation9 + $0x38] sm:$0xff]
          %v3383 = vld [vmem:[#allocation9 + $0x40] sm:$0xff]
          %v3384 = vld [vmem:[#allocation9 + $0x48] sm:$0xff]
          %v3385 = vld [vmem:[#allocation9 + $0x50] sm:$0xff]
          %v3386 = vld [vmem:[#allocation9 + $0x58] sm:$0xff]
          %v3387 = vld [vmem:[#allocation9 + $0x60] sm:$0xff]
          %v3388 = vld [vmem:[#allocation9 + $0x68] sm:$0xff]
          %v3389 = vld [vmem:[#allocation9 + $0x70] sm:$0xff]
          %v3390 = vld [vmem:[#allocation9 + $0x78] sm:$0xff]
          %v3391 = vld [vmem:[#allocation9 + $0x80] sm:$0xff]
          %v3392 = vld [vmem:[#allocation9 + $0x88] sm:$0xff]
          %v3393 = vld [vmem:[#allocation9 + $0x90] sm:$0xff]
          %v3394 = vld [vmem:[#allocation9 + $0x98] sm:$0xff]
          %v3395 = vld [vmem:[#allocation9 + $0xa0] sm:$0xff]
          %v3396 = vld [vmem:[#allocation9 + $0xa8] sm:$0xff]
          %v3397 = vld [vmem:[#allocation9 + $0xb0] sm:$0xff]
          %v3398 = vld [vmem:[#allocation9 + $0xb8] sm:$0xff]
          %v3399 = vld [vmem:[#allocation9 + $0xc0] sm:$0xff]
          %v3400 = vld [vmem:[#allocation9 + $0xc8] sm:$0xff]
          %v3401 = vld [vmem:[#allocation9 + $0xd0] sm:$0xff]
          %v3402 = vld [vmem:[#allocation9 + $0xd8] sm:$0xff]
          %v3403 = vld [vmem:[#allocation9 + $0xe0] sm:$0xff]
          %v3404 = vld [vmem:[#allocation9 + $0xe8] sm:$0xff]
          %v3405 = vld [vmem:[#allocation9 + $0xf0] sm:$0xff]
          %v3406 = vld [vmem:[#allocation9 + $0xf8] sm:$0xff]
          %v3407 = vld [vmem:[%s10] sm:$0xf]
          %v3409 = vlaneseq
          %v3410 = vshrl.u32 %v3409, 7
          %v3411 = vsub.s32 0, %v3410
          %v3412 = vrot.slane %v3407, %v3411
          %v3413 = vlaneseq
          %v3414 = vshrl.u32 %v3413, 7
          %v3415 = vsub.s32 1, %v3414
          %v3416 = vrot.slane %v3407, %v3415
          %v3417 = vlaneseq
          %v3418 = vshrl.u32 %v3417, 7
          %v3419 = vsub.s32 2, %v3418
          %v3420 = vrot.slane %v3407, %v3419
          %v3421 = vlaneseq
          %v3422 = vshrl.u32 %v3421, 7
          %v3423 = vsub.s32 3, %v3422
          %v3424 = vrot.slane %v3407, %v3423
          %v3461 = vunpack.c.l.b16 %v3375
          %v3462 = vunpack.c.h.b16 %v3375
          %v3463 = vunpack.c.l.b16 %v3376
          %v3464 = vunpack.c.h.b16 %v3376
          %v3465 = vunpack.c.l.b16 %v3377
          %v3466 = vunpack.c.h.b16 %v3377
          %v3467 = vunpack.c.l.b16 %v3378
          %v3468 = vunpack.c.h.b16 %v3378
          %v3469 = vunpack.c.l.b16 %v3379
          %v3470 = vunpack.c.h.b16 %v3379
          %v3471 = vunpack.c.l.b16 %v3380
          %v3472 = vunpack.c.h.b16 %v3380
          %v3473 = vunpack.c.l.b16 %v3381
          %v3474 = vunpack.c.h.b16 %v3381
          %v3475 = vunpack.c.l.b16 %v3382
          %v3476 = vunpack.c.h.b16 %v3382
          %v3477 = vunpack.c.l.b16 %v3383
          %v3478 = vunpack.c.h.b16 %v3383
          %v3479 = vunpack.c.l.b16 %v3384
          %v3480 = vunpack.c.h.b16 %v3384
          %v3481 = vunpack.c.l.b16 %v3385
          %v3482 = vunpack.c.h.b16 %v3385
          %v3483 = vunpack.c.l.b16 %v3386
          %v3484 = vunpack.c.h.b16 %v3386
          %v3485 = vunpack.c.l.b16 %v3387
          %v3486 = vunpack.c.h.b16 %v3387
          %v3487 = vunpack.c.l.b16 %v3388
          %v3488 = vunpack.c.h.b16 %v3388
          %v3489 = vunpack.c.l.b16 %v3389
          %v3490 = vunpack.c.h.b16 %v3389
          %v3491 = vunpack.c.l.b16 %v3390
          %v3492 = vunpack.c.h.b16 %v3390
          %v3493 = vunpack.c.l.b16 %v3391
          %v3494 = vunpack.c.h.b16 %v3391
          %v3495 = vunpack.c.l.b16 %v3392
          %v3496 = vunpack.c.h.b16 %v3392
          %v3497 = vunpack.c.l.b16 %v3393
          %v3498 = vunpack.c.h.b16 %v3393
          %v3499 = vunpack.c.l.b16 %v3394
          %v3500 = vunpack.c.h.b16 %v3394
          %v3501 = vunpack.c.l.b16 %v3395
          %v3502 = vunpack.c.h.b16 %v3395
          %v3503 = vunpack.c.l.b16 %v3396
          %v3504 = vunpack.c.h.b16 %v3396
          %v3505 = vunpack.c.l.b16 %v3397
          %v3506 = vunpack.c.h.b16 %v3397
          %v3507 = vunpack.c.l.b16 %v3398
          %v3508 = vunpack.c.h.b16 %v3398
          %v3509 = vunpack.c.l.b16 %v3399
          %v3510 = vunpack.c.h.b16 %v3399
          %v3511 = vunpack.c.l.b16 %v3400
          %v3512 = vunpack.c.h.b16 %v3400
          %v3513 = vunpack.c.l.b16 %v3401
          %v3514 = vunpack.c.h.b16 %v3401
          %v3515 = vunpack.c.l.b16 %v3402
          %v3516 = vunpack.c.h.b16 %v3402
          %v3517 = vunpack.c.l.b16 %v3403
          %v3518 = vunpack.c.h.b16 %v3403
          %v3519 = vunpack.c.l.b16 %v3404
          %v3520 = vunpack.c.h.b16 %v3404
          %v3521 = vunpack.c.l.b16 %v3405
          %v3522 = vunpack.c.h.b16 %v3405
          %v3523 = vunpack.c.l.b16 %v3406
          %v3524 = vunpack.c.h.b16 %v3406
          %v3525 = vpack.c.b16 %v3465, %v3461
          %v3526 = vpack.c.b16 %v3466, %v3462
          %v3527 = vpack.c.b16 %v3467, %v3463
          %v3528 = vpack.c.b16 %v3468, %v3464
          %v3529 = vpack.c.b16 %v3473, %v3469
          %v3530 = vpack.c.b16 %v3474, %v3470
          %v3531 = vpack.c.b16 %v3475, %v3471
          %v3532 = vpack.c.b16 %v3476, %v3472
          %v3533 = vpack.c.b16 %v3481, %v3477
          %v3534 = vpack.c.b16 %v3482, %v3478
          %v3535 = vpack.c.b16 %v3483, %v3479
          %v3536 = vpack.c.b16 %v3484, %v3480
          %v3537 = vpack.c.b16 %v3489, %v3485
          %v3538 = vpack.c.b16 %v3490, %v3486
          %v3539 = vpack.c.b16 %v3491, %v3487
          %v3540 = vpack.c.b16 %v3492, %v3488
          %v3541 = vpack.c.b16 %v3497, %v3493
          %v3542 = vpack.c.b16 %v3498, %v3494
          %v3543 = vpack.c.b16 %v3499, %v3495
          %v3544 = vpack.c.b16 %v3500, %v3496
          %v3545 = vpack.c.b16 %v3505, %v3501
          %v3546 = vpack.c.b16 %v3506, %v3502
          %v3547 = vpack.c.b16 %v3507, %v3503
          %v3548 = vpack.c.b16 %v3508, %v3504
          %v3549 = vpack.c.b16 %v3513, %v3509
          %v3550 = vpack.c.b16 %v3514, %v3510
          %v3551 = vpack.c.b16 %v3515, %v3511
          %v3552 = vpack.c.b16 %v3516, %v3512
          %v3553 = vpack.c.b16 %v3521, %v3517
          %v3554 = vpack.c.b16 %v3522, %v3518
          %v3555 = vpack.c.b16 %v3523, %v3519
          %v3556 = vpack.c.b16 %v3524, %v3520
          %3589 = vmatprep.subr.bf16.mxu0 %v3526
          %3590 = vmatpush1.bf16.msra.mxu0 %v3525
          %3591 = vmatprep.subr.bf16.mxu0 %v3530
          %3592 = vmatpush1.bf16.msra.mxu0 %v3529
          %3593 = vmatprep.subr.bf16.mxu0 %v3534
          %3594 = vmatpush1.bf16.msra.mxu0 %v3533
          %3595 = vmatprep.subr.bf16.mxu0 %v3538
          %3596 = vmatpush1.bf16.msra.mxu0 %v3537
          %3597 = vmatprep.subr.bf16.mxu0 %v3542
          %3598 = vmatpush1.bf16.msra.mxu0 %v3541
          %3599 = vmatprep.subr.bf16.mxu0 %v3546
          %3600 = vmatpush1.bf16.msra.mxu0 %v3545
          %3601 = vmatprep.subr.bf16.mxu0 %v3550
          %3602 = vmatpush1.bf16.msra.mxu0 %v3549
          %3603 = vmatprep.subr.bf16.mxu0 %v3554
          %3604 = vmatpush1.bf16.msra.mxu0 %v3553
          %3605 = vmatprep.subr.bf16.mxu0 0
          %3606 = vmatpush1.bf16.msra.mxu0 0
          %3607 = vmatprep.subr.bf16.mxu0 0
          %3608 = vmatpush1.bf16.msra.mxu0 0
          %3609 = vmatprep.subr.bf16.mxu0 0
          %3610 = vmatpush1.bf16.msra.mxu0 0
          %3611 = vmatprep.subr.bf16.mxu0 0
          %3612 = vmatpush1.bf16.msra.mxu0 0
          %3613 = vmatprep.subr.bf16.mxu0 0
          %3614 = vmatpush1.bf16.msra.mxu0 0
          %3615 = vmatprep.subr.bf16.mxu0 0
          %3616 = vmatpush1.bf16.msra.mxu0 0
          %3617 = vmatprep.subr.bf16.mxu0 0
          %3618 = vmatpush1.bf16.msra.mxu0 0
          %3619 = vmatprep.subr.bf16.mxu0 0
          %3620 = vmatpush1.bf16.msra.mxu0 0
          %3621 = vmatprep.mubr.bf16.mxu0 0
          %3622 = vmatmul.mubr.bf16.gmra.mrb[0].mxu0 %v3343
          %v3623 = vpop.f32.mrb[0].mxu0
          %v3624 = vadd.f32 %v3412, %v3623
          %v3625 = vpop.f32.mrb[0].mxu0
          %v3626 = vadd.f32 %v3416, %v3625
          %v3627 = vpop.f32.mrb[0].mxu0
          %v3628 = vadd.f32 %v3412, %v3627
          %v3629 = vpop.f32.mrb[0].mxu0
          %v3630 = vadd.f32 %v3416, %v3629
          %3631 = vmatprep.mubr.bf16.mxu0 0
          %3632 = vmatmul.mubr.bf16.gmra.mrb[0].mxu0 %v3344
          %v3633 = vpop.f32.mrb[0].mxu0
          %v3634 = vadd.f32 %v3412, %v3633
          %v3635 = vpop.f32.mrb[0].mxu0
          %v3636 = vadd.f32 %v3416, %v3635
          %v3637 = vpop.f32.mrb[0].mxu0
          %v3638 = vadd.f32 %v3412, %v3637
          %v3639 = vpop.f32.mrb[0].mxu0
          %v3640 = vadd.f32 %v3416, %v3639
          %3641 = vmatprep.mubr.bf16.mxu0 0
          %3642 = vmatmul.mubr.bf16.gmra.mrb[0].mxu0 %v3345
          %v3643 = vpop.f32.mrb[0].mxu0
          %v3644 = vadd.f32 %v3412, %v3643
          %v3645 = vpop.f32.mrb[0].mxu0
          %v3646 = vadd.f32 %v3416, %v3645
          %v3647 = vpop.f32.mrb[0].mxu0
          %v3648 = vadd.f32 %v3412, %v3647
          %v3649 = vpop.f32.mrb[0].mxu0
          %v3650 = vadd.f32 %v3416, %v3649
          %3651 = vmatprep.mubr.bf16.mxu0 0
          %3652 = vmatmul.mubr.bf16.gmra.mrb[0].mxu0 %v3346
          %v3653 = vpop.f32.mrb[0].mxu0
          %v3654 = vadd.f32 %v3412, %v3653
          %v3655 = vpop.f32.mrb[0].mxu0
          %v3656 = vadd.f32 %v3416, %v3655
          %v3657 = vpop.f32.mrb[0].mxu0
          %v3658 = vadd.f32 %v3412, %v3657
          %v3659 = vpop.f32.mrb[0].mxu0
          %v3660 = vadd.f32 %v3416, %v3659
          %3661 = vmatprep.mubr.bf16.mxu0 0
          %3662 = vmatmul.mubr.bf16.gmra.mrb[0].mxu0 %v3347
          %v3663 = vpop.f32.mrb[0].mxu0
          %v3664 = vadd.f32 %v3412, %v3663
          %v3665 = vpop.f32.mrb[0].mxu0
          %v3666 = vadd.f32 %v3416, %v3665
          %v3667 = vpop.f32.mrb[0].mxu0
          %v3668 = vadd.f32 %v3412, %v3667
          %v3669 = vpop.f32.mrb[0].mxu0
          %v3670 = vadd.f32 %v3416, %v3669
          %3671 = vmatprep.mubr.bf16.mxu0 0
          %3672 = vmatmul.mubr.bf16.gmra.mrb[0].mxu0 %v3348
          %v3673 = vpop.f32.mrb[0].mxu0
          %v3674 = vadd.f32 %v3412, %v3673
          %v3675 = vpop.f32.mrb[0].mxu0
          %v3676 = vadd.f32 %v3416, %v3675
          %v3677 = vpop.f32.mrb[0].mxu0
          %v3678 = vadd.f32 %v3412, %v3677
          %v3679 = vpop.f32.mrb[0].mxu0
          %v3680 = vadd.f32 %v3416, %v3679
          %3681 = vmatprep.mubr.bf16.mxu0 0
          %3682 = vmatmul.mubr.bf16.gmra.mrb[0].mxu0 %v3349
          %v3683 = vpop.f32.mrb[0].mxu0
          %v3684 = vadd.f32 %v3412, %v3683
          %v3685 = vpop.f32.mrb[0].mxu0
          %v3686 = vadd.f32 %v3416, %v3685
          %v3687 = vpop.f32.mrb[0].mxu0
          %v3688 = vadd.f32 %v3412, %v3687
          %v3689 = vpop.f32.mrb[0].mxu0
          %v3690 = vadd.f32 %v3416, %v3689
          %3691 = vmatprep.mubr.bf16.mxu0 0
          %3692 = vmatmul.mubr.bf16.gmra.mrb[0].mxu0 %v3350
          %v3693 = vpop.f32.mrb[0].mxu0
          %v3694 = vadd.f32 %v3412, %v3693
          %v3695 = vpop.f32.mrb[0].mxu0
          %v3696 = vadd.f32 %v3416, %v3695
          %v3697 = vpop.f32.mrb[0].mxu0
          %v3698 = vadd.f32 %v3412, %v3697
          %v3699 = vpop.f32.mrb[0].mxu0
          %v3700 = vadd.f32 %v3416, %v3699
          %3701 = vmatprep.mubr.bf16.mxu0 0
          %3702 = vmatmul.mubr.bf16.gmra.mrb[0].mxu0 %v3351
          %v3703 = vpop.f32.mrb[0].mxu0
          %v3704 = vadd.f32 %v3412, %v3703
          %v3705 = vpop.f32.mrb[0].mxu0
          %v3706 = vadd.f32 %v3416, %v3705
          %v3707 = vpop.f32.mrb[0].mxu0
          %v3708 = vadd.f32 %v3412, %v3707
          %v3709 = vpop.f32.mrb[0].mxu0
          %v3710 = vadd.f32 %v3416, %v3709
          %3711 = vmatprep.mubr.bf16.mxu0 0
          %3712 = vmatmul.mubr.bf16.gmra.mrb[0].mxu0 %v3352
          %v3713 = vpop.f32.mrb[0].mxu0
          %v3714 = vadd.f32 %v3412, %v3713
          %v3715 = vpop.f32.mrb[0].mxu0
          %v3716 = vadd.f32 %v3416, %v3715
          %v3717 = vpop.f32.mrb[0].mxu0
          %v3718 = vadd.f32 %v3412, %v3717
          %v3719 = vpop.f32.mrb[0].mxu0
          %v3720 = vadd.f32 %v3416, %v3719
          %3721 = vmatprep.mubr.bf16.mxu0 0
          %3722 = vmatmul.mubr.bf16.gmra.mrb[0].mxu0 %v3353
          %v3723 = vpop.f32.mrb[0].mxu0
          %v3724 = vadd.f32 %v3412, %v3723
          %v3725 = vpop.f32.mrb[0].mxu0
          %v3726 = vadd.f32 %v3416, %v3725
          %v3727 = vpop.f32.mrb[0].mxu0
          %v3728 = vadd.f32 %v3412, %v3727
          %v3729 = vpop.f32.mrb[0].mxu0
          %v3730 = vadd.f32 %v3416, %v3729
          %3731 = vmatprep.mubr.bf16.mxu0 0
          %3732 = vmatmul.mubr.bf16.gmra.mrb[0].mxu0 %v3354
          %v3733 = vpop.f32.mrb[0].mxu0
          %v3734 = vadd.f32 %v3412, %v3733
          %v3735 = vpop.f32.mrb[0].mxu0
          %v3736 = vadd.f32 %v3416, %v3735
          %v3737 = vpop.f32.mrb[0].mxu0
          %v3738 = vadd.f32 %v3412, %v3737
          %v3739 = vpop.f32.mrb[0].mxu0
          %v3740 = vadd.f32 %v3416, %v3739
          %3741 = vmatprep.mubr.bf16.mxu0 0
          %3742 = vmatmul.mubr.bf16.gmra.mrb[0].mxu0 %v3355
          %v3743 = vpop.f32.mrb[0].mxu0
          %v3744 = vadd.f32 %v3412, %v3743
          %v3745 = vpop.f32.mrb[0].mxu0
          %v3746 = vadd.f32 %v3416, %v3745
          %v3747 = vpop.f32.mrb[0].mxu0
          %v3748 = vadd.f32 %v3412, %v3747
          %v3749 = vpop.f32.mrb[0].mxu0
          %v3750 = vadd.f32 %v3416, %v3749
          %3751 = vmatprep.mubr.bf16.mxu0 0
          %3752 = vmatmul.mubr.bf16.gmra.mrb[0].mxu0 %v3356
          %v3753 = vpop.f32.mrb[0].mxu0
          %v3754 = vadd.f32 %v3412, %v3753
          %v3755 = vpop.f32.mrb[0].mxu0
          %v3756 = vadd.f32 %v3416, %v3755
          %v3757 = vpop.f32.mrb[0].mxu0
          %v3758 = vadd.f32 %v3412, %v3757
          %v3759 = vpop.f32.mrb[0].mxu0
          %v3760 = vadd.f32 %v3416, %v3759
          %3761 = vmatprep.mubr.bf16.mxu0 0
          %3762 = vmatmul.mubr.bf16.gmra.mrb[0].mxu0 %v3357
          %v3763 = vpop.f32.mrb[0].mxu0
          %v3764 = vadd.f32 %v3412, %v3763
          %v3765 = vpop.f32.mrb[0].mxu0
          %v3766 = vadd.f32 %v3416, %v3765
          %v3767 = vpop.f32.mrb[0].mxu0
          %v3768 = vadd.f32 %v3412, %v3767
          %v3769 = vpop.f32.mrb[0].mxu0
          %v3770 = vadd.f32 %v3416, %v3769
          %3771 = vmatprep.mubr.bf16.mxu0 0
          %3772 = vmatmul.mubr.bf16.gmra.mrb[0].mxu0 %v3358
          %v3773 = vpop.f32.mrb[0].mxu0
          %v3774 = vadd.f32 %v3412, %v3773
          %v3775 = vpop.f32.mrb[0].mxu0
          %v3776 = vadd.f32 %v3416, %v3775
          %v3777 = vpop.f32.mrb[0].mxu0
          %v3778 = vadd.f32 %v3412, %v3777
          %v3779 = vpop.f32.mrb[0].mxu0
          %v3780 = vadd.f32 %v3416, %v3779
          %3781 = vmatprep.mubr.bf16.mxu0 0
          %3782 = vmatmul.mubr.bf16.gmra.mrb[0].mxu0 %v3359
          %v3783 = vpop.f32.mrb[0].mxu0
          %v3784 = vadd.f32 %v3412, %v3783
          %v3785 = vpop.f32.mrb[0].mxu0
          %v3786 = vadd.f32 %v3416, %v3785
          %v3787 = vpop.f32.mrb[0].mxu0
          %v3788 = vadd.f32 %v3412, %v3787
          %v3789 = vpop.f32.mrb[0].mxu0
          %v3790 = vadd.f32 %v3416, %v3789
          %3791 = vmatprep.mubr.bf16.mxu0 0
          %3792 = vmatmul.mubr.bf16.gmra.mrb[0].mxu0 %v3360
          %v3793 = vpop.f32.mrb[0].mxu0
          %v3794 = vadd.f32 %v3412, %v3793
          %v3795 = vpop.f32.mrb[0].mxu0
          %v3796 = vadd.f32 %v3416, %v3795
          %v3797 = vpop.f32.mrb[0].mxu0
          %v3798 = vadd.f32 %v3412, %v3797
          %v3799 = vpop.f32.mrb[0].mxu0
          %v3800 = vadd.f32 %v3416, %v3799
          %3801 = vmatprep.mubr.bf16.mxu0 0
          %3802 = vmatmul.mubr.bf16.gmra.mrb[0].mxu0 %v3361
          %v3803 = vpop.f32.mrb[0].mxu0
          %v3804 = vadd.f32 %v3412, %v3803
          %v3805 = vpop.f32.mrb[0].mxu0
          %v3806 = vadd.f32 %v3416, %v3805
          %v3807 = vpop.f32.mrb[0].mxu0
          %v3808 = vadd.f32 %v3412, %v3807
          %v3809 = vpop.f32.mrb[0].mxu0
          %v3810 = vadd.f32 %v3416, %v3809
          %3811 = vmatprep.mubr.bf16.mxu0 0
          %3812 = vmatmul.mubr.bf16.gmra.mrb[0].mxu0 %v3362
          %v3813 = vpop.f32.mrb[0].mxu0
          %v3814 = vadd.f32 %v3412, %v3813
          %v3815 = vpop.f32.mrb[0].mxu0
          %v3816 = vadd.f32 %v3416, %v3815
          %v3817 = vpop.f32.mrb[0].mxu0
          %v3818 = vadd.f32 %v3412, %v3817
          %v3819 = vpop.f32.mrb[0].mxu0
          %v3820 = vadd.f32 %v3416, %v3819
          %3821 = vmatprep.mubr.bf16.mxu0 0
          %3822 = vmatmul.mubr.bf16.gmra.mrb[0].mxu0 %v3363
          %v3823 = vpop.f32.mrb[0].mxu0
          %v3824 = vadd.f32 %v3412, %v3823
          %v3825 = vpop.f32.mrb[0].mxu0
          %v3826 = vadd.f32 %v3416, %v3825
          %v3827 = vpop.f32.mrb[0].mxu0
          %v3828 = vadd.f32 %v3412, %v3827
          %v3829 = vpop.f32.mrb[0].mxu0
          %v3830 = vadd.f32 %v3416, %v3829
          %3831 = vmatprep.mubr.bf16.mxu0 0
          %3832 = vmatmul.mubr.bf16.gmra.mrb[0].mxu0 %v3364
          %v3833 = vpop.f32.mrb[0].mxu0
          %v3834 = vadd.f32 %v3412, %v3833
          %v3835 = vpop.f32.mrb[0].mxu0
          %v3836 = vadd.f32 %v3416, %v3835
          %v3837 = vpop.f32.mrb[0].mxu0
          %v3838 = vadd.f32 %v3412, %v3837
          %v3839 = vpop.f32.mrb[0].mxu0
          %v3840 = vadd.f32 %v3416, %v3839
          %3841 = vmatprep.mubr.bf16.mxu0 0
          %3842 = vmatmul.mubr.bf16.gmra.mrb[0].mxu0 %v3365
          %v3843 = vpop.f32.mrb[0].mxu0
          %v3844 = vadd.f32 %v3412, %v3843
          %v3845 = vpop.f32.mrb[0].mxu0
          %v3846 = vadd.f32 %v3416, %v3845
          %v3847 = vpop.f32.mrb[0].mxu0
          %v3848 = vadd.f32 %v3412, %v3847
          %v3849 = vpop.f32.mrb[0].mxu0
          %v3850 = vadd.f32 %v3416, %v3849
          %3851 = vmatprep.mubr.bf16.mxu0 0
          %3852 = vmatmul.mubr.bf16.gmra.mrb[0].mxu0 %v3366
          %v3853 = vpop.f32.mrb[0].mxu0
          %v3854 = vadd.f32 %v3412, %v3853
          %v3855 = vpop.f32.mrb[0].mxu0
          %v3856 = vadd.f32 %v3416, %v3855
          %v3857 = vpop.f32.mrb[0].mxu0
          %v3858 = vadd.f32 %v3412, %v3857
          %v3859 = vpop.f32.mrb[0].mxu0
          %v3860 = vadd.f32 %v3416, %v3859
          %3861 = vmatprep.mubr.bf16.mxu0 0
          %3862 = vmatmul.mubr.bf16.gmra.mrb[0].mxu0 %v3367
          %v3863 = vpop.f32.mrb[0].mxu0
          %v3864 = vadd.f32 %v3412, %v3863
          %v3865 = vpop.f32.mrb[0].mxu0
          %v3866 = vadd.f32 %v3416, %v3865
          %v3867 = vpop.f32.mrb[0].mxu0
          %v3868 = vadd.f32 %v3412, %v3867
          %v3869 = vpop.f32.mrb[0].mxu0
          %v3870 = vadd.f32 %v3416, %v3869
          %3871 = vmatprep.mubr.bf16.mxu0 0
          %3872 = vmatmul.mubr.bf16.gmra.mrb[0].mxu0 %v3368
          %v3873 = vpop.f32.mrb[0].mxu0
          %v3874 = vadd.f32 %v3412, %v3873
          %v3875 = vpop.f32.mrb[0].mxu0
          %v3876 = vadd.f32 %v3416, %v3875
          %v3877 = vpop.f32.mrb[0].mxu0
          %v3878 = vadd.f32 %v3412, %v3877
          %v3879 = vpop.f32.mrb[0].mxu0
          %v3880 = vadd.f32 %v3416, %v3879
          %3881 = vmatprep.mubr.bf16.mxu0 0
          %3882 = vmatmul.mubr.bf16.gmra.mrb[0].mxu0 %v3369
          %v3883 = vpop.f32.mrb[0].mxu0
          %v3884 = vadd.f32 %v3412, %v3883
          %v3885 = vpop.f32.mrb[0].mxu0
          %v3886 = vadd.f32 %v3416, %v3885
          %v3887 = vpop.f32.mrb[0].mxu0
          %v3888 = vadd.f32 %v3412, %v3887
          %v3889 = vpop.f32.mrb[0].mxu0
          %v3890 = vadd.f32 %v3416, %v3889
          %3891 = vmatprep.mubr.bf16.mxu0 0
          %3892 = vmatmul.mubr.bf16.gmra.mrb[0].mxu0 %v3370
          %v3893 = vpop.f32.mrb[0].mxu0
          %v3894 = vadd.f32 %v3412, %v3893
          %v3895 = vpop.f32.mrb[0].mxu0
          %v3896 = vadd.f32 %v3416, %v3895
          %v3897 = vpop.f32.mrb[0].mxu0
          %v3898 = vadd.f32 %v3412, %v3897
          %v3899 = vpop.f32.mrb[0].mxu0
          %v3900 = vadd.f32 %v3416, %v3899
          %3901 = vmatprep.mubr.bf16.mxu0 0
          %3902 = vmatmul.mubr.bf16.gmra.mrb[0].mxu0 %v3371
          %v3903 = vpop.f32.mrb[0].mxu0
          %v3904 = vadd.f32 %v3412, %v3903
          %v3905 = vpop.f32.mrb[0].mxu0
          %v3906 = vadd.f32 %v3416, %v3905
          %v3907 = vpop.f32.mrb[0].mxu0
          %v3908 = vadd.f32 %v3412, %v3907
          %v3909 = vpop.f32.mrb[0].mxu0
          %v3910 = vadd.f32 %v3416, %v3909
          %3911 = vmatprep.mubr.bf16.mxu0 0
          %3912 = vmatmul.mubr.bf16.gmra.mrb[0].mxu0 %v3372
          %v3913 = vpop.f32.mrb[0].mxu0
          %v3914 = vadd.f32 %v3412, %v3913
          %v3915 = vpop.f32.mrb[0].mxu0
          %v3916 = vadd.f32 %v3416, %v3915
          %v3917 = vpop.f32.mrb[0].mxu0
          %v3918 = vadd.f32 %v3412, %v3917
          %v3919 = vpop.f32.mrb[0].mxu0
          %v3920 = vadd.f32 %v3416, %v3919
          %3921 = vmatprep.mubr.bf16.mxu0 0
          %3922 = vmatmul.mubr.bf16.gmra.mrb[0].mxu0 %v3373
          %v3923 = vpop.f32.mrb[0].mxu0
          %v3924 = vadd.f32 %v3412, %v3923
          %v3925 = vpop.f32.mrb[0].mxu0
          %v3926 = vadd.f32 %v3416, %v3925
          %v3927 = vpop.f32.mrb[0].mxu0
          %v3928 = vadd.f32 %v3412, %v3927
          %v3929 = vpop.f32.mrb[0].mxu0
          %v3930 = vadd.f32 %v3416, %v3929
          %3931 = vmatprep.mubr.bf16.mxu0 0
          %3932 = vmatmul.mubr.bf16.gmra.mrb[0].mxu0 %v3374
          %v3933 = vpop.f32.mrb[0].mxu0
          %v3934 = vadd.f32 %v3412, %v3933
          %v3935 = vpop.f32.mrb[0].mxu0
          %v3936 = vadd.f32 %v3416, %v3935
          %v3937 = vpop.f32.mrb[0].mxu0
          %v3938 = vadd.f32 %v3412, %v3937
          %v3939 = vpop.f32.mrb[0].mxu0
          %v3940 = vadd.f32 %v3416, %v3939
          %3941 = vdwg.mxu0
          %3942 = vmatprep.subr.bf16.mxu0 %v3528
          %3943 = vmatpush1.bf16.msra.mxu0 %v3527
          %3944 = vmatprep.subr.bf16.mxu0 %v3532
          %3945 = vmatpush1.bf16.msra.mxu0 %v3531
          %3946 = vmatprep.subr.bf16.mxu0 %v3536
          %3947 = vmatpush1.bf16.msra.mxu0 %v3535
          %3948 = vmatprep.subr.bf16.mxu0 %v3540
          %3949 = vmatpush1.bf16.msra.mxu0 %v3539
          %3950 = vmatprep.subr.bf16.mxu0 %v3544
          %3951 = vmatpush1.bf16.msra.mxu0 %v3543
          %3952 = vmatprep.subr.bf16.mxu0 %v3548
          %3953 = vmatpush1.bf16.msra.mxu0 %v3547
          %3954 = vmatprep.subr.bf16.mxu0 %v3552
          %3955 = vmatpush1.bf16.msra.mxu0 %v3551
          %3956 = vmatprep.subr.bf16.mxu0 %v3556
          %3957 = vmatpush1.bf16.msra.mxu0 %v3555
          %3958 = vmatprep.subr.bf16.mxu0 0
          %3959 = vmatpush1.bf16.msra.mxu0 0
          %3960 = vmatprep.subr.bf16.mxu0 0
          %3961 = vmatpush1.bf16.msra.mxu0 0
          %3962 = vmatprep.subr.bf16.mxu0 0
          %3963 = vmatpush1.bf16.msra.mxu0 0
          %3964 = vmatprep.subr.bf16.mxu0 0
          %3965 = vmatpush1.bf16.msra.mxu0 0
          %3966 = vmatprep.subr.bf16.mxu0 0
          %3967 = vmatpush1.bf16.msra.mxu0 0
          %3968 = vmatprep.subr.bf16.mxu0 0
          %3969 = vmatpush1.bf16.msra.mxu0 0
          %3970 = vmatprep.subr.bf16.mxu0 0
          %3971 = vmatpush1.bf16.msra.mxu0 0
          %3972 = vmatprep.subr.bf16.mxu0 0
          %3973 = vmatpush1.bf16.msra.mxu0 0
          %3974 = vmatprep.mubr.bf16.mxu0 0
          %3975 = vmatmul.mubr.bf16.gmra.mrb[0].mxu0 %v3343
          %v3976 = vpop.f32.mrb[0].mxu0
          %v3977 = vadd.f32 %v3420, %v3976
          %v3978 = vpop.f32.mrb[0].mxu0
          %v3979 = vadd.f32 %v3424, %v3978
          %v3980 = vpop.f32.mrb[0].mxu0
          %v3981 = vadd.f32 %v3420, %v3980
          %v3982 = vpop.f32.mrb[0].mxu0
          %v3983 = vadd.f32 %v3424, %v3982
          %3984 = vmatprep.mubr.bf16.mxu0 0
          %3985 = vmatmul.mubr.bf16.gmra.mrb[0].mxu0 %v3344
          %v3986 = vpop.f32.mrb[0].mxu0
          %v3987 = vadd.f32 %v3420, %v3986
          %v3988 = vpop.f32.mrb[0].mxu0
          %v3989 = vadd.f32 %v3424, %v3988
          %v3990 = vpop.f32.mrb[0].mxu0
          %v3991 = vadd.f32 %v3420, %v3990
          %v3992 = vpop.f32.mrb[0].mxu0
          %v3993 = vadd.f32 %v3424, %v3992
          %3994 = vmatprep.mubr.bf16.mxu0 0
          %3995 = vmatmul.mubr.bf16.gmra.mrb[0].mxu0 %v3345
          %v3996 = vpop.f32.mrb[0].mxu0
          %v3997 = vadd.f32 %v3420, %v3996
          %v3998 = vpop.f32.mrb[0].mxu0
          %v3999 = vadd.f32 %v3424, %v3998
          %v4000 = vpop.f32.mrb[0].mxu0
          %v4001 = vadd.f32 %v3420, %v4000
          %v4002 = vpop.f32.mrb[0].mxu0
          %v4003 = vadd.f32 %v3424, %v4002
          %4004 = vmatprep.mubr.bf16.mxu0 0
          %4005 = vmatmul.mubr.bf16.gmra.mrb[0].mxu0 %v3346
          %v4006 = vpop.f32.mrb[0].mxu0
          %v4007 = vadd.f32 %v3420, %v4006
          %v4008 = vpop.f32.mrb[0].mxu0
          %v4009 = vadd.f32 %v3424, %v4008
          %v4010 = vpop.f32.mrb[0].mxu0
          %v4011 = vadd.f32 %v3420, %v4010
          %v4012 = vpop.f32.mrb[0].mxu0
          %v4013 = vadd.f32 %v3424, %v4012
          %4014 = vmatprep.mubr.bf16.mxu0 0
          %4015 = vmatmul.mubr.bf16.gmra.mrb[0].mxu0 %v3347
          %v4016 = vpop.f32.mrb[0].mxu0
          %v4017 = vadd.f32 %v3420, %v4016
          %v4018 = vpop.f32.mrb[0].mxu0
          %v4019 = vadd.f32 %v3424, %v4018
          %v4020 = vpop.f32.mrb[0].mxu0
          %v4021 = vadd.f32 %v3420, %v4020
          %v4022 = vpop.f32.mrb[0].mxu0
          %v4023 = vadd.f32 %v3424, %v4022
          %4024 = vmatprep.mubr.bf16.mxu0 0
          %4025 = vmatmul.mubr.bf16.gmra.mrb[0].mxu0 %v3348
          %v4026 = vpop.f32.mrb[0].mxu0
          %v4027 = vadd.f32 %v3420, %v4026
          %v4028 = vpop.f32.mrb[0].mxu0
          %v4029 = vadd.f32 %v3424, %v4028
          %v4030 = vpop.f32.mrb[0].mxu0
          %v4031 = vadd.f32 %v3420, %v4030
          %v4032 = vpop.f32.mrb[0].mxu0
          %v4033 = vadd.f32 %v3424, %v4032
          %4034 = vmatprep.mubr.bf16.mxu0 0
          %4035 = vmatmul.mubr.bf16.gmra.mrb[0].mxu0 %v3349
          %v4036 = vpop.f32.mrb[0].mxu0
          %v4037 = vadd.f32 %v3420, %v4036
          %v4038 = vpop.f32.mrb[0].mxu0
          %v4039 = vadd.f32 %v3424, %v4038
          %v4040 = vpop.f32.mrb[0].mxu0
          %v4041 = vadd.f32 %v3420, %v4040
          %v4042 = vpop.f32.mrb[0].mxu0
          %v4043 = vadd.f32 %v3424, %v4042
          %4044 = vmatprep.mubr.bf16.mxu0 0
          %4045 = vmatmul.mubr.bf16.gmra.mrb[0].mxu0 %v3350
          %v4046 = vpop.f32.mrb[0].mxu0
          %v4047 = vadd.f32 %v3420, %v4046
          %v4048 = vpop.f32.mrb[0].mxu0
          %v4049 = vadd.f32 %v3424, %v4048
          %v4050 = vpop.f32.mrb[0].mxu0
          %v4051 = vadd.f32 %v3420, %v4050
          %v4052 = vpop.f32.mrb[0].mxu0
          %v4053 = vadd.f32 %v3424, %v4052
          %4054 = vmatprep.mubr.bf16.mxu0 0
          %4055 = vmatmul.mubr.bf16.gmra.mrb[0].mxu0 %v3351
          %v4056 = vpop.f32.mrb[0].mxu0
          %v4057 = vadd.f32 %v3420, %v4056
          %v4058 = vpop.f32.mrb[0].mxu0
          %v4059 = vadd.f32 %v3424, %v4058
          %v4060 = vpop.f32.mrb[0].mxu0
          %v4061 = vadd.f32 %v3420, %v4060
          %v4062 = vpop.f32.mrb[0].mxu0
          %v4063 = vadd.f32 %v3424, %v4062
          %4064 = vmatprep.mubr.bf16.mxu0 0
          %4065 = vmatmul.mubr.bf16.gmra.mrb[0].mxu0 %v3352
          %v4066 = vpop.f32.mrb[0].mxu0
          %v4067 = vadd.f32 %v3420, %v4066
          %v4068 = vpop.f32.mrb[0].mxu0
          %v4069 = vadd.f32 %v3424, %v4068
          %v4070 = vpop.f32.mrb[0].mxu0
          %v4071 = vadd.f32 %v3420, %v4070
          %v4072 = vpop.f32.mrb[0].mxu0
          %v4073 = vadd.f32 %v3424, %v4072
          %4074 = vmatprep.mubr.bf16.mxu0 0
          %4075 = vmatmul.mubr.bf16.gmra.mrb[0].mxu0 %v3353
          %v4076 = vpop.f32.mrb[0].mxu0
          %v4077 = vadd.f32 %v3420, %v4076
          %v4078 = vpop.f32.mrb[0].mxu0
          %v4079 = vadd.f32 %v3424, %v4078
          %v4080 = vpop.f32.mrb[0].mxu0
          %v4081 = vadd.f32 %v3420, %v4080
          %v4082 = vpop.f32.mrb[0].mxu0
          %v4083 = vadd.f32 %v3424, %v4082
          %4084 = vmatprep.mubr.bf16.mxu0 0
          %4085 = vmatmul.mubr.bf16.gmra.mrb[0].mxu0 %v3354
          %v4086 = vpop.f32.mrb[0].mxu0
          %v4087 = vadd.f32 %v3420, %v4086
          %v4088 = vpop.f32.mrb[0].mxu0
          %v4089 = vadd.f32 %v3424, %v4088
          %v4090 = vpop.f32.mrb[0].mxu0
          %v4091 = vadd.f32 %v3420, %v4090
          %v4092 = vpop.f32.mrb[0].mxu0
          %v4093 = vadd.f32 %v3424, %v4092
          %4094 = vmatprep.mubr.bf16.mxu0 0
          %4095 = vmatmul.mubr.bf16.gmra.mrb[0].mxu0 %v3355
          %v4096 = vpop.f32.mrb[0].mxu0
          %v4097 = vadd.f32 %v3420, %v4096
          %v4098 = vpop.f32.mrb[0].mxu0
          %v4099 = vadd.f32 %v3424, %v4098
          %v4100 = vpop.f32.mrb[0].mxu0
          %v4101 = vadd.f32 %v3420, %v4100
          %v4102 = vpop.f32.mrb[0].mxu0
          %v4103 = vadd.f32 %v3424, %v4102
          %4104 = vmatprep.mubr.bf16.mxu0 0
          %4105 = vmatmul.mubr.bf16.gmra.mrb[0].mxu0 %v3356
          %v4106 = vpop.f32.mrb[0].mxu0
          %v4107 = vadd.f32 %v3420, %v4106
          %v4108 = vpop.f32.mrb[0].mxu0
          %v4109 = vadd.f32 %v3424, %v4108
          %v4110 = vpop.f32.mrb[0].mxu0
          %v4111 = vadd.f32 %v3420, %v4110
          %v4112 = vpop.f32.mrb[0].mxu0
          %v4113 = vadd.f32 %v3424, %v4112
          %4114 = vmatprep.mubr.bf16.mxu0 0
          %4115 = vmatmul.mubr.bf16.gmra.mrb[0].mxu0 %v3357
          %v4116 = vpop.f32.mrb[0].mxu0
          %v4117 = vadd.f32 %v3420, %v4116
          %v4118 = vpop.f32.mrb[0].mxu0
          %v4119 = vadd.f32 %v3424, %v4118
          %v4120 = vpop.f32.mrb[0].mxu0
          %v4121 = vadd.f32 %v3420, %v4120
          %v4122 = vpop.f32.mrb[0].mxu0
          %v4123 = vadd.f32 %v3424, %v4122
          %4124 = vmatprep.mubr.bf16.mxu0 0
          %4125 = vmatmul.mubr.bf16.gmra.mrb[0].mxu0 %v3358
          %v4126 = vpop.f32.mrb[0].mxu0
          %v4127 = vadd.f32 %v3420, %v4126
          %v4128 = vpop.f32.mrb[0].mxu0
          %v4129 = vadd.f32 %v3424, %v4128
          %v4130 = vpop.f32.mrb[0].mxu0
          %v4131 = vadd.f32 %v3420, %v4130
          %v4132 = vpop.f32.mrb[0].mxu0
          %v4133 = vadd.f32 %v3424, %v4132
          %4134 = vmatprep.mubr.bf16.mxu0 0
          %4135 = vmatmul.mubr.bf16.gmra.mrb[0].mxu0 %v3359
          %v4136 = vpop.f32.mrb[0].mxu0
          %v4137 = vadd.f32 %v3420, %v4136
          %v4138 = vpop.f32.mrb[0].mxu0
          %v4139 = vadd.f32 %v3424, %v4138
          %v4140 = vpop.f32.mrb[0].mxu0
          %v4141 = vadd.f32 %v3420, %v4140
          %v4142 = vpop.f32.mrb[0].mxu0
          %v4143 = vadd.f32 %v3424, %v4142
          %4144 = vmatprep.mubr.bf16.mxu0 0
          %4145 = vmatmul.mubr.bf16.gmra.mrb[0].mxu0 %v3360
          %v4146 = vpop.f32.mrb[0].mxu0
          %v4147 = vadd.f32 %v3420, %v4146
          %v4148 = vpop.f32.mrb[0].mxu0
          %v4149 = vadd.f32 %v3424, %v4148
          %v4150 = vpop.f32.mrb[0].mxu0
          %v4151 = vadd.f32 %v3420, %v4150
          %v4152 = vpop.f32.mrb[0].mxu0
          %v4153 = vadd.f32 %v3424, %v4152
          %4154 = vmatprep.mubr.bf16.mxu0 0
          %4155 = vmatmul.mubr.bf16.gmra.mrb[0].mxu0 %v3361
          %v4156 = vpop.f32.mrb[0].mxu0
          %v4157 = vadd.f32 %v3420, %v4156
          %v4158 = vpop.f32.mrb[0].mxu0
          %v4159 = vadd.f32 %v3424, %v4158
          %v4160 = vpop.f32.mrb[0].mxu0
          %v4161 = vadd.f32 %v3420, %v4160
          %v4162 = vpop.f32.mrb[0].mxu0
          %v4163 = vadd.f32 %v3424, %v4162
          %4164 = vmatprep.mubr.bf16.mxu0 0
          %4165 = vmatmul.mubr.bf16.gmra.mrb[0].mxu0 %v3362
          %v4166 = vpop.f32.mrb[0].mxu0
          %v4167 = vadd.f32 %v3420, %v4166
          %v4168 = vpop.f32.mrb[0].mxu0
          %v4169 = vadd.f32 %v3424, %v4168
          %v4170 = vpop.f32.mrb[0].mxu0
          %v4171 = vadd.f32 %v3420, %v4170
          %v4172 = vpop.f32.mrb[0].mxu0
          %v4173 = vadd.f32 %v3424, %v4172
          %4174 = vmatprep.mubr.bf16.mxu0 0
          %4175 = vmatmul.mubr.bf16.gmra.mrb[0].mxu0 %v3363
          %v4176 = vpop.f32.mrb[0].mxu0
          %v4177 = vadd.f32 %v3420, %v4176
          %v4178 = vpop.f32.mrb[0].mxu0
          %v4179 = vadd.f32 %v3424, %v4178
          %v4180 = vpop.f32.mrb[0].mxu0
          %v4181 = vadd.f32 %v3420, %v4180
          %v4182 = vpop.f32.mrb[0].mxu0
          %v4183 = vadd.f32 %v3424, %v4182
          %4184 = vmatprep.mubr.bf16.mxu0 0
          %4185 = vmatmul.mubr.bf16.gmra.mrb[0].mxu0 %v3364
          %v4186 = vpop.f32.mrb[0].mxu0
          %v4187 = vadd.f32 %v3420, %v4186
          %v4188 = vpop.f32.mrb[0].mxu0
          %v4189 = vadd.f32 %v3424, %v4188
          %v4190 = vpop.f32.mrb[0].mxu0
          %v4191 = vadd.f32 %v3420, %v4190
          %v4192 = vpop.f32.mrb[0].mxu0
          %v4193 = vadd.f32 %v3424, %v4192
          %4194 = vmatprep.mubr.bf16.mxu0 0
          %4195 = vmatmul.mubr.bf16.gmra.mrb[0].mxu0 %v3365
          %v4196 = vpop.f32.mrb[0].mxu0
          %v4197 = vadd.f32 %v3420, %v4196
          %v4198 = vpop.f32.mrb[0].mxu0
          %v4199 = vadd.f32 %v3424, %v4198
          %v4200 = vpop.f32.mrb[0].mxu0
          %v4201 = vadd.f32 %v3420, %v4200
          %v4202 = vpop.f32.mrb[0].mxu0
          %v4203 = vadd.f32 %v3424, %v4202
          %4204 = vmatprep.mubr.bf16.mxu0 0
          %4205 = vmatmul.mubr.bf16.gmra.mrb[0].mxu0 %v3366
          %v4206 = vpop.f32.mrb[0].mxu0
          %v4207 = vadd.f32 %v3420, %v4206
          %v4208 = vpop.f32.mrb[0].mxu0
          %v4209 = vadd.f32 %v3424, %v4208
          %v4210 = vpop.f32.mrb[0].mxu0
          %v4211 = vadd.f32 %v3420, %v4210
          %v4212 = vpop.f32.mrb[0].mxu0
          %v4213 = vadd.f32 %v3424, %v4212
          %4214 = vmatprep.mubr.bf16.mxu0 0
          %4215 = vmatmul.mubr.bf16.gmra.mrb[0].mxu0 %v3367
          %v4216 = vpop.f32.mrb[0].mxu0
          %v4217 = vadd.f32 %v3420, %v4216
          %v4218 = vpop.f32.mrb[0].mxu0
          %v4219 = vadd.f32 %v3424, %v4218
          %v4220 = vpop.f32.mrb[0].mxu0
          %v4221 = vadd.f32 %v3420, %v4220
          %v4222 = vpop.f32.mrb[0].mxu0
          %v4223 = vadd.f32 %v3424, %v4222
          %4224 = vmatprep.mubr.bf16.mxu0 0
          %4225 = vmatmul.mubr.bf16.gmra.mrb[0].mxu0 %v3368
          %v4226 = vpop.f32.mrb[0].mxu0
          %v4227 = vadd.f32 %v3420, %v4226
          %v4228 = vpop.f32.mrb[0].mxu0
          %v4229 = vadd.f32 %v3424, %v4228
          %v4230 = vpop.f32.mrb[0].mxu0
          %v4231 = vadd.f32 %v3420, %v4230
          %v4232 = vpop.f32.mrb[0].mxu0
          %v4233 = vadd.f32 %v3424, %v4232
          %4234 = vmatprep.mubr.bf16.mxu0 0
          %4235 = vmatmul.mubr.bf16.gmra.mrb[0].mxu0 %v3369
          %v4236 = vpop.f32.mrb[0].mxu0
          %v4237 = vadd.f32 %v3420, %v4236
          %v4238 = vpop.f32.mrb[0].mxu0
          %v4239 = vadd.f32 %v3424, %v4238
          %v4240 = vpop.f32.mrb[0].mxu0
          %v4241 = vadd.f32 %v3420, %v4240
          %v4242 = vpop.f32.mrb[0].mxu0
          %v4243 = vadd.f32 %v3424, %v4242
          %4244 = vmatprep.mubr.bf16.mxu0 0
          %4245 = vmatmul.mubr.bf16.gmra.mrb[0].mxu0 %v3370
          %v4246 = vpop.f32.mrb[0].mxu0
          %v4247 = vadd.f32 %v3420, %v4246
          %v4248 = vpop.f32.mrb[0].mxu0
          %v4249 = vadd.f32 %v3424, %v4248
          %v4250 = vpop.f32.mrb[0].mxu0
          %v4251 = vadd.f32 %v3420, %v4250
          %v4252 = vpop.f32.mrb[0].mxu0
          %v4253 = vadd.f32 %v3424, %v4252
          %4254 = vmatprep.mubr.bf16.mxu0 0
          %4255 = vmatmul.mubr.bf16.gmra.mrb[0].mxu0 %v3371
          %v4256 = vpop.f32.mrb[0].mxu0
          %v4257 = vadd.f32 %v3420, %v4256
          %v4258 = vpop.f32.mrb[0].mxu0
          %v4259 = vadd.f32 %v3424, %v4258
          %v4260 = vpop.f32.mrb[0].mxu0
          %v4261 = vadd.f32 %v3420, %v4260
          %v4262 = vpop.f32.mrb[0].mxu0
          %v4263 = vadd.f32 %v3424, %v4262
          %4264 = vmatprep.mubr.bf16.mxu0 0
          %4265 = vmatmul.mubr.bf16.gmra.mrb[0].mxu0 %v3372
          %v4266 = vpop.f32.mrb[0].mxu0
          %v4267 = vadd.f32 %v3420, %v4266
          %v4268 = vpop.f32.mrb[0].mxu0
          %v4269 = vadd.f32 %v3424, %v4268
          %v4270 = vpop.f32.mrb[0].mxu0
          %v4271 = vadd.f32 %v3420, %v4270
          %v4272 = vpop.f32.mrb[0].mxu0
          %v4273 = vadd.f32 %v3424, %v4272
          %4274 = vmatprep.mubr.bf16.mxu0 0
          %4275 = vmatmul.mubr.bf16.gmra.mrb[0].mxu0 %v3373
          %v4276 = vpop.f32.mrb[0].mxu0
          %v4277 = vadd.f32 %v3420, %v4276
          %v4278 = vpop.f32.mrb[0].mxu0
          %v4279 = vadd.f32 %v3424, %v4278
          %v4280 = vpop.f32.mrb[0].mxu0
          %v4281 = vadd.f32 %v3420, %v4280
          %v4282 = vpop.f32.mrb[0].mxu0
          %v4283 = vadd.f32 %v3424, %v4282
          %4284 = vmatprep.mubr.bf16.mxu0 0
          %4285 = vmatmul.mubr.bf16.gmra.mrb[0].mxu0 %v3374
          %v4286 = vpop.f32.mrb[0].mxu0
          %v4287 = vadd.f32 %v3420, %v4286
          %v4288 = vpop.f32.mrb[0].mxu0
          %v4289 = vadd.f32 %v3424, %v4288
          %v4290 = vpop.f32.mrb[0].mxu0
          %v4291 = vadd.f32 %v3420, %v4290
          %v4292 = vpop.f32.mrb[0].mxu0
          %v4293 = vadd.f32 %v3424, %v4292
          %4294 = vdwg.mxu0
          %4295 = vst [vmem:[#allocation10] sm:$0xff] %v3624
          %4296 = vst [vmem:[#allocation10 + $0x8] sm:$0xff] %v3626
          %4297 = vst [vmem:[#allocation10 + $0x10] sm:$0xff] %v3977
          %4298 = vst [vmem:[#allocation10 + $0x18] sm:$0xff] %v3979
          %4299 = vst [vmem:[#allocation10 + $0x20] sm:$0xff] %v3628
          %4300 = vst [vmem:[#allocation10 + $0x28] sm:$0xff] %v3630
          %4301 = vst [vmem:[#allocation10 + $0x30] sm:$0xff] %v3981
          %4302 = vst [vmem:[#allocation10 + $0x38] sm:$0xff] %v3983
          %4303 = vst [vmem:[#allocation10 + $0x40] sm:$0xff] %v3634
          %4304 = vst [vmem:[#allocation10 + $0x48] sm:$0xff] %v3636
          %4305 = vst [vmem:[#allocation10 + $0x50] sm:$0xff] %v3987
          %4306 = vst [vmem:[#allocation10 + $0x58] sm:$0xff] %v3989
          %4307 = vst [vmem:[#allocation10 + $0x60] sm:$0xff] %v3638
          %4308 = vst [vmem:[#allocation10 + $0x68] sm:$0xff] %v3640
          %4309 = vst [vmem:[#allocation10 + $0x70] sm:$0xff] %v3991
          %4310 = vst [vmem:[#allocation10 + $0x78] sm:$0xff] %v3993
          %4311 = vst [vmem:[#allocation10 + $0x80] sm:$0xff] %v3644
          %4312 = vst [vmem:[#allocation10 + $0x88] sm:$0xff] %v3646
          %4313 = vst [vmem:[#allocation10 + $0x90] sm:$0xff] %v3997
          %4314 = vst [vmem:[#allocation10 + $0x98] sm:$0xff] %v3999
          %4315 = vst [vmem:[#allocation10 + $0xa0] sm:$0xff] %v3648
          %4316 = vst [vmem:[#allocation10 + $0xa8] sm:$0xff] %v3650
          %4317 = vst [vmem:[#allocation10 + $0xb0] sm:$0xff] %v4001
          %4318 = vst [vmem:[#allocation10 + $0xb8] sm:$0xff] %v4003
          %4319 = vst [vmem:[#allocation10 + $0xc0] sm:$0xff] %v3654
          %4320 = vst [vmem:[#allocation10 + $0xc8] sm:$0xff] %v3656
          %4321 = vst [vmem:[#allocation10 + $0xd0] sm:$0xff] %v4007
          %4322 = vst [vmem:[#allocation10 + $0xd8] sm:$0xff] %v4009
          %4323 = vst [vmem:[#allocation10 + $0xe0] sm:$0xff] %v3658
          %4324 = vst [vmem:[#allocation10 + $0xe8] sm:$0xff] %v3660
          %4325 = vst [vmem:[#allocation10 + $0xf0] sm:$0xff] %v4011
          %4326 = vst [vmem:[#allocation10 + $0xf8] sm:$0xff] %v4013
          %4327 = vst [vmem:[#allocation10 + $0x100] sm:$0xff] %v3664
          %4328 = vst [vmem:[#allocation10 + $0x108] sm:$0xff] %v3666
          %4329 = vst [vmem:[#allocation10 + $0x110] sm:$0xff] %v4017
          %4330 = vst [vmem:[#allocation10 + $0x118] sm:$0xff] %v4019
          %4331 = vst [vmem:[#allocation10 + $0x120] sm:$0xff] %v3668
          %4332 = vst [vmem:[#allocation10 + $0x128] sm:$0xff] %v3670
          %4333 = vst [vmem:[#allocation10 + $0x130] sm:$0xff] %v4021
          %4334 = vst [vmem:[#allocation10 + $0x138] sm:$0xff] %v4023
          %4335 = vst [vmem:[#allocation10 + $0x140] sm:$0xff] %v3674
          %4336 = vst [vmem:[#allocation10 + $0x148] sm:$0xff] %v3676
          %4337 = vst [vmem:[#allocation10 + $0x150] sm:$0xff] %v4027
          %4338 = vst [vmem:[#allocation10 + $0x158] sm:$0xff] %v4029
          %4339 = vst [vmem:[#allocation10 + $0x160] sm:$0xff] %v3678
          %4340 = vst [vmem:[#allocation10 + $0x168] sm:$0xff] %v3680
          %4341 = vst [vmem:[#allocation10 + $0x170] sm:$0xff] %v4031
          %4342 = vst [vmem:[#allocation10 + $0x178] sm:$0xff] %v4033
          %4343 = vst [vmem:[#allocation10 + $0x180] sm:$0xff] %v3684
          %4344 = vst [vmem:[#allocation10 + $0x188] sm:$0xff] %v3686
          %4345 = vst [vmem:[#allocation10 + $0x190] sm:$0xff] %v4037
          %4346 = vst [vmem:[#allocation10 + $0x198] sm:$0xff] %v4039
          %4347 = vst [vmem:[#allocation10 + $0x1a0] sm:$0xff] %v3688
          %4348 = vst [vmem:[#allocation10 + $0x1a8] sm:$0xff] %v3690
          %4349 = vst [vmem:[#allocation10 + $0x1b0] sm:$0xff] %v4041
          %4350 = vst [vmem:[#allocation10 + $0x1b8] sm:$0xff] %v4043
          %4351 = vst [vmem:[#allocation10 + $0x1c0] sm:$0xff] %v3694
          %4352 = vst [vmem:[#allocation10 + $0x1c8] sm:$0xff] %v3696
          %4353 = vst [vmem:[#allocation10 + $0x1d0] sm:$0xff] %v4047
          %4354 = vst [vmem:[#allocation10 + $0x1d8] sm:$0xff] %v4049
          %4355 = vst [vmem:[#allocation10 + $0x1e0] sm:$0xff] %v3698
          %4356 = vst [vmem:[#allocation10 + $0x1e8] sm:$0xff] %v3700
          %4357 = vst [vmem:[#allocation10 + $0x1f0] sm:$0xff] %v4051
          %4358 = vst [vmem:[#allocation10 + $0x1f8] sm:$0xff] %v4053
          %4359 = vst [vmem:[#allocation10 + $0x200] sm:$0xff] %v3704
          %4360 = vst [vmem:[#allocation10 + $0x208] sm:$0xff] %v3706
          %4361 = vst [vmem:[#allocation10 + $0x210] sm:$0xff] %v4057
          %4362 = vst [vmem:[#allocation10 + $0x218] sm:$0xff] %v4059
          %4363 = vst [vmem:[#allocation10 + $0x220] sm:$0xff] %v3708
          %4364 = vst [vmem:[#allocation10 + $0x228] sm:$0xff] %v3710
          %4365 = vst [vmem:[#allocation10 + $0x230] sm:$0xff] %v4061
          %4366 = vst [vmem:[#allocation10 + $0x238] sm:$0xff] %v4063
          %4367 = vst [vmem:[#allocation10 + $0x240] sm:$0xff] %v3714
          %4368 = vst [vmem:[#allocation10 + $0x248] sm:$0xff] %v3716
          %4369 = vst [vmem:[#allocation10 + $0x250] sm:$0xff] %v4067
          %4370 = vst [vmem:[#allocation10 + $0x258] sm:$0xff] %v4069
          %4371 = vst [vmem:[#allocation10 + $0x260] sm:$0xff] %v3718
          %4372 = vst [vmem:[#allocation10 + $0x268] sm:$0xff] %v3720
          %4373 = vst [vmem:[#allocation10 + $0x270] sm:$0xff] %v4071
          %4374 = vst [vmem:[#allocation10 + $0x278] sm:$0xff] %v4073
          %4375 = vst [vmem:[#allocation10 + $0x280] sm:$0xff] %v3724
          %4376 = vst [vmem:[#allocation10 + $0x288] sm:$0xff] %v3726
          %4377 = vst [vmem:[#allocation10 + $0x290] sm:$0xff] %v4077
          %4378 = vst [vmem:[#allocation10 + $0x298] sm:$0xff] %v4079
          %4379 = vst [vmem:[#allocation10 + $0x2a0] sm:$0xff] %v3728
          %4380 = vst [vmem:[#allocation10 + $0x2a8] sm:$0xff] %v3730
          %4381 = vst [vmem:[#allocation10 + $0x2b0] sm:$0xff] %v4081
          %4382 = vst [vmem:[#allocation10 + $0x2b8] sm:$0xff] %v4083
          %4383 = vst [vmem:[#allocation10 + $0x2c0] sm:$0xff] %v3734
          %4384 = vst [vmem:[#allocation10 + $0x2c8] sm:$0xff] %v3736
          %4385 = vst [vmem:[#allocation10 + $0x2d0] sm:$0xff] %v4087
          %4386 = vst [vmem:[#allocation10 + $0x2d8] sm:$0xff] %v4089
          %4387 = vst [vmem:[#allocation10 + $0x2e0] sm:$0xff] %v3738
          %4388 = vst [vmem:[#allocation10 + $0x2e8] sm:$0xff] %v3740
          %4389 = vst [vmem:[#allocation10 + $0x2f0] sm:$0xff] %v4091
          %4390 = vst [vmem:[#allocation10 + $0x2f8] sm:$0xff] %v4093
          %4391 = vst [vmem:[#allocation10 + $0x300] sm:$0xff] %v3744
          %4392 = vst [vmem:[#allocation10 + $0x308] sm:$0xff] %v3746
          %4393 = vst [vmem:[#allocation10 + $0x310] sm:$0xff] %v4097
          %4394 = vst [vmem:[#allocation10 + $0x318] sm:$0xff] %v4099
          %4395 = vst [vmem:[#allocation10 + $0x320] sm:$0xff] %v3748
          %4396 = vst [vmem:[#allocation10 + $0x328] sm:$0xff] %v3750
          %4397 = vst [vmem:[#allocation10 + $0x330] sm:$0xff] %v4101
          %4398 = vst [vmem:[#allocation10 + $0x338] sm:$0xff] %v4103
          %4399 = vst [vmem:[#allocation10 + $0x340] sm:$0xff] %v3754
          %4400 = vst [vmem:[#allocation10 + $0x348] sm:$0xff] %v3756
          %4401 = vst [vmem:[#allocation10 + $0x350] sm:$0xff] %v4107
          %4402 = vst [vmem:[#allocation10 + $0x358] sm:$0xff] %v4109
          %4403 = vst [vmem:[#allocation10 + $0x360] sm:$0xff] %v3758
          %4404 = vst [vmem:[#allocation10 + $0x368] sm:$0xff] %v3760
          %4405 = vst [vmem:[#allocation10 + $0x370] sm:$0xff] %v4111
          %4406 = vst [vmem:[#allocation10 + $0x378] sm:$0xff] %v4113
          %4407 = vst [vmem:[#allocation10 + $0x380] sm:$0xff] %v3764
          %4408 = vst [vmem:[#allocation10 + $0x388] sm:$0xff] %v3766
          %4409 = vst [vmem:[#allocation10 + $0x390] sm:$0xff] %v4117
          %4410 = vst [vmem:[#allocation10 + $0x398] sm:$0xff] %v4119
          %4411 = vst [vmem:[#allocation10 + $0x3a0] sm:$0xff] %v3768
          %4412 = vst [vmem:[#allocation10 + $0x3a8] sm:$0xff] %v3770
          %4413 = vst [vmem:[#allocation10 + $0x3b0] sm:$0xff] %v4121
          %4414 = vst [vmem:[#allocation10 + $0x3b8] sm:$0xff] %v4123
          %4415 = vst [vmem:[#allocation10 + $0x3c0] sm:$0xff] %v3774
          %4416 = vst [vmem:[#allocation10 + $0x3c8] sm:$0xff] %v3776
          %4417 = vst [vmem:[#allocation10 + $0x3d0] sm:$0xff] %v4127
          %4418 = vst [vmem:[#allocation10 + $0x3d8] sm:$0xff] %v4129
          %4419 = vst [vmem:[#allocation10 + $0x3e0] sm:$0xff] %v3778
          %4420 = vst [vmem:[#allocation10 + $0x3e8] sm:$0xff] %v3780
          %4421 = vst [vmem:[#allocation10 + $0x3f0] sm:$0xff] %v4131
          %4422 = vst [vmem:[#allocation10 + $0x3f8] sm:$0xff] %v4133
          %4423 = vst [vmem:[#allocation10 + $0x400] sm:$0xff] %v3784
          %4424 = vst [vmem:[#allocation10 + $0x408] sm:$0xff] %v3786
          %4425 = vst [vmem:[#allocation10 + $0x410] sm:$0xff] %v4137
          %4426 = vst [vmem:[#allocation10 + $0x418] sm:$0xff] %v4139
          %4427 = vst [vmem:[#allocation10 + $0x420] sm:$0xff] %v3788
          %4428 = vst [vmem:[#allocation10 + $0x428] sm:$0xff] %v3790
          %4429 = vst [vmem:[#allocation10 + $0x430] sm:$0xff] %v4141
          %4430 = vst [vmem:[#allocation10 + $0x438] sm:$0xff] %v4143
          %4431 = vst [vmem:[#allocation10 + $0x440] sm:$0xff] %v3794
          %4432 = vst [vmem:[#allocation10 + $0x448] sm:$0xff] %v3796
          %4433 = vst [vmem:[#allocation10 + $0x450] sm:$0xff] %v4147
          %4434 = vst [vmem:[#allocation10 + $0x458] sm:$0xff] %v4149
          %4435 = vst [vmem:[#allocation10 + $0x460] sm:$0xff] %v3798
          %4436 = vst [vmem:[#allocation10 + $0x468] sm:$0xff] %v3800
          %4437 = vst [vmem:[#allocation10 + $0x470] sm:$0xff] %v4151
          %4438 = vst [vmem:[#allocation10 + $0x478] sm:$0xff] %v4153
          %4439 = vst [vmem:[#allocation10 + $0x480] sm:$0xff] %v3804
          %4440 = vst [vmem:[#allocation10 + $0x488] sm:$0xff] %v3806
          %4441 = vst [vmem:[#allocation10 + $0x490] sm:$0xff] %v4157
          %4442 = vst [vmem:[#allocation10 + $0x498] sm:$0xff] %v4159
          %4443 = vst [vmem:[#allocation10 + $0x4a0] sm:$0xff] %v3808
          %4444 = vst [vmem:[#allocation10 + $0x4a8] sm:$0xff] %v3810
          %4445 = vst [vmem:[#allocation10 + $0x4b0] sm:$0xff] %v4161
          %4446 = vst [vmem:[#allocation10 + $0x4b8] sm:$0xff] %v4163
          %4447 = vst [vmem:[#allocation10 + $0x4c0] sm:$0xff] %v3814
          %4448 = vst [vmem:[#allocation10 + $0x4c8] sm:$0xff] %v3816
          %4449 = vst [vmem:[#allocation10 + $0x4d0] sm:$0xff] %v4167
          %4450 = vst [vmem:[#allocation10 + $0x4d8] sm:$0xff] %v4169
          %4451 = vst [vmem:[#allocation10 + $0x4e0] sm:$0xff] %v3818
          %4452 = vst [vmem:[#allocation10 + $0x4e8] sm:$0xff] %v3820
          %4453 = vst [vmem:[#allocation10 + $0x4f0] sm:$0xff] %v4171
          %4454 = vst [vmem:[#allocation10 + $0x4f8] sm:$0xff] %v4173
          %4455 = vst [vmem:[#allocation10 + $0x500] sm:$0xff] %v3824
          %4456 = vst [vmem:[#allocation10 + $0x508] sm:$0xff] %v3826
          %4457 = vst [vmem:[#allocation10 + $0x510] sm:$0xff] %v4177
          %4458 = vst [vmem:[#allocation10 + $0x518] sm:$0xff] %v4179
          %4459 = vst [vmem:[#allocation10 + $0x520] sm:$0xff] %v3828
          %4460 = vst [vmem:[#allocation10 + $0x528] sm:$0xff] %v3830
          %4461 = vst [vmem:[#allocation10 + $0x530] sm:$0xff] %v4181
          %4462 = vst [vmem:[#allocation10 + $0x538] sm:$0xff] %v4183
          %4463 = vst [vmem:[#allocation10 + $0x540] sm:$0xff] %v3834
          %4464 = vst [vmem:[#allocation10 + $0x548] sm:$0xff] %v3836
          %4465 = vst [vmem:[#allocation10 + $0x550] sm:$0xff] %v4187
          %4466 = vst [vmem:[#allocation10 + $0x558] sm:$0xff] %v4189
          %4467 = vst [vmem:[#allocation10 + $0x560] sm:$0xff] %v3838
          %4468 = vst [vmem:[#allocation10 + $0x568] sm:$0xff] %v3840
          %4469 = vst [vmem:[#allocation10 + $0x570] sm:$0xff] %v4191
          %4470 = vst [vmem:[#allocation10 + $0x578] sm:$0xff] %v4193
          %4471 = vst [vmem:[#allocation10 + $0x580] sm:$0xff] %v3844
          %4472 = vst [vmem:[#allocation10 + $0x588] sm:$0xff] %v3846
          %4473 = vst [vmem:[#allocation10 + $0x590] sm:$0xff] %v4197
          %4474 = vst [vmem:[#allocation10 + $0x598] sm:$0xff] %v4199
          %4475 = vst [vmem:[#allocation10 + $0x5a0] sm:$0xff] %v3848
          %4476 = vst [vmem:[#allocation10 + $0x5a8] sm:$0xff] %v3850
          %4477 = vst [vmem:[#allocation10 + $0x5b0] sm:$0xff] %v4201
          %4478 = vst [vmem:[#allocation10 + $0x5b8] sm:$0xff] %v4203
          %4479 = vst [vmem:[#allocation10 + $0x5c0] sm:$0xff] %v3854
          %4480 = vst [vmem:[#allocation10 + $0x5c8] sm:$0xff] %v3856
          %4481 = vst [vmem:[#allocation10 + $0x5d0] sm:$0xff] %v4207
          %4482 = vst [vmem:[#allocation10 + $0x5d8] sm:$0xff] %v4209
          %4483 = vst [vmem:[#allocation10 + $0x5e0] sm:$0xff] %v3858
          %4484 = vst [vmem:[#allocation10 + $0x5e8] sm:$0xff] %v3860
          %4485 = vst [vmem:[#allocation10 + $0x5f0] sm:$0xff] %v4211
          %4486 = vst [vmem:[#allocation10 + $0x5f8] sm:$0xff] %v4213
          %4487 = vst [vmem:[#allocation10 + $0x600] sm:$0xff] %v3864
          %4488 = vst [vmem:[#allocation10 + $0x608] sm:$0xff] %v3866
          %4489 = vst [vmem:[#allocation10 + $0x610] sm:$0xff] %v4217
          %4490 = vst [vmem:[#allocation10 + $0x618] sm:$0xff] %v4219
          %4491 = vst [vmem:[#allocation10 + $0x620] sm:$0xff] %v3868
          %4492 = vst [vmem:[#allocation10 + $0x628] sm:$0xff] %v3870
          %4493 = vst [vmem:[#allocation10 + $0x630] sm:$0xff] %v4221
          %4494 = vst [vmem:[#allocation10 + $0x638] sm:$0xff] %v4223
          %4495 = vst [vmem:[#allocation10 + $0x640] sm:$0xff] %v3874
          %4496 = vst [vmem:[#allocation10 + $0x648] sm:$0xff] %v3876
          %4497 = vst [vmem:[#allocation10 + $0x650] sm:$0xff] %v4227
          %4498 = vst [vmem:[#allocation10 + $0x658] sm:$0xff] %v4229
          %4499 = vst [vmem:[#allocation10 + $0x660] sm:$0xff] %v3878
          %4500 = vst [vmem:[#allocation10 + $0x668] sm:$0xff] %v3880
          %4501 = vst [vmem:[#allocation10 + $0x670] sm:$0xff] %v4231
          %4502 = vst [vmem:[#allocation10 + $0x678] sm:$0xff] %v4233
          %4503 = vst [vmem:[#allocation10 + $0x680] sm:$0xff] %v3884
          %4504 = vst [vmem:[#allocation10 + $0x688] sm:$0xff] %v3886
          %4505 = vst [vmem:[#allocation10 + $0x690] sm:$0xff] %v4237
          %4506 = vst [vmem:[#allocation10 + $0x698] sm:$0xff] %v4239
          %4507 = vst [vmem:[#allocation10 + $0x6a0] sm:$0xff] %v3888
          %4508 = vst [vmem:[#allocation10 + $0x6a8] sm:$0xff] %v3890
          %4509 = vst [vmem:[#allocation10 + $0x6b0] sm:$0xff] %v4241
          %4510 = vst [vmem:[#allocation10 + $0x6b8] sm:$0xff] %v4243
          %4511 = vst [vmem:[#allocation10 + $0x6c0] sm:$0xff] %v3894
          %4512 = vst [vmem:[#allocation10 + $0x6c8] sm:$0xff] %v3896
          %4513 = vst [vmem:[#allocation10 + $0x6d0] sm:$0xff] %v4247
          %4514 = vst [vmem:[#allocation10 + $0x6d8] sm:$0xff] %v4249
          %4515 = vst [vmem:[#allocation10 + $0x6e0] sm:$0xff] %v3898
          %4516 = vst [vmem:[#allocation10 + $0x6e8] sm:$0xff] %v3900
          %4517 = vst [vmem:[#allocation10 + $0x6f0] sm:$0xff] %v4251
          %4518 = vst [vmem:[#allocation10 + $0x6f8] sm:$0xff] %v4253
          %4519 = vst [vmem:[#allocation10 + $0x700] sm:$0xff] %v3904
          %4520 = vst [vmem:[#allocation10 + $0x708] sm:$0xff] %v3906
          %4521 = vst [vmem:[#allocation10 + $0x710] sm:$0xff] %v4257
          %4522 = vst [vmem:[#allocation10 + $0x718] sm:$0xff] %v4259
          %4523 = vst [vmem:[#allocation10 + $0x720] sm:$0xff] %v3908
          %4524 = vst [vmem:[#allocation10 + $0x728] sm:$0xff] %v3910
          %4525 = vst [vmem:[#allocation10 + $0x730] sm:$0xff] %v4261
          %4526 = vst [vmem:[#allocation10 + $0x738] sm:$0xff] %v4263
          %4527 = vst [vmem:[#allocation10 + $0x740] sm:$0xff] %v3914
          %4528 = vst [vmem:[#allocation10 + $0x748] sm:$0xff] %v3916
          %4529 = vst [vmem:[#allocation10 + $0x750] sm:$0xff] %v4267
          %4530 = vst [vmem:[#allocation10 + $0x758] sm:$0xff] %v4269
          %4531 = vst [vmem:[#allocation10 + $0x760] sm:$0xff] %v3918
          %4532 = vst [vmem:[#allocation10 + $0x768] sm:$0xff] %v3920
          %4533 = vst [vmem:[#allocation10 + $0x770] sm:$0xff] %v4271
          %4534 = vst [vmem:[#allocation10 + $0x778] sm:$0xff] %v4273
          %4535 = vst [vmem:[#allocation10 + $0x780] sm:$0xff] %v3924
          %4536 = vst [vmem:[#allocation10 + $0x788] sm:$0xff] %v3926
          %4537 = vst [vmem:[#allocation10 + $0x790] sm:$0xff] %v4277
          %4538 = vst [vmem:[#allocation10 + $0x798] sm:$0xff] %v4279
          %4539 = vst [vmem:[#allocation10 + $0x7a0] sm:$0xff] %v3928
          %4540 = vst [vmem:[#allocation10 + $0x7a8] sm:$0xff] %v3930
          %4541 = vst [vmem:[#allocation10 + $0x7b0] sm:$0xff] %v4281
          %4542 = vst [vmem:[#allocation10 + $0x7b8] sm:$0xff] %v4283
          %4543 = vst [vmem:[#allocation10 + $0x7c0] sm:$0xff] %v3934
          %4544 = vst [vmem:[#allocation10 + $0x7c8] sm:$0xff] %v3936
          %4545 = vst [vmem:[#allocation10 + $0x7d0] sm:$0xff] %v4287
          %4546 = vst [vmem:[#allocation10 + $0x7d8] sm:$0xff] %v4289
          %4547 = vst [vmem:[#allocation10 + $0x7e0] sm:$0xff] %v3938
          %4548 = vst [vmem:[#allocation10 + $0x7e8] sm:$0xff] %v3940
          %4549 = vst [vmem:[#allocation10 + $0x7f0] sm:$0xff] %v4291
          %4550 = vst [vmem:[#allocation10 + $0x7f8] sm:$0xff] %v4293
        $region92: #{audio_aligner_forward.1} parent=63 // pred_fallthru
          _
        // Predicated region
        $region93: #{audio_aligner_forward.1} parent=63 // pred_check
          %p4551 = pneg %p291
        $region94: #{audio_aligner_forward.1} parent=63 // pred_check_branch
          %4553 = sbr.rel (%p4551) target = $region96
        $region95: #{audio_aligner_forward.1} parent=63 // pred_region
          %s4554 = smul.u32 64, %s30
          %s4556 = ssub.s32 32768, 32768
          %4557 = vsyncadd [#allocation6], %s4556
          %s4558 = smul.addr %s4554, 4
          %s4559 = smul.addr %s4558, 128
          %s4560 = scalar_lea.hbm %s11, %s4559
          %s4561 = sshll.u32 [#allocation10], 4
          %s4562 = int_to_ptr.vmem [resolvable:$true] %s4561
          %4567 = dma.vmem_to_hbm [thread:$0]  %s4562, 32768, %s4560, [#allocation6], 512, 512, 32
        $region96: #{audio_aligner_forward.1} parent=63 // pred_fallthru
          _
        // Predicated region
        $region97: #{audio_aligner_forward.1} parent=63 // pred_check
          %p4568 = pneg %p291
        $region98: #{audio_aligner_forward.1} parent=63 // pred_check_branch
          %4570 = sbr.rel (%p4568) target = $region100
        $region99: #{audio_aligner_forward.1} parent=63 // pred_region
          %4571 = dma.done [#allocation6], 32768
        $region100: #{audio_aligner_forward.1} parent=63 // pred_fallthru
          _
      $region64: #{audio_aligner_forward.1} parent=5 // pred_fallthru
        _
      %p4572 = scmp.le.s32.totalorder 2, %s20
      // Predicated region
      $region101: #{audio_aligner_forward.1} parent=5 // pred_check
        %p4573 = pneg %p4572
      $region102: #{audio_aligner_forward.1} parent=5 // pred_check_branch
        %4575 = sbr.rel (%p4573) target = $region104
      $region103: #{audio_aligner_forward.1} parent=5 // pred_region
        %s4576 = ssub.s32 %s20, 2
      $region104: #{audio_aligner_forward.1} parent=5 // pred_fallthru
        _
    $region6: #{audio_aligner_forward.1} parent=1 // loop_footer
      %s24 = sadd.s32 1, %s20
    $region7: #{audio_aligner_forward.1} parent=1 // loop_footer_branch
      %19 = sbr.rel target = $region3
    $region8: #{audio_aligner_forward.1} parent=1 // loop_exit
      _
    %4577 = vsyncpa [#allocation5], 1
    %s4578 = scalar_lea.sflag [#allocation5], 1
    %4579 = vsyncpa %s4578, 1
    %4580 = vsyncpa [#allocation8], 1
    %4581 = vsyncpa [#allocation6], 1
    %s4582 = scalar_lea.sflag [#allocation6], 1
    %4583 = vsyncpa %s4582, 1

</llo_original>
